<compile_context>
chip_gen: v7x
topology: tpu7x:2x2x1
jax: 0.10.0
libtpu: 0.0.40
codegen_flags: <defaults>
</compile_context>

<pallas_src>
import functools
import math

import jax
import jax.numpy as jnp
from jax.experimental import pallas as pl
from jax.experimental.pallas import tpu as pltpu


def _round_up(x, m):
    return (x + m - 1) // m * m


def pe_stance_kernel(ids_ref, state_ref, kv_ref,
                     mha_w_ref, emb_gate_ref, lstm_w_ref, bias_ref,
                     hseq_ref, cn_ref,
                     gx_ref,
                     *, seq_len, n_keys, attn_scale):
    """Whole forward in one invocation (no grid): FF(kv) -> 1-head attention
    -> hoisted LSTM input projection -> serial LSTM recurrence."""
    f32, bf16 = jnp.float32, jnp.bfloat16
    S = seq_len
    _, BP, H = hseq_ref.shape                     # padded batch, hidden
    LP = kv_ref.shape[1]                          # padded kv length
    VP = emb_gate_ref.shape[1]                    # padded vocab (one-hot K)
    dff = 2 * H                                   # FeedForward(h_dim, 2*h_dim)

    def bias(row, width):                         # (1, width) f32, offset-0
        return bias_ref[row][:, :width]

    # ---------------- FeedForward over sub_h (kv) ----------------
    # kv = relu(relu(kv @ W1^T + b1) @ W2^T + b2); dropout is a no-op (eval).
    kv2d = kv_ref[...].reshape(BP * LP, H)                        # bf16
    ff1 = jnp.maximum(
        jnp.dot(kv2d, mha_w_ref[0][:H, :dff],
                preferred_element_type=f32) + bias(0, dff), 0.0)
    ff2 = jnp.maximum(
        jnp.dot(ff1.astype(bf16), mha_w_ref[1][:dff, :H],
                preferred_element_type=f32) + bias(1, H), 0.0)
    ff2b = ff2.astype(bf16)                                       # (BP*LP, H)

    # ------------- single-head attention, query = h_0 -------------
    h0 = state_ref[0]                                             # (BP, H) f32
    c0 = state_ref[1]
    q = (jnp.dot(h0.astype(bf16), mha_w_ref[2][:H, :H],
                 preferred_element_type=f32) + bias(2, H)) * attn_scale
    k = (jnp.dot(ff2b, mha_w_ref[3][:H, :H],
                 preferred_element_type=f32) + bias(3, H)).reshape(BP, LP, H)
    v = (jnp.dot(ff2b, mha_w_ref[4][:H, :H],
                 preferred_element_type=f32) + bias(4, H)).reshape(BP, LP, H)

    scores = jnp.sum(q[:, None, :] * k, axis=-1)                  # (BP, LP)
    if n_keys < LP:                 # mask padded key positions (static check)
        key_ids = jax.lax.broadcasted_iota(jnp.int32, (BP, LP), 1)
        scores = jnp.where(key_ids < n_keys, scores, -1e30)
    p = jnp.exp(scores - jnp.max(scores, axis=-1, keepdims=True))
    attn_w = p * pl.reciprocal(jnp.sum(p, axis=-1, keepdims=True), approx=True)
    ctx = jnp.sum(attn_w[:, :, None] * v, axis=1)                 # (BP, H)
    a = (jnp.dot(ctx.astype(bf16), mha_w_ref[5][:H, :H],
                 preferred_element_type=f32) + bias(5, H))        # (BP, H)
    a_b = a.astype(bf16)

    # ----- hoisted LSTM input projection (non-recurrent part) -----
    # rnn_input_t = concat(embedded_t, a); `a` is time-constant, so
    # gx[g, t] = onehot(x_t) @ (emb @ Wih_e[g]^T) + a @ Wih_a[g]^T + b[g].
    ids = ids_ref[...]                                            # (S, BP) i32
    iota_v = jax.lax.broadcasted_iota(jnp.int32, (S, BP, VP), 2)
    onehot = jnp.where(iota_v == ids[:, :, None], 1.0, 0.0).astype(bf16)
    onehot2d = onehot.reshape(S * BP, VP)
    for g in range(4):              # static python loop over gates (i,f,g,o)
        gx_e = jnp.dot(onehot2d, emb_gate_ref[g],
                       preferred_element_type=f32)                # (S*BP, H)
        gx_a = jnp.dot(a_b, lstm_w_ref[g],
                       preferred_element_type=f32) + bias(6 + g, H)
        gx_ref[pl.ds(g * S, S)] = gx_e.reshape(S, BP, H) + gx_a[None]

    # -------------- LSTM recurrence (serial over time) --------------
    # TODO(synk): drive the MXU explicitly (matmul_push_rhs once before the
    # loop + matmul_acc_lhs per step) if a bundle dump shows the (H, H)
    # recurrent weights being re-pushed on every iteration.
    whh = [lstm_w_ref[4 + g] for g in range(4)]                   # (H, H) bf16

    def step(t, carry):
        h_prev, c_prev = carry
        hb = h_prev.astype(bf16)
        i_g = jax.nn.sigmoid(gx_ref[0 * S + t] +
                             jnp.dot(hb, whh[0], preferred_element_type=f32))
        f_g = jax.nn.sigmoid(gx_ref[1 * S + t] +
                             jnp.dot(hb, whh[1], preferred_element_type=f32))
        g_g = jnp.tanh(gx_ref[2 * S + t] +
                       jnp.dot(hb, whh[2], preferred_element_type=f32))
        o_g = jax.nn.sigmoid(gx_ref[3 * S + t] +
                             jnp.dot(hb, whh[3], preferred_element_type=f32))
        c_t = f_g * c_prev + i_g * g_g
        h_t = o_g * jnp.tanh(c_t)
        hseq_ref[t] = h_t
        return (h_t, c_t)

    _, c_last = jax.lax.fori_loop(0, S, step, (h0, c0), unroll=True)
    cn_ref[...] = c_last


def prepare_params(params):
    """One-time packing of module parameters into TPU-friendly slabs.

    All padding / transposes / gate splitting / bf16 casts and the
    embedding -> input-gate fusion happen here, once, so the per-call
    forward issues no parameter-shaping XLA ops.
    """
    f32, bf16 = jnp.float32, jnp.bfloat16
    V, E = params["embedding"].shape
    H = params["w_hh"].shape[1]
    dff = params["ff_w1"].shape[0]
    SW = _round_up(max(dff, H), 8)
    BW = _round_up(max(dff, H, 128), 128)
    # TODO(synk): for large vocabularies replace the fused one-hot table with
    # a scalar-prefetched row gather; the (VP, H) per-gate table scales with V.
    VP = _round_up(V, 128)
    hi = jax.lax.Precision.HIGHEST

    # FF + attention stack: 0=W1^T, 1=W2^T, 2..4=Wq/Wk/Wv^T, 5=Wo^T (bf16).
    mha_w = jnp.zeros((6, SW, SW), bf16)
    mha_w = mha_w.at[0, :H, :dff].set(params["ff_w1"].T.astype(bf16))
    mha_w = mha_w.at[1, :dff, :H].set(params["ff_w2"].T.astype(bf16))
    for j in range(3):
        wj = params["in_proj_w"][j * H:(j + 1) * H, :]
        mha_w = mha_w.at[2 + j, :H, :H].set(wj.T.astype(bf16))
    mha_w = mha_w.at[5, :H, :H].set(params["out_proj_w"].T.astype(bf16))

    # Per-gate LSTM weights: slots 0..3 = W_ih (attention half)^T,
    # slots 4..7 = W_hh^T, PyTorch gate order (i, f, g, o).
    lstm_w = jnp.zeros((8, H, H), bf16)
    emb_gate = jnp.zeros((4, VP, H), bf16)
    bias = jnp.zeros((10, 1, BW), f32)
    bias = bias.at[0, 0, :dff].set(params["ff_b1"])
    bias = bias.at[1, 0, :H].set(params["ff_b2"])
    for j in range(3):
        bias = bias.at[2 + j, 0, :H].set(params["in_proj_b"][j * H:(j + 1) * H])
    bias = bias.at[5, 0, :H].set(params["out_proj_b"])

    b_gate = params["b_ih"] + params["b_hh"]
    for g in range(4):
        rows = slice(g * H, (g + 1) * H)
        w_e = params["w_ih"][rows, :E]                            # (H, E)
        w_a = params["w_ih"][rows, E:]                            # (H, H)
        tbl = jnp.dot(params["embedding"], w_e.T, precision=hi)   # (V, H)
        emb_gate = emb_gate.at[g, :V, :].set(tbl.astype(bf16))
        lstm_w = lstm_w.at[g].set(w_a.T.astype(bf16))
        lstm_w = lstm_w.at[4 + g].set(params["w_hh"][rows, :].T.astype(bf16))
        bias = bias.at[6 + g, 0, :H].set(b_gate[rows])

    return {"mha_w": mha_w, "emb_gate": emb_gate, "lstm_w": lstm_w,
            "bias": bias}


@jax.jit
def pe_stance_lstm_forward(x, h_prev, sub_h, prep):
    """PeStanceLSTM forward (eval mode).

    x: (S, B) int32, h_prev: (h_0, c_0) each (1, B, H), sub_h: (L, B, H).
    Returns (h, (h_n, c_n)): h (S, B, H), h_n / c_n (1, B, H).
    """
    h0, c0 = h_prev
    S, B = x.shape
    L = sub_h.shape[0]
    H = prep["lstm_w"].shape[-1]
    BP = _round_up(B, 8)
    LP = _round_up(L, 8)
    f32 = jnp.float32

    # Per-call activation padding only (parameters are pre-packed in `prep`).
    ids = jnp.zeros((S, BP), jnp.int32).at[:, :B].set(x.astype(jnp.int32))
    state0 = (jnp.zeros((2, BP, H), f32)
              .at[0, :B, :].set(h0[0]).at[1, :B, :].set(c0[0]))
    kv = (jnp.zeros((BP, LP, H), jnp.bfloat16)
          .at[:B, :L, :].set(jnp.transpose(sub_h, (1, 0, 2)).astype(jnp.bfloat16)))

    kernel = functools.partial(pe_stance_kernel, seq_len=S, n_keys=L,
                               attn_scale=1.0 / math.sqrt(H))
    vmem = lambda: pl.BlockSpec(memory_space=pltpu.MemorySpace.VMEM)

    # TODO(synk): at production batch sizes add a leading "parallel" batch
    # grid axis (or pl.core_map over a TensorCore mesh) so v7x's two
    # TensorCores split independent rows of the recurrence; irrelevant at B=2.
    # TODO(synk): set pltpu.CompilerParams(vmem_limit_bytes=...) if S/B/H grow
    # enough to threaten v7x's 64 MiB / v5e's 16 MiB scoped-VMEM defaults.
    hseq, c_n = pl.pallas_call(
        kernel,
        out_shape=(jax.ShapeDtypeStruct((S, BP, H), f32),   # hidden sequence
                   jax.ShapeDtypeStruct((BP, H), f32)),      # final cell state
        in_specs=[vmem() for _ in range(7)],
        out_specs=(vmem(), vmem()),
        scratch_shapes=[pltpu.VMEM((4 * S, BP, H), f32)],    # per-gate gates_x
    )(ids, state0, kv, prep["mha_w"], prep["emb_gate"], prep["lstm_w"],
      prep["bias"])

    h = hseq[:, :B, :]
    h_n = h[-1][None]               # == h_seq[-1]; no separate kernel output
    c_n = c_n[:B, :][None]
    return h, (h_n, c_n)


def init_params(key, vocab_dim, embedding_dim, h_dim):
    """Deterministic synthetic parameters matching the nn.Module shapes."""
    ks = jax.random.split(key, 13)
    d_ff = 2 * h_dim
    in_dim = embedding_dim + h_dim

    def u(k, shape, fan_in):
        s = 1.0 / math.sqrt(fan_in)
        return jax.random.uniform(k, shape, jnp.float32, -s, s)

    return {
        # nn.Embedding.from_pretrained(weights_matrix)
        "embedding": jax.random.normal(ks[0], (vocab_dim, embedding_dim), jnp.float32),
        # FeedForward(h_dim, 2*h_dim)
        "ff_w1": u(ks[1], (d_ff, h_dim), h_dim),
        "ff_b1": u(ks[2], (d_ff,), h_dim),
        "ff_w2": u(ks[3], (h_dim, d_ff), d_ff),
        "ff_b2": u(ks[4], (h_dim,), d_ff),
        # nn.MultiheadAttention(h_dim, 1)
        "in_proj_w": u(ks[5], (3 * h_dim, h_dim), h_dim),
        "in_proj_b": u(ks[6], (3 * h_dim,), h_dim),
        "out_proj_w": u(ks[7], (h_dim, h_dim), h_dim),
        "out_proj_b": u(ks[8], (h_dim,), h_dim),
        # nn.LSTM(input_size=E + h_dim, hidden_size=h_dim, num_layers=1)
        "w_ih": u(ks[9], (4 * h_dim, in_dim), h_dim),
        "w_hh": u(ks[10], (4 * h_dim, h_dim), h_dim),
        "b_ih": u(ks[11], (4 * h_dim,), h_dim),
        "b_hh": u(ks[12], (4 * h_dim,), h_dim),
    }


def reference_forward(x, h_prev, sub_h, p):
    """Pure-JAX reference with the same math as the PyTorch module (eval)."""
    h0, c0 = h_prev
    H = h0.shape[-1]
    S, B = x.shape

    emb = jnp.take(p["embedding"], x, axis=0)                   # (S, B, E)

    kv = jnp.maximum(sub_h @ p["ff_w1"].T + p["ff_b1"], 0.0)
    kv = jnp.maximum(kv @ p["ff_w2"].T + p["ff_b2"], 0.0)       # (L, B, H)

    wq, wk, wv = jnp.split(p["in_proj_w"], 3, axis=0)
    bq, bk, bv = jnp.split(p["in_proj_b"], 3, axis=0)
    q = (h0[0] @ wq.T + bq) / math.sqrt(H)                      # (B, H)
    k = kv @ wk.T + bk                                          # (L, B, H)
    v = kv @ wv.T + bv
    scores = jnp.einsum("bh,lbh->bl", q, k)
    w = jax.nn.softmax(scores, axis=-1)
    ctx = jnp.einsum("bl,lbh->bh", w, v)
    a = ctx @ p["out_proj_w"].T + p["out_proj_b"]               # (B, H)

    rnn_in = jnp.concatenate(
        [emb, jnp.broadcast_to(a[None], (S, B, H))], axis=-1)   # (S, B, E+H)

    wih_t, whh_t = p["w_ih"].T, p["w_hh"].T
    b = p["b_ih"] + p["b_hh"]

    def step(carry, x_t):
        hp, cp = carry
        g = x_t @ wih_t + hp @ whh_t + b
        i = jax.nn.sigmoid(g[:, 0:H])
        f = jax.nn.sigmoid(g[:, H:2 * H])
        gg = jnp.tanh(g[:, 2 * H:3 * H])
        o = jax.nn.sigmoid(g[:, 3 * H:4 * H])
        c = f * cp + i * gg
        h = o * jnp.tanh(c)
        return (h, c), h

    (hn, cn), hs = jax.lax.scan(step, (h0[0], c0[0]), rnn_in)
    return hs, (hn[None], cn[None])


if __name__ == "__main__":
    # Small shapes: vocab=50, embedding=16, hidden=32, seq=8, batch=2, kv_len=6.
    VOCAB, EMB, HID, SEQ, BATCH, L_KV = 50, 16, 32, 8, 2, 6

    key = jax.random.PRNGKey(0)
    k_par, k_x, k_h, k_c, k_s = jax.random.split(key, 5)
    params = init_params(k_par, VOCAB, EMB, HID)
    x = jax.random.randint(k_x, (SEQ, BATCH), 0, VOCAB, dtype=jnp.int32)
    h0 = 0.1 * jax.random.normal(k_h, (1, BATCH, HID), jnp.float32)
    c0 = 0.1 * jax.random.normal(k_c, (1, BATCH, HID), jnp.float32)
    sub_h = jax.random.normal(k_s, (L_KV, BATCH, HID), jnp.float32)

    prep = prepare_params(params)          # one-time parameter packing
    h, (h_n, c_n) = pe_stance_lstm_forward(x, (h0, c0), sub_h, prep)
    jax.block_until_ready((h, h_n, c_n))

    # Sanity check vs. pure-JAX reference (bf16 MXU operands in the kernel,
    # f32 accumulation -> looser tolerance than a pure-f32 comparison).
    r_h, (r_hn, r_cn) = reference_forward(x, (h0, c0), sub_h, params)
    assert h.shape == (SEQ, BATCH, HID)
    assert h_n.shape == (1, BATCH, HID) and c_n.shape == (1, BATCH, HID)
    tol = dict(atol=2e-2, rtol=2e-2)
    assert jnp.allclose(h, r_h, **tol), float(jnp.max(jnp.abs(h - r_h)))
    assert jnp.allclose(h_n, r_hn, **tol), float(jnp.max(jnp.abs(h_n - r_hn)))
    assert jnp.allclose(c_n, r_cn, **tol), float(jnp.max(jnp.abs(c_n - r_cn)))

    print("KERNEL_OK")
</pallas_src>

<mosaic_0001>
module attributes {stable_mosaic.version = 11 : i64} {
  func.func @pe_stance_kernel(%arg0: memref<8x8xi32, #tpu.memory_space<vmem>>, %arg1: memref<2x8x32xf32, #tpu.memory_space<vmem>>, %arg2: memref<8x8x32xbf16, #tpu.memory_space<vmem>>, %arg3: memref<6x64x64xbf16, #tpu.memory_space<vmem>>, %arg4: memref<4x128x32xbf16, #tpu.memory_space<vmem>>, %arg5: memref<8x32x32xbf16, #tpu.memory_space<vmem>>, %arg6: memref<10x1x128xf32, #tpu.memory_space<vmem>>, %arg7: memref<8x8x32xf32, #tpu.memory_space<vmem>>, %arg8: memref<8x32xf32, #tpu.memory_space<vmem>>, %arg9: memref<32x8x32xf32, #tpu.memory_space<vmem>>) attributes {dimension_semantics = [], scalar_prefetch = 0 : i64, scratch_operands = 1 : i64, tpu.core_type = #tpu.core_type<tc>} {
    %c0 = arith.constant 0 : index
    %c0_0 = arith.constant 0 : index
    %c0_1 = arith.constant 0 : index
    %0 = vector.load %arg2[%c0, %c0_0, %c0_1] : memref<8x8x32xbf16, #tpu.memory_space<vmem>>, vector<8x8x32xbf16>
    %1 = vector.shape_cast %0 : vector<8x8x32xbf16> to vector<64x32xbf16>
    %c0_2 = arith.constant 0 : index
    %c0_3 = arith.constant 0 : index
    %c0_4 = arith.constant 0 : index
    %2 = vector.load %arg3[%c0_2, %c0_3, %c0_4] : memref<6x64x64xbf16, #tpu.memory_space<vmem>>, vector<1x64x64xbf16>
    %3 = vector.shape_cast %2 : vector<1x64x64xbf16> to vector<64x64xbf16>
    %4 = vector.extract_strided_slice %3 {offsets = [0, 0], sizes = [32, 64], strides = [1, 1]} : vector<64x64xbf16> to vector<32x64xbf16>
    %cst = arith.constant dense<0.000000e+00> : vector<64x64xf32>
    %5 = tpu.matmul %1, %4, %cst {dimension_numbers = #tpu.dot_dimension_numbers<[1], [0], [0], [1], [0, 0, 1, 1], [], []>} : vector<64x32xbf16>, vector<32x64xbf16>, vector<64x64xf32> -> vector<64x64xf32>
    %c0_5 = arith.constant 0 : index
    %c0_6 = arith.constant 0 : index
    %c0_7 = arith.constant 0 : index
    %6 = vector.load %arg6[%c0_5, %c0_6, %c0_7] : memref<10x1x128xf32, #tpu.memory_space<vmem>>, vector<1x1x128xf32>
    %7 = vector.shape_cast %6 : vector<1x1x128xf32> to vector<1x128xf32>
    %8 = vector.extract_strided_slice %7 {offsets = [0, 0], sizes = [1, 64], strides = [1, 1]} : vector<1x128xf32> to vector<1x64xf32>
    %9 = vector.broadcast %8 : vector<1x64xf32> to vector<64x64xf32>
    %10 = arith.addf %5, %9 : vector<64x64xf32>
    %cst_8 = arith.constant 0.000000e+00 : f32
    %11 = vector.broadcast %cst_8 : f32 to vector<64x64xf32>
    %12 = arith.maximumf %10, %11 : vector<64x64xf32>
    %13 = arith.truncf %12 : vector<64x64xf32> to vector<64x64xbf16>
    %c1 = arith.constant 1 : index
    %c0_9 = arith.constant 0 : index
    %c0_10 = arith.constant 0 : index
    %14 = vector.load %arg3[%c1, %c0_9, %c0_10] : memref<6x64x64xbf16, #tpu.memory_space<vmem>>, vector<1x64x64xbf16>
    %15 = vector.shape_cast %14 : vector<1x64x64xbf16> to vector<64x64xbf16>
    %16 = vector.extract_strided_slice %15 {offsets = [0, 0], sizes = [64, 32], strides = [1, 1]} : vector<64x64xbf16> to vector<64x32xbf16>
    %cst_11 = arith.constant dense<0.000000e+00> : vector<64x32xf32>
    %17 = tpu.matmul %13, %16, %cst_11 {dimension_numbers = #tpu.dot_dimension_numbers<[1], [0], [0], [1], [0, 0, 1, 1], [], []>} : vector<64x64xbf16>, vector<64x32xbf16>, vector<64x32xf32> -> vector<64x32xf32>
    %c1_12 = arith.constant 1 : index
    %c0_13 = arith.constant 0 : index
    %c0_14 = arith.constant 0 : index
    %18 = vector.load %arg6[%c1_12, %c0_13, %c0_14] : memref<10x1x128xf32, #tpu.memory_space<vmem>>, vector<1x1x128xf32>
    %19 = vector.shape_cast %18 : vector<1x1x128xf32> to vector<1x128xf32>
    %20 = vector.extract_strided_slice %19 {offsets = [0, 0], sizes = [1, 32], strides = [1, 1]} : vector<1x128xf32> to vector<1x32xf32>
    %21 = vector.broadcast %20 : vector<1x32xf32> to vector<64x32xf32>
    %22 = arith.addf %17, %21 : vector<64x32xf32>
    %cst_15 = arith.constant 0.000000e+00 : f32
    %23 = vector.broadcast %cst_15 : f32 to vector<64x32xf32>
    %24 = arith.maximumf %22, %23 : vector<64x32xf32>
    %25 = arith.truncf %24 : vector<64x32xf32> to vector<64x32xbf16>
    %c0_16 = arith.constant 0 : index
    %c0_17 = arith.constant 0 : index
    %c0_18 = arith.constant 0 : index
    %26 = vector.load %arg1[%c0_16, %c0_17, %c0_18] : memref<2x8x32xf32, #tpu.memory_space<vmem>>, vector<1x8x32xf32>
    %27 = vector.shape_cast %26 : vector<1x8x32xf32> to vector<8x32xf32>
    %c1_19 = arith.constant 1 : index
    %c0_20 = arith.constant 0 : index
    %c0_21 = arith.constant 0 : index
    %28 = vector.load %arg1[%c1_19, %c0_20, %c0_21] : memref<2x8x32xf32, #tpu.memory_space<vmem>>, vector<1x8x32xf32>
    %29 = vector.shape_cast %28 : vector<1x8x32xf32> to vector<8x32xf32>
    %30 = arith.truncf %27 : vector<8x32xf32> to vector<8x32xbf16>
    %c2 = arith.constant 2 : index
    %c0_22 = arith.constant 0 : index
    %c0_23 = arith.constant 0 : index
    %31 = vector.load %arg3[%c2, %c0_22, %c0_23] : memref<6x64x64xbf16, #tpu.memory_space<vmem>>, vector<1x64x64xbf16>
    %32 = vector.shape_cast %31 : vector<1x64x64xbf16> to vector<64x64xbf16>
    %33 = vector.extract_strided_slice %32 {offsets = [0, 0], sizes = [32, 32], strides = [1, 1]} : vector<64x64xbf16> to vector<32x32xbf16>
    %cst_24 = arith.constant dense<0.000000e+00> : vector<8x32xf32>
    %34 = tpu.matmul %30, %33, %cst_24 {dimension_numbers = #tpu.dot_dimension_numbers<[1], [0], [0], [1], [0, 0, 1, 1], [], []>} : vector<8x32xbf16>, vector<32x32xbf16>, vector<8x32xf32> -> vector<8x32xf32>
    %c2_25 = arith.constant 2 : index
    %c0_26 = arith.constant 0 : index
    %c0_27 = arith.constant 0 : index
    %35 = vector.load %arg6[%c2_25, %c0_26, %c0_27] : memref<10x1x128xf32, #tpu.memory_space<vmem>>, vector<1x1x128xf32>
    %36 = vector.shape_cast %35 : vector<1x1x128xf32> to vector<1x128xf32>
    %37 = vector.extract_strided_slice %36 {offsets = [0, 0], sizes = [1, 32], strides = [1, 1]} : vector<1x128xf32> to vector<1x32xf32>
    %38 = vector.broadcast %37 : vector<1x32xf32> to vector<8x32xf32>
    %39 = arith.addf %34, %38 : vector<8x32xf32>
    %cst_28 = arith.constant 0.176776692 : f32
    %40 = vector.broadcast %cst_28 : f32 to vector<8x32xf32>
    %41 = arith.mulf %39, %40 : vector<8x32xf32>
    %c3 = arith.constant 3 : index
    %c0_29 = arith.constant 0 : index
    %c0_30 = arith.constant 0 : index
    %42 = vector.load %arg3[%c3, %c0_29, %c0_30] : memref<6x64x64xbf16, #tpu.memory_space<vmem>>, vector<1x64x64xbf16>
    %43 = vector.shape_cast %42 : vector<1x64x64xbf16> to vector<64x64xbf16>
    %44 = vector.extract_strided_slice %43 {offsets = [0, 0], sizes = [32, 32], strides = [1, 1]} : vector<64x64xbf16> to vector<32x32xbf16>
    %cst_31 = arith.constant dense<0.000000e+00> : vector<64x32xf32>
    %45 = tpu.matmul %25, %44, %cst_31 {dimension_numbers = #tpu.dot_dimension_numbers<[1], [0], [0], [1], [0, 0, 1, 1], [], []>} : vector<64x32xbf16>, vector<32x32xbf16>, vector<64x32xf32> -> vector<64x32xf32>
    %c3_32 = arith.constant 3 : index
    %c0_33 = arith.constant 0 : index
    %c0_34 = arith.constant 0 : index
    %46 = vector.load %arg6[%c3_32, %c0_33, %c0_34] : memref<10x1x128xf32, #tpu.memory_space<vmem>>, vector<1x1x128xf32>
    %47 = vector.shape_cast %46 : vector<1x1x128xf32> to vector<1x128xf32>
    %48 = vector.extract_strided_slice %47 {offsets = [0, 0], sizes = [1, 32], strides = [1, 1]} : vector<1x128xf32> to vector<1x32xf32>
    %49 = vector.broadcast %48 : vector<1x32xf32> to vector<64x32xf32>
    %50 = arith.addf %45, %49 : vector<64x32xf32>
    %51 = vector.shape_cast %50 : vector<64x32xf32> to vector<8x8x32xf32>
    %c4 = arith.constant 4 : index
    %c0_35 = arith.constant 0 : index
    %c0_36 = arith.constant 0 : index
    %52 = vector.load %arg3[%c4, %c0_35, %c0_36] : memref<6x64x64xbf16, #tpu.memory_space<vmem>>, vector<1x64x64xbf16>
    %53 = vector.shape_cast %52 : vector<1x64x64xbf16> to vector<64x64xbf16>
    %54 = vector.extract_strided_slice %53 {offsets = [0, 0], sizes = [32, 32], strides = [1, 1]} : vector<64x64xbf16> to vector<32x32xbf16>
    %cst_37 = arith.constant dense<0.000000e+00> : vector<64x32xf32>
    %55 = tpu.matmul %25, %54, %cst_37 {dimension_numbers = #tpu.dot_dimension_numbers<[1], [0], [0], [1], [0, 0, 1, 1], [], []>} : vector<64x32xbf16>, vector<32x32xbf16>, vector<64x32xf32> -> vector<64x32xf32>
    %c4_38 = arith.constant 4 : index
    %c0_39 = arith.constant 0 : index
    %c0_40 = arith.constant 0 : index
    %56 = vector.load %arg6[%c4_38, %c0_39, %c0_40] : memref<10x1x128xf32, #tpu.memory_space<vmem>>, vector<1x1x128xf32>
    %57 = vector.shape_cast %56 : vector<1x1x128xf32> to vector<1x128xf32>
    %58 = vector.extract_strided_slice %57 {offsets = [0, 0], sizes = [1, 32], strides = [1, 1]} : vector<1x128xf32> to vector<1x32xf32>
    %59 = vector.broadcast %58 : vector<1x32xf32> to vector<64x32xf32>
    %60 = arith.addf %55, %59 : vector<64x32xf32>
    %61 = vector.shape_cast %60 : vector<64x32xf32> to vector<8x8x32xf32>
    %62 = vector.shape_cast %41 : vector<8x32xf32> to vector<8x1x32xf32>
    %63 = vector.broadcast %62 : vector<8x1x32xf32> to vector<8x8x32xf32>
    %64 = arith.mulf %63, %51 : vector<8x8x32xf32>
    %cst_41 = arith.constant dense<0.000000e+00> : vector<8x8xf32>
    %65 = vector.multi_reduction <add>, %64, %cst_41 [2] : vector<8x8x32xf32> to vector<8x8xf32>
    %66 = tpu.iota {dimensions = array<i32: 1>} : vector<8x8xi32>
    %c6_i32 = arith.constant 6 : i32
    %67 = vector.broadcast %c6_i32 : i32 to vector<8x8xi32>
    %68 = arith.cmpi slt, %66, %67 : vector<8x8xi32>
    %cst_42 = arith.constant -1.000000e+30 : f32
    %69 = vector.broadcast %cst_42 : f32 to vector<8x8xf32>
    %70 = arith.select %68, %65, %69 : vector<8x8xi1>, vector<8x8xf32>
    %cst_43 = arith.constant dense<0xFF800000> : vector<8xf32>
    %71 = vector.multi_reduction <maximumf>, %70, %cst_43 [1] : vector<8x8xf32> to vector<8xf32>
    %72 = vector.shape_cast %71 : vector<8xf32> to vector<8x1xf32>
    %73 = vector.broadcast %72 : vector<8x1xf32> to vector<8x8xf32>
    %74 = arith.subf %70, %73 : vector<8x8xf32>
    %75 = math.exp %74 : vector<8x8xf32>
    %cst_44 = arith.constant dense<0.000000e+00> : vector<8xf32>
    %76 = vector.multi_reduction <add>, %75, %cst_44 [1] : vector<8x8xf32> to vector<8xf32>
    %77 = vector.shape_cast %76 : vector<8xf32> to vector<8x1xf32>
    %78 = tpu.reciprocal %77 {approx = true} : vector<8x1xf32> -> vector<8x1xf32>
    %79 = vector.broadcast %78 : vector<8x1xf32> to vector<8x8xf32>
    %80 = arith.mulf %75, %79 : vector<8x8xf32>
    %81 = vector.shape_cast %80 : vector<8x8xf32> to vector<8x8x1xf32>
    %82 = vector.broadcast %81 : vector<8x8x1xf32> to vector<8x8x32xf32>
    %83 = arith.mulf %82, %61 : vector<8x8x32xf32>
    %cst_45 = arith.constant dense<0.000000e+00> : vector<8x32xf32>
    %84 = vector.multi_reduction <add>, %83, %cst_45 [1] : vector<8x8x32xf32> to vector<8x32xf32>
    %85 = arith.truncf %84 : vector<8x32xf32> to vector<8x32xbf16>
    %c5 = arith.constant 5 : index
    %c0_46 = arith.constant 0 : index
    %c0_47 = arith.constant 0 : index
    %86 = vector.load %arg3[%c5, %c0_46, %c0_47] : memref<6x64x64xbf16, #tpu.memory_space<vmem>>, vector<1x64x64xbf16>
    %87 = vector.shape_cast %86 : vector<1x64x64xbf16> to vector<64x64xbf16>
    %88 = vector.extract_strided_slice %87 {offsets = [0, 0], sizes = [32, 32], strides = [1, 1]} : vector<64x64xbf16> to vector<32x32xbf16>
    %cst_48 = arith.constant dense<0.000000e+00> : vector<8x32xf32>
    %89 = tpu.matmul %85, %88, %cst_48 {dimension_numbers = #tpu.dot_dimension_numbers<[1], [0], [0], [1], [0, 0, 1, 1], [], []>} : vector<8x32xbf16>, vector<32x32xbf16>, vector<8x32xf32> -> vector<8x32xf32>
    %c5_49 = arith.constant 5 : index
    %c0_50 = arith.constant 0 : index
    %c0_51 = arith.constant 0 : index
    %90 = vector.load %arg6[%c5_49, %c0_50, %c0_51] : memref<10x1x128xf32, #tpu.memory_space<vmem>>, vector<1x1x128xf32>
    %91 = vector.shape_cast %90 : vector<1x1x128xf32> to vector<1x128xf32>
    %92 = vector.extract_strided_slice %91 {offsets = [0, 0], sizes = [1, 32], strides = [1, 1]} : vector<1x128xf32> to vector<1x32xf32>
    %93 = vector.broadcast %92 : vector<1x32xf32> to vector<8x32xf32>
    %94 = arith.addf %89, %93 : vector<8x32xf32>
    %95 = arith.truncf %94 : vector<8x32xf32> to vector<8x32xbf16>
    %c0_52 = arith.constant 0 : index
    %c0_53 = arith.constant 0 : index
    %96 = vector.load %arg0[%c0_52, %c0_53] : memref<8x8xi32, #tpu.memory_space<vmem>>, vector<8x8xi32>
    %97 = tpu.iota {dimensions = array<i32: 2>} : vector<8x8x128xi32>
    %98 = vector.shape_cast %96 : vector<8x8xi32> to vector<8x8x1xi32>
    %99 = vector.broadcast %98 : vector<8x8x1xi32> to vector<8x8x128xi32>
    %100 = arith.cmpi eq, %97, %99 : vector<8x8x128xi32>
    %cst_54 = arith.constant 1.000000e+00 : f32
    %cst_55 = arith.constant 0.000000e+00 : f32
    %101 = vector.broadcast %cst_54 : f32 to vector<8x8x128xf32>
    %102 = vector.broadcast %cst_55 : f32 to vector<8x8x128xf32>
    %103 = arith.select %100, %101, %102 : vector<8x8x128xi1>, vector<8x8x128xf32>
    %104 = arith.truncf %103 : vector<8x8x128xf32> to vector<8x8x128xbf16>
    %105 = vector.shape_cast %104 : vector<8x8x128xbf16> to vector<64x128xbf16>
    %c0_56 = arith.constant 0 : index
    %c0_57 = arith.constant 0 : index
    %c0_58 = arith.constant 0 : index
    %106 = vector.load %arg4[%c0_56, %c0_57, %c0_58] : memref<4x128x32xbf16, #tpu.memory_space<vmem>>, vector<1x128x32xbf16>
    %107 = vector.shape_cast %106 : vector<1x128x32xbf16> to vector<128x32xbf16>
    %cst_59 = arith.constant dense<0.000000e+00> : vector<64x32xf32>
    %108 = tpu.matmul %105, %107, %cst_59 {dimension_numbers = #tpu.dot_dimension_numbers<[1], [0], [0], [1], [0, 0, 1, 1], [], []>} : vector<64x128xbf16>, vector<128x32xbf16>, vector<64x32xf32> -> vector<64x32xf32>
    %c0_60 = arith.constant 0 : index
    %c0_61 = arith.constant 0 : index
    %c0_62 = arith.constant 0 : index
    %109 = vector.load %arg5[%c0_60, %c0_61, %c0_62] : memref<8x32x32xbf16, #tpu.memory_space<vmem>>, vector<1x32x32xbf16>
    %110 = vector.shape_cast %109 : vector<1x32x32xbf16> to vector<32x32xbf16>
    %cst_63 = arith.constant dense<0.000000e+00> : vector<8x32xf32>
    %111 = tpu.matmul %95, %110, %cst_63 {dimension_numbers = #tpu.dot_dimension_numbers<[1], [0], [0], [1], [0, 0, 1, 1], [], []>} : vector<8x32xbf16>, vector<32x32xbf16>, vector<8x32xf32> -> vector<8x32xf32>
    %c6 = arith.constant 6 : index
    %c0_64 = arith.constant 0 : index
    %c0_65 = arith.constant 0 : index
    %112 = vector.load %arg6[%c6, %c0_64, %c0_65] : memref<10x1x128xf32, #tpu.memory_space<vmem>>, vector<1x1x128xf32>
    %113 = vector.shape_cast %112 : vector<1x1x128xf32> to vector<1x128xf32>
    %114 = vector.extract_strided_slice %113 {offsets = [0, 0], sizes = [1, 32], strides = [1, 1]} : vector<1x128xf32> to vector<1x32xf32>
    %115 = vector.broadcast %114 : vector<1x32xf32> to vector<8x32xf32>
    %116 = arith.addf %111, %115 : vector<8x32xf32>
    %117 = vector.shape_cast %108 : vector<64x32xf32> to vector<8x8x32xf32>
    %118 = vector.shape_cast %116 : vector<8x32xf32> to vector<1x8x32xf32>
    %119 = vector.broadcast %118 : vector<1x8x32xf32> to vector<8x8x32xf32>
    %120 = arith.addf %117, %119 : vector<8x8x32xf32>
    %c0_66 = arith.constant 0 : index
    %c0_67 = arith.constant 0 : index
    %c0_68 = arith.constant 0 : index
    %121 = vector.load %arg9[%c0_66, %c0_67, %c0_68] : memref<32x8x32xf32, #tpu.memory_space<vmem>>, vector<8x8x32xf32>
    tpu.vector_store %arg9[%c0_66, %c0_67, %c0_68], %120 {strides = array<i32>} : memref<32x8x32xf32, #tpu.memory_space<vmem>>, vector<8x8x32xf32>,
    %c1_69 = arith.constant 1 : index
    %c0_70 = arith.constant 0 : index
    %c0_71 = arith.constant 0 : index
    %122 = vector.load %arg4[%c1_69, %c0_70, %c0_71] : memref<4x128x32xbf16, #tpu.memory_space<vmem>>, vector<1x128x32xbf16>
    %123 = vector.shape_cast %122 : vector<1x128x32xbf16> to vector<128x32xbf16>
    %cst_72 = arith.constant dense<0.000000e+00> : vector<64x32xf32>
    %124 = tpu.matmul %105, %123, %cst_72 {dimension_numbers = #tpu.dot_dimension_numbers<[1], [0], [0], [1], [0, 0, 1, 1], [], []>} : vector<64x128xbf16>, vector<128x32xbf16>, vector<64x32xf32> -> vector<64x32xf32>
    %c1_73 = arith.constant 1 : index
    %c0_74 = arith.constant 0 : index
    %c0_75 = arith.constant 0 : index
    %125 = vector.load %arg5[%c1_73, %c0_74, %c0_75] : memref<8x32x32xbf16, #tpu.memory_space<vmem>>, vector<1x32x32xbf16>
    %126 = vector.shape_cast %125 : vector<1x32x32xbf16> to vector<32x32xbf16>
    %cst_76 = arith.constant dense<0.000000e+00> : vector<8x32xf32>
    %127 = tpu.matmul %95, %126, %cst_76 {dimension_numbers = #tpu.dot_dimension_numbers<[1], [0], [0], [1], [0, 0, 1, 1], [], []>} : vector<8x32xbf16>, vector<32x32xbf16>, vector<8x32xf32> -> vector<8x32xf32>
    %c7 = arith.constant 7 : index
    %c0_77 = arith.constant 0 : index
    %c0_78 = arith.constant 0 : index
    %128 = vector.load %arg6[%c7, %c0_77, %c0_78] : memref<10x1x128xf32, #tpu.memory_space<vmem>>, vector<1x1x128xf32>
    %129 = vector.shape_cast %128 : vector<1x1x128xf32> to vector<1x128xf32>
    %130 = vector.extract_strided_slice %129 {offsets = [0, 0], sizes = [1, 32], strides = [1, 1]} : vector<1x128xf32> to vector<1x32xf32>
    %131 = vector.broadcast %130 : vector<1x32xf32> to vector<8x32xf32>
    %132 = arith.addf %127, %131 : vector<8x32xf32>
    %133 = vector.shape_cast %124 : vector<64x32xf32> to vector<8x8x32xf32>
    %134 = vector.shape_cast %132 : vector<8x32xf32> to vector<1x8x32xf32>
    %135 = vector.broadcast %134 : vector<1x8x32xf32> to vector<8x8x32xf32>
    %136 = arith.addf %133, %135 : vector<8x8x32xf32>
    %c8 = arith.constant 8 : index
    %c0_79 = arith.constant 0 : index
    %c0_80 = arith.constant 0 : index
    %137 = vector.load %arg9[%c8, %c0_79, %c0_80] : memref<32x8x32xf32, #tpu.memory_space<vmem>>, vector<8x8x32xf32>
    tpu.vector_store %arg9[%c8, %c0_79, %c0_80], %136 {strides = array<i32>} : memref<32x8x32xf32, #tpu.memory_space<vmem>>, vector<8x8x32xf32>,
    %c2_81 = arith.constant 2 : index
    %c0_82 = arith.constant 0 : index
    %c0_83 = arith.constant 0 : index
    %138 = vector.load %arg4[%c2_81, %c0_82, %c0_83] : memref<4x128x32xbf16, #tpu.memory_space<vmem>>, vector<1x128x32xbf16>
    %139 = vector.shape_cast %138 : vector<1x128x32xbf16> to vector<128x32xbf16>
    %cst_84 = arith.constant dense<0.000000e+00> : vector<64x32xf32>
    %140 = tpu.matmul %105, %139, %cst_84 {dimension_numbers = #tpu.dot_dimension_numbers<[1], [0], [0], [1], [0, 0, 1, 1], [], []>} : vector<64x128xbf16>, vector<128x32xbf16>, vector<64x32xf32> -> vector<64x32xf32>
    %c2_85 = arith.constant 2 : index
    %c0_86 = arith.constant 0 : index
    %c0_87 = arith.constant 0 : index
    %141 = vector.load %arg5[%c2_85, %c0_86, %c0_87] : memref<8x32x32xbf16, #tpu.memory_space<vmem>>, vector<1x32x32xbf16>
    %142 = vector.shape_cast %141 : vector<1x32x32xbf16> to vector<32x32xbf16>
    %cst_88 = arith.constant dense<0.000000e+00> : vector<8x32xf32>
    %143 = tpu.matmul %95, %142, %cst_88 {dimension_numbers = #tpu.dot_dimension_numbers<[1], [0], [0], [1], [0, 0, 1, 1], [], []>} : vector<8x32xbf16>, vector<32x32xbf16>, vector<8x32xf32> -> vector<8x32xf32>
    %c8_89 = arith.constant 8 : index
    %c0_90 = arith.constant 0 : index
    %c0_91 = arith.constant 0 : index
    %144 = vector.load %arg6[%c8_89, %c0_90, %c0_91] : memref<10x1x128xf32, #tpu.memory_space<vmem>>, vector<1x1x128xf32>
    %145 = vector.shape_cast %144 : vector<1x1x128xf32> to vector<1x128xf32>
    %146 = vector.extract_strided_slice %145 {offsets = [0, 0], sizes = [1, 32], strides = [1, 1]} : vector<1x128xf32> to vector<1x32xf32>
    %147 = vector.broadcast %146 : vector<1x32xf32> to vector<8x32xf32>
    %148 = arith.addf %143, %147 : vector<8x32xf32>
    %149 = vector.shape_cast %140 : vector<64x32xf32> to vector<8x8x32xf32>
    %150 = vector.shape_cast %148 : vector<8x32xf32> to vector<1x8x32xf32>
    %151 = vector.broadcast %150 : vector<1x8x32xf32> to vector<8x8x32xf32>
    %152 = arith.addf %149, %151 : vector<8x8x32xf32>
    %c16 = arith.constant 16 : index
    %c0_92 = arith.constant 0 : index
    %c0_93 = arith.constant 0 : index
    %153 = vector.load %arg9[%c16, %c0_92, %c0_93] : memref<32x8x32xf32, #tpu.memory_space<vmem>>, vector<8x8x32xf32>
    tpu.vector_store %arg9[%c16, %c0_92, %c0_93], %152 {strides = array<i32>} : memref<32x8x32xf32, #tpu.memory_space<vmem>>, vector<8x8x32xf32>,
    %c3_94 = arith.constant 3 : index
    %c0_95 = arith.constant 0 : index
    %c0_96 = arith.constant 0 : index
    %154 = vector.load %arg4[%c3_94, %c0_95, %c0_96] : memref<4x128x32xbf16, #tpu.memory_space<vmem>>, vector<1x128x32xbf16>
    %155 = vector.shape_cast %154 : vector<1x128x32xbf16> to vector<128x32xbf16>
    %cst_97 = arith.constant dense<0.000000e+00> : vector<64x32xf32>
    %156 = tpu.matmul %105, %155, %cst_97 {dimension_numbers = #tpu.dot_dimension_numbers<[1], [0], [0], [1], [0, 0, 1, 1], [], []>} : vector<64x128xbf16>, vector<128x32xbf16>, vector<64x32xf32> -> vector<64x32xf32>
    %c3_98 = arith.constant 3 : index
    %c0_99 = arith.constant 0 : index
    %c0_100 = arith.constant 0 : index
    %157 = vector.load %arg5[%c3_98, %c0_99, %c0_100] : memref<8x32x32xbf16, #tpu.memory_space<vmem>>, vector<1x32x32xbf16>
    %158 = vector.shape_cast %157 : vector<1x32x32xbf16> to vector<32x32xbf16>
    %cst_101 = arith.constant dense<0.000000e+00> : vector<8x32xf32>
    %159 = tpu.matmul %95, %158, %cst_101 {dimension_numbers = #tpu.dot_dimension_numbers<[1], [0], [0], [1], [0, 0, 1, 1], [], []>} : vector<8x32xbf16>, vector<32x32xbf16>, vector<8x32xf32> -> vector<8x32xf32>
    %c9 = arith.constant 9 : index
    %c0_102 = arith.constant 0 : index
    %c0_103 = arith.constant 0 : index
    %160 = vector.load %arg6[%c9, %c0_102, %c0_103] : memref<10x1x128xf32, #tpu.memory_space<vmem>>, vector<1x1x128xf32>
    %161 = vector.shape_cast %160 : vector<1x1x128xf32> to vector<1x128xf32>
    %162 = vector.extract_strided_slice %161 {offsets = [0, 0], sizes = [1, 32], strides = [1, 1]} : vector<1x128xf32> to vector<1x32xf32>
    %163 = vector.broadcast %162 : vector<1x32xf32> to vector<8x32xf32>
    %164 = arith.addf %159, %163 : vector<8x32xf32>
    %165 = vector.shape_cast %156 : vector<64x32xf32> to vector<8x8x32xf32>
    %166 = vector.shape_cast %164 : vector<8x32xf32> to vector<1x8x32xf32>
    %167 = vector.broadcast %166 : vector<1x8x32xf32> to vector<8x8x32xf32>
    %168 = arith.addf %165, %167 : vector<8x8x32xf32>
    %c24 = arith.constant 24 : index
    %c0_104 = arith.constant 0 : index
    %c0_105 = arith.constant 0 : index
    %169 = vector.load %arg9[%c24, %c0_104, %c0_105] : memref<32x8x32xf32, #tpu.memory_space<vmem>>, vector<8x8x32xf32>
    tpu.vector_store %arg9[%c24, %c0_104, %c0_105], %168 {strides = array<i32>} : memref<32x8x32xf32, #tpu.memory_space<vmem>>, vector<8x8x32xf32>,
    %c4_106 = arith.constant 4 : index
    %c0_107 = arith.constant 0 : index
    %c0_108 = arith.constant 0 : index
    %170 = vector.load %arg5[%c4_106, %c0_107, %c0_108] : memref<8x32x32xbf16, #tpu.memory_space<vmem>>, vector<1x32x32xbf16>
    %171 = vector.shape_cast %170 : vector<1x32x32xbf16> to vector<32x32xbf16>
    %c5_109 = arith.constant 5 : index
    %c0_110 = arith.constant 0 : index
    %c0_111 = arith.constant 0 : index
    %172 = vector.load %arg5[%c5_109, %c0_110, %c0_111] : memref<8x32x32xbf16, #tpu.memory_space<vmem>>, vector<1x32x32xbf16>
    %173 = vector.shape_cast %172 : vector<1x32x32xbf16> to vector<32x32xbf16>
    %c6_112 = arith.constant 6 : index
    %c0_113 = arith.constant 0 : index
    %c0_114 = arith.constant 0 : index
    %174 = vector.load %arg5[%c6_112, %c0_113, %c0_114] : memref<8x32x32xbf16, #tpu.memory_space<vmem>>, vector<1x32x32xbf16>
    %175 = vector.shape_cast %174 : vector<1x32x32xbf16> to vector<32x32xbf16>
    %c7_115 = arith.constant 7 : index
    %c0_116 = arith.constant 0 : index
    %c0_117 = arith.constant 0 : index
    %176 = vector.load %arg5[%c7_115, %c0_116, %c0_117] : memref<8x32x32xbf16, #tpu.memory_space<vmem>>, vector<1x32x32xbf16>
    %177 = vector.shape_cast %176 : vector<1x32x32xbf16> to vector<32x32xbf16>
    %c0_i32 = arith.constant 0 : i32
    %178 = arith.truncf %27 : vector<8x32xf32> to vector<8x32xbf16>
    %c0_i32_118 = arith.constant 0 : i32
    %179 = arith.addi %c0_i32_118, %c0_i32 : i32
    %180 = arith.index_cast %179 : i32 to index
    %c0_119 = arith.constant 0 : index
    %c0_120 = arith.constant 0 : index
    %181 = vector.load %arg9[%180, %c0_119, %c0_120] : memref<32x8x32xf32, #tpu.memory_space<vmem>>, vector<1x8x32xf32>
    %182 = vector.shape_cast %181 : vector<1x8x32xf32> to vector<8x32xf32>
    %cst_121 = arith.constant dense<0.000000e+00> : vector<8x32xf32>
    %183 = tpu.matmul %178, %171, %cst_121 {dimension_numbers = #tpu.dot_dimension_numbers<[1], [0], [0], [1], [0, 0, 1, 1], [], []>} : vector<8x32xbf16>, vector<32x32xbf16>, vector<8x32xf32> -> vector<8x32xf32>
    %184 = arith.addf %182, %183 : vector<8x32xf32>
    %185 = arith.negf %184 : vector<8x32xf32>
    %186 = math.exp %185 : vector<8x32xf32>
    %cst_122 = arith.constant 1.000000e+00 : f32
    %187 = vector.broadcast %cst_122 : f32 to vector<8x32xf32>
    %188 = arith.addf %187, %186 : vector<8x32xf32>
    %189 = arith.divf %187, %188 : vector<8x32xf32>
    %c8_i32 = arith.constant 8 : i32
    %190 = arith.addi %c8_i32, %c0_i32 : i32
    %191 = arith.index_cast %190 : i32 to index
    %c0_123 = arith.constant 0 : index
    %c0_124 = arith.constant 0 : index
    %192 = vector.load %arg9[%191, %c0_123, %c0_124] : memref<32x8x32xf32, #tpu.memory_space<vmem>>, vector<1x8x32xf32>
    %193 = vector.shape_cast %192 : vector<1x8x32xf32> to vector<8x32xf32>
    %cst_125 = arith.constant dense<0.000000e+00> : vector<8x32xf32>
    %194 = tpu.matmul %178, %173, %cst_125 {dimension_numbers = #tpu.dot_dimension_numbers<[1], [0], [0], [1], [0, 0, 1, 1], [], []>} : vector<8x32xbf16>, vector<32x32xbf16>, vector<8x32xf32> -> vector<8x32xf32>
    %195 = arith.addf %193, %194 : vector<8x32xf32>
    %196 = arith.negf %195 : vector<8x32xf32>
    %197 = math.exp %196 : vector<8x32xf32>
    %cst_126 = arith.constant 1.000000e+00 : f32
    %198 = vector.broadcast %cst_126 : f32 to vector<8x32xf32>
    %199 = arith.addf %198, %197 : vector<8x32xf32>
    %200 = arith.divf %198, %199 : vector<8x32xf32>
    %c16_i32 = arith.constant 16 : i32
    %201 = arith.addi %c16_i32, %c0_i32 : i32
    %202 = arith.index_cast %201 : i32 to index
    %c0_127 = arith.constant 0 : index
    %c0_128 = arith.constant 0 : index
    %203 = vector.load %arg9[%202, %c0_127, %c0_128] : memref<32x8x32xf32, #tpu.memory_space<vmem>>, vector<1x8x32xf32>
    %204 = vector.shape_cast %203 : vector<1x8x32xf32> to vector<8x32xf32>
    %cst_129 = arith.constant dense<0.000000e+00> : vector<8x32xf32>
    %205 = tpu.matmul %178, %175, %cst_129 {dimension_numbers = #tpu.dot_dimension_numbers<[1], [0], [0], [1], [0, 0, 1, 1], [], []>} : vector<8x32xbf16>, vector<32x32xbf16>, vector<8x32xf32> -> vector<8x32xf32>
    %206 = arith.addf %204, %205 : vector<8x32xf32>
    %207 = math.tanh %206 : vector<8x32xf32>
    %c24_i32 = arith.constant 24 : i32
    %208 = arith.addi %c24_i32, %c0_i32 : i32
    %209 = arith.index_cast %208 : i32 to index
    %c0_130 = arith.constant 0 : index
    %c0_131 = arith.constant 0 : index
    %210 = vector.load %arg9[%209, %c0_130, %c0_131] : memref<32x8x32xf32, #tpu.memory_space<vmem>>, vector<1x8x32xf32>
    %211 = vector.shape_cast %210 : vector<1x8x32xf32> to vector<8x32xf32>
    %cst_132 = arith.constant dense<0.000000e+00> : vector<8x32xf32>
    %212 = tpu.matmul %178, %177, %cst_132 {dimension_numbers = #tpu.dot_dimension_numbers<[1], [0], [0], [1], [0, 0, 1, 1], [], []>} : vector<8x32xbf16>, vector<32x32xbf16>, vector<8x32xf32> -> vector<8x32xf32>
    %213 = arith.addf %211, %212 : vector<8x32xf32>
    %214 = arith.negf %213 : vector<8x32xf32>
    %215 = math.exp %214 : vector<8x32xf32>
    %cst_133 = arith.constant 1.000000e+00 : f32
    %216 = vector.broadcast %cst_133 : f32 to vector<8x32xf32>
    %217 = arith.addf %216, %215 : vector<8x32xf32>
    %218 = arith.divf %216, %217 : vector<8x32xf32>
    %219 = arith.mulf %200, %29 : vector<8x32xf32>
    %220 = arith.mulf %189, %207 : vector<8x32xf32>
    %221 = arith.addf %219, %220 : vector<8x32xf32>
    %222 = math.tanh %221 : vector<8x32xf32>
    %223 = arith.mulf %218, %222 : vector<8x32xf32>
    %224 = arith.index_cast %c0_i32 : i32 to index
    %c0_134 = arith.constant 0 : index
    %c0_135 = arith.constant 0 : index
    %225 = vector.load %arg7[%224, %c0_134, %c0_135] : memref<8x8x32xf32, #tpu.memory_space<vmem>>, vector<1x8x32xf32>
    %226 = vector.shape_cast %225 : vector<1x8x32xf32> to vector<8x32xf32>
    %227 = vector.shape_cast %223 : vector<8x32xf32> to vector<1x8x32xf32>
    tpu.vector_store %arg7[%224, %c0_134, %c0_135], %227 {strides = array<i32>} : memref<8x8x32xf32, #tpu.memory_space<vmem>>, vector<1x8x32xf32>,
    %c1_i32 = arith.constant 1 : i32
    %228 = arith.truncf %223 : vector<8x32xf32> to vector<8x32xbf16>
    %c0_i32_136 = arith.constant 0 : i32
    %229 = arith.addi %c0_i32_136, %c1_i32 : i32
    %230 = arith.index_cast %229 : i32 to index
    %c0_137 = arith.constant 0 : index
    %c0_138 = arith.constant 0 : index
    %231 = vector.load %arg9[%230, %c0_137, %c0_138] : memref<32x8x32xf32, #tpu.memory_space<vmem>>, vector<1x8x32xf32>
    %232 = vector.shape_cast %231 : vector<1x8x32xf32> to vector<8x32xf32>
    %cst_139 = arith.constant dense<0.000000e+00> : vector<8x32xf32>
    %233 = tpu.matmul %228, %171, %cst_139 {dimension_numbers = #tpu.dot_dimension_numbers<[1], [0], [0], [1], [0, 0, 1, 1], [], []>} : vector<8x32xbf16>, vector<32x32xbf16>, vector<8x32xf32> -> vector<8x32xf32>
    %234 = arith.addf %232, %233 : vector<8x32xf32>
    %235 = arith.negf %234 : vector<8x32xf32>
    %236 = math.exp %235 : vector<8x32xf32>
    %cst_140 = arith.constant 1.000000e+00 : f32
    %237 = vector.broadcast %cst_140 : f32 to vector<8x32xf32>
    %238 = arith.addf %237, %236 : vector<8x32xf32>
    %239 = arith.divf %237, %238 : vector<8x32xf32>
    %c8_i32_141 = arith.constant 8 : i32
    %240 = arith.addi %c8_i32_141, %c1_i32 : i32
    %241 = arith.index_cast %240 : i32 to index
    %c0_142 = arith.constant 0 : index
    %c0_143 = arith.constant 0 : index
    %242 = vector.load %arg9[%241, %c0_142, %c0_143] : memref<32x8x32xf32, #tpu.memory_space<vmem>>, vector<1x8x32xf32>
    %243 = vector.shape_cast %242 : vector<1x8x32xf32> to vector<8x32xf32>
    %cst_144 = arith.constant dense<0.000000e+00> : vector<8x32xf32>
    %244 = tpu.matmul %228, %173, %cst_144 {dimension_numbers = #tpu.dot_dimension_numbers<[1], [0], [0], [1], [0, 0, 1, 1], [], []>} : vector<8x32xbf16>, vector<32x32xbf16>, vector<8x32xf32> -> vector<8x32xf32>
    %245 = arith.addf %243, %244 : vector<8x32xf32>
    %246 = arith.negf %245 : vector<8x32xf32>
    %247 = math.exp %246 : vector<8x32xf32>
    %cst_145 = arith.constant 1.000000e+00 : f32
    %248 = vector.broadcast %cst_145 : f32 to vector<8x32xf32>
    %249 = arith.addf %248, %247 : vector<8x32xf32>
    %250 = arith.divf %248, %249 : vector<8x32xf32>
    %c16_i32_146 = arith.constant 16 : i32
    %251 = arith.addi %c16_i32_146, %c1_i32 : i32
    %252 = arith.index_cast %251 : i32 to index
    %c0_147 = arith.constant 0 : index
    %c0_148 = arith.constant 0 : index
    %253 = vector.load %arg9[%252, %c0_147, %c0_148] : memref<32x8x32xf32, #tpu.memory_space<vmem>>, vector<1x8x32xf32>
    %254 = vector.shape_cast %253 : vector<1x8x32xf32> to vector<8x32xf32>
    %cst_149 = arith.constant dense<0.000000e+00> : vector<8x32xf32>
    %255 = tpu.matmul %228, %175, %cst_149 {dimension_numbers = #tpu.dot_dimension_numbers<[1], [0], [0], [1], [0, 0, 1, 1], [], []>} : vector<8x32xbf16>, vector<32x32xbf16>, vector<8x32xf32> -> vector<8x32xf32>
    %256 = arith.addf %254, %255 : vector<8x32xf32>
    %257 = math.tanh %256 : vector<8x32xf32>
    %c24_i32_150 = arith.constant 24 : i32
    %258 = arith.addi %c24_i32_150, %c1_i32 : i32
    %259 = arith.index_cast %258 : i32 to index
    %c0_151 = arith.constant 0 : index
    %c0_152 = arith.constant 0 : index
    %260 = vector.load %arg9[%259, %c0_151, %c0_152] : memref<32x8x32xf32, #tpu.memory_space<vmem>>, vector<1x8x32xf32>
    %261 = vector.shape_cast %260 : vector<1x8x32xf32> to vector<8x32xf32>
    %cst_153 = arith.constant dense<0.000000e+00> : vector<8x32xf32>
    %262 = tpu.matmul %228, %177, %cst_153 {dimension_numbers = #tpu.dot_dimension_numbers<[1], [0], [0], [1], [0, 0, 1, 1], [], []>} : vector<8x32xbf16>, vector<32x32xbf16>, vector<8x32xf32> -> vector<8x32xf32>
    %263 = arith.addf %261, %262 : vector<8x32xf32>
    %264 = arith.negf %263 : vector<8x32xf32>
    %265 = math.exp %264 : vector<8x32xf32>
    %cst_154 = arith.constant 1.000000e+00 : f32
    %266 = vector.broadcast %cst_154 : f32 to vector<8x32xf32>
    %267 = arith.addf %266, %265 : vector<8x32xf32>
    %268 = arith.divf %266, %267 : vector<8x32xf32>
    %269 = arith.mulf %250, %221 : vector<8x32xf32>
    %270 = arith.mulf %239, %257 : vector<8x32xf32>
    %271 = arith.addf %269, %270 : vector<8x32xf32>
    %272 = math.tanh %271 : vector<8x32xf32>
    %273 = arith.mulf %268, %272 : vector<8x32xf32>
    %274 = arith.index_cast %c1_i32 : i32 to index
    %c0_155 = arith.constant 0 : index
    %c0_156 = arith.constant 0 : index
    %275 = vector.load %arg7[%274, %c0_155, %c0_156] : memref<8x8x32xf32, #tpu.memory_space<vmem>>, vector<1x8x32xf32>
    %276 = vector.shape_cast %275 : vector<1x8x32xf32> to vector<8x32xf32>
    %277 = vector.shape_cast %273 : vector<8x32xf32> to vector<1x8x32xf32>
    tpu.vector_store %arg7[%274, %c0_155, %c0_156], %277 {strides = array<i32>} : memref<8x8x32xf32, #tpu.memory_space<vmem>>, vector<1x8x32xf32>,
    %c2_i32 = arith.constant 2 : i32
    %278 = arith.truncf %273 : vector<8x32xf32> to vector<8x32xbf16>
    %c0_i32_157 = arith.constant 0 : i32
    %279 = arith.addi %c0_i32_157, %c2_i32 : i32
    %280 = arith.index_cast %279 : i32 to index
    %c0_158 = arith.constant 0 : index
    %c0_159 = arith.constant 0 : index
    %281 = vector.load %arg9[%280, %c0_158, %c0_159] : memref<32x8x32xf32, #tpu.memory_space<vmem>>, vector<1x8x32xf32>
    %282 = vector.shape_cast %281 : vector<1x8x32xf32> to vector<8x32xf32>
    %cst_160 = arith.constant dense<0.000000e+00> : vector<8x32xf32>
    %283 = tpu.matmul %278, %171, %cst_160 {dimension_numbers = #tpu.dot_dimension_numbers<[1], [0], [0], [1], [0, 0, 1, 1], [], []>} : vector<8x32xbf16>, vector<32x32xbf16>, vector<8x32xf32> -> vector<8x32xf32>
    %284 = arith.addf %282, %283 : vector<8x32xf32>
    %285 = arith.negf %284 : vector<8x32xf32>
    %286 = math.exp %285 : vector<8x32xf32>
    %cst_161 = arith.constant 1.000000e+00 : f32
    %287 = vector.broadcast %cst_161 : f32 to vector<8x32xf32>
    %288 = arith.addf %287, %286 : vector<8x32xf32>
    %289 = arith.divf %287, %288 : vector<8x32xf32>
    %c8_i32_162 = arith.constant 8 : i32
    %290 = arith.addi %c8_i32_162, %c2_i32 : i32
    %291 = arith.index_cast %290 : i32 to index
    %c0_163 = arith.constant 0 : index
    %c0_164 = arith.constant 0 : index
    %292 = vector.load %arg9[%291, %c0_163, %c0_164] : memref<32x8x32xf32, #tpu.memory_space<vmem>>, vector<1x8x32xf32>
    %293 = vector.shape_cast %292 : vector<1x8x32xf32> to vector<8x32xf32>
    %cst_165 = arith.constant dense<0.000000e+00> : vector<8x32xf32>
    %294 = tpu.matmul %278, %173, %cst_165 {dimension_numbers = #tpu.dot_dimension_numbers<[1], [0], [0], [1], [0, 0, 1, 1], [], []>} : vector<8x32xbf16>, vector<32x32xbf16>, vector<8x32xf32> -> vector<8x32xf32>
    %295 = arith.addf %293, %294 : vector<8x32xf32>
    %296 = arith.negf %295 : vector<8x32xf32>
    %297 = math.exp %296 : vector<8x32xf32>
    %cst_166 = arith.constant 1.000000e+00 : f32
    %298 = vector.broadcast %cst_166 : f32 to vector<8x32xf32>
    %299 = arith.addf %298, %297 : vector<8x32xf32>
    %300 = arith.divf %298, %299 : vector<8x32xf32>
    %c16_i32_167 = arith.constant 16 : i32
    %301 = arith.addi %c16_i32_167, %c2_i32 : i32
    %302 = arith.index_cast %301 : i32 to index
    %c0_168 = arith.constant 0 : index
    %c0_169 = arith.constant 0 : index
    %303 = vector.load %arg9[%302, %c0_168, %c0_169] : memref<32x8x32xf32, #tpu.memory_space<vmem>>, vector<1x8x32xf32>
    %304 = vector.shape_cast %303 : vector<1x8x32xf32> to vector<8x32xf32>
    %cst_170 = arith.constant dense<0.000000e+00> : vector<8x32xf32>
    %305 = tpu.matmul %278, %175, %cst_170 {dimension_numbers = #tpu.dot_dimension_numbers<[1], [0], [0], [1], [0, 0, 1, 1], [], []>} : vector<8x32xbf16>, vector<32x32xbf16>, vector<8x32xf32> -> vector<8x32xf32>
    %306 = arith.addf %304, %305 : vector<8x32xf32>
    %307 = math.tanh %306 : vector<8x32xf32>
    %c24_i32_171 = arith.constant 24 : i32
    %308 = arith.addi %c24_i32_171, %c2_i32 : i32
    %309 = arith.index_cast %308 : i32 to index
    %c0_172 = arith.constant 0 : index
    %c0_173 = arith.constant 0 : index
    %310 = vector.load %arg9[%309, %c0_172, %c0_173] : memref<32x8x32xf32, #tpu.memory_space<vmem>>, vector<1x8x32xf32>
    %311 = vector.shape_cast %310 : vector<1x8x32xf32> to vector<8x32xf32>
    %cst_174 = arith.constant dense<0.000000e+00> : vector<8x32xf32>
    %312 = tpu.matmul %278, %177, %cst_174 {dimension_numbers = #tpu.dot_dimension_numbers<[1], [0], [0], [1], [0, 0, 1, 1], [], []>} : vector<8x32xbf16>, vector<32x32xbf16>, vector<8x32xf32> -> vector<8x32xf32>
    %313 = arith.addf %311, %312 : vector<8x32xf32>
    %314 = arith.negf %313 : vector<8x32xf32>
    %315 = math.exp %314 : vector<8x32xf32>
    %cst_175 = arith.constant 1.000000e+00 : f32
    %316 = vector.broadcast %cst_175 : f32 to vector<8x32xf32>
    %317 = arith.addf %316, %315 : vector<8x32xf32>
    %318 = arith.divf %316, %317 : vector<8x32xf32>
    %319 = arith.mulf %300, %271 : vector<8x32xf32>
    %320 = arith.mulf %289, %307 : vector<8x32xf32>
    %321 = arith.addf %319, %320 : vector<8x32xf32>
    %322 = math.tanh %321 : vector<8x32xf32>
    %323 = arith.mulf %318, %322 : vector<8x32xf32>
    %324 = arith.index_cast %c2_i32 : i32 to index
    %c0_176 = arith.constant 0 : index
    %c0_177 = arith.constant 0 : index
    %325 = vector.load %arg7[%324, %c0_176, %c0_177] : memref<8x8x32xf32, #tpu.memory_space<vmem>>, vector<1x8x32xf32>
    %326 = vector.shape_cast %325 : vector<1x8x32xf32> to vector<8x32xf32>
    %327 = vector.shape_cast %323 : vector<8x32xf32> to vector<1x8x32xf32>
    tpu.vector_store %arg7[%324, %c0_176, %c0_177], %327 {strides = array<i32>} : memref<8x8x32xf32, #tpu.memory_space<vmem>>, vector<1x8x32xf32>,
    %c3_i32 = arith.constant 3 : i32
    %328 = arith.truncf %323 : vector<8x32xf32> to vector<8x32xbf16>
    %c0_i32_178 = arith.constant 0 : i32
    %329 = arith.addi %c0_i32_178, %c3_i32 : i32
    %330 = arith.index_cast %329 : i32 to index
    %c0_179 = arith.constant 0 : index
    %c0_180 = arith.constant 0 : index
    %331 = vector.load %arg9[%330, %c0_179, %c0_180] : memref<32x8x32xf32, #tpu.memory_space<vmem>>, vector<1x8x32xf32>
    %332 = vector.shape_cast %331 : vector<1x8x32xf32> to vector<8x32xf32>
    %cst_181 = arith.constant dense<0.000000e+00> : vector<8x32xf32>
    %333 = tpu.matmul %328, %171, %cst_181 {dimension_numbers = #tpu.dot_dimension_numbers<[1], [0], [0], [1], [0, 0, 1, 1], [], []>} : vector<8x32xbf16>, vector<32x32xbf16>, vector<8x32xf32> -> vector<8x32xf32>
    %334 = arith.addf %332, %333 : vector<8x32xf32>
    %335 = arith.negf %334 : vector<8x32xf32>
    %336 = math.exp %335 : vector<8x32xf32>
    %cst_182 = arith.constant 1.000000e+00 : f32
    %337 = vector.broadcast %cst_182 : f32 to vector<8x32xf32>
    %338 = arith.addf %337, %336 : vector<8x32xf32>
    %339 = arith.divf %337, %338 : vector<8x32xf32>
    %c8_i32_183 = arith.constant 8 : i32
    %340 = arith.addi %c8_i32_183, %c3_i32 : i32
    %341 = arith.index_cast %340 : i32 to index
    %c0_184 = arith.constant 0 : index
    %c0_185 = arith.constant 0 : index
    %342 = vector.load %arg9[%341, %c0_184, %c0_185] : memref<32x8x32xf32, #tpu.memory_space<vmem>>, vector<1x8x32xf32>
    %343 = vector.shape_cast %342 : vector<1x8x32xf32> to vector<8x32xf32>
    %cst_186 = arith.constant dense<0.000000e+00> : vector<8x32xf32>
    %344 = tpu.matmul %328, %173, %cst_186 {dimension_numbers = #tpu.dot_dimension_numbers<[1], [0], [0], [1], [0, 0, 1, 1], [], []>} : vector<8x32xbf16>, vector<32x32xbf16>, vector<8x32xf32> -> vector<8x32xf32>
    %345 = arith.addf %343, %344 : vector<8x32xf32>
    %346 = arith.negf %345 : vector<8x32xf32>
    %347 = math.exp %346 : vector<8x32xf32>
    %cst_187 = arith.constant 1.000000e+00 : f32
    %348 = vector.broadcast %cst_187 : f32 to vector<8x32xf32>
    %349 = arith.addf %348, %347 : vector<8x32xf32>
    %350 = arith.divf %348, %349 : vector<8x32xf32>
    %c16_i32_188 = arith.constant 16 : i32
    %351 = arith.addi %c16_i32_188, %c3_i32 : i32
    %352 = arith.index_cast %351 : i32 to index
    %c0_189 = arith.constant 0 : index
    %c0_190 = arith.constant 0 : index
    %353 = vector.load %arg9[%352, %c0_189, %c0_190] : memref<32x8x32xf32, #tpu.memory_space<vmem>>, vector<1x8x32xf32>
    %354 = vector.shape_cast %353 : vector<1x8x32xf32> to vector<8x32xf32>
    %cst_191 = arith.constant dense<0.000000e+00> : vector<8x32xf32>
    %355 = tpu.matmul %328, %175, %cst_191 {dimension_numbers = #tpu.dot_dimension_numbers<[1], [0], [0], [1], [0, 0, 1, 1], [], []>} : vector<8x32xbf16>, vector<32x32xbf16>, vector<8x32xf32> -> vector<8x32xf32>
    %356 = arith.addf %354, %355 : vector<8x32xf32>
    %357 = math.tanh %356 : vector<8x32xf32>
    %c24_i32_192 = arith.constant 24 : i32
    %358 = arith.addi %c24_i32_192, %c3_i32 : i32
    %359 = arith.index_cast %358 : i32 to index
    %c0_193 = arith.constant 0 : index
    %c0_194 = arith.constant 0 : index
    %360 = vector.load %arg9[%359, %c0_193, %c0_194] : memref<32x8x32xf32, #tpu.memory_space<vmem>>, vector<1x8x32xf32>
    %361 = vector.shape_cast %360 : vector<1x8x32xf32> to vector<8x32xf32>
    %cst_195 = arith.constant dense<0.000000e+00> : vector<8x32xf32>
    %362 = tpu.matmul %328, %177, %cst_195 {dimension_numbers = #tpu.dot_dimension_numbers<[1], [0], [0], [1], [0, 0, 1, 1], [], []>} : vector<8x32xbf16>, vector<32x32xbf16>, vector<8x32xf32> -> vector<8x32xf32>
    %363 = arith.addf %361, %362 : vector<8x32xf32>
    %364 = arith.negf %363 : vector<8x32xf32>
    %365 = math.exp %364 : vector<8x32xf32>
    %cst_196 = arith.constant 1.000000e+00 : f32
    %366 = vector.broadcast %cst_196 : f32 to vector<8x32xf32>
    %367 = arith.addf %366, %365 : vector<8x32xf32>
    %368 = arith.divf %366, %367 : vector<8x32xf32>
    %369 = arith.mulf %350, %321 : vector<8x32xf32>
    %370 = arith.mulf %339, %357 : vector<8x32xf32>
    %371 = arith.addf %369, %370 : vector<8x32xf32>
    %372 = math.tanh %371 : vector<8x32xf32>
    %373 = arith.mulf %368, %372 : vector<8x32xf32>
    %374 = arith.index_cast %c3_i32 : i32 to index
    %c0_197 = arith.constant 0 : index
    %c0_198 = arith.constant 0 : index
    %375 = vector.load %arg7[%374, %c0_197, %c0_198] : memref<8x8x32xf32, #tpu.memory_space<vmem>>, vector<1x8x32xf32>
    %376 = vector.shape_cast %375 : vector<1x8x32xf32> to vector<8x32xf32>
    %377 = vector.shape_cast %373 : vector<8x32xf32> to vector<1x8x32xf32>
    tpu.vector_store %arg7[%374, %c0_197, %c0_198], %377 {strides = array<i32>} : memref<8x8x32xf32, #tpu.memory_space<vmem>>, vector<1x8x32xf32>,
    %c4_i32 = arith.constant 4 : i32
    %378 = arith.truncf %373 : vector<8x32xf32> to vector<8x32xbf16>
    %c0_i32_199 = arith.constant 0 : i32
    %379 = arith.addi %c0_i32_199, %c4_i32 : i32
    %380 = arith.index_cast %379 : i32 to index
    %c0_200 = arith.constant 0 : index
    %c0_201 = arith.constant 0 : index
    %381 = vector.load %arg9[%380, %c0_200, %c0_201] : memref<32x8x32xf32, #tpu.memory_space<vmem>>, vector<1x8x32xf32>
    %382 = vector.shape_cast %381 : vector<1x8x32xf32> to vector<8x32xf32>
    %cst_202 = arith.constant dense<0.000000e+00> : vector<8x32xf32>
    %383 = tpu.matmul %378, %171, %cst_202 {dimension_numbers = #tpu.dot_dimension_numbers<[1], [0], [0], [1], [0, 0, 1, 1], [], []>} : vector<8x32xbf16>, vector<32x32xbf16>, vector<8x32xf32> -> vector<8x32xf32>
    %384 = arith.addf %382, %383 : vector<8x32xf32>
    %385 = arith.negf %384 : vector<8x32xf32>
    %386 = math.exp %385 : vector<8x32xf32>
    %cst_203 = arith.constant 1.000000e+00 : f32
    %387 = vector.broadcast %cst_203 : f32 to vector<8x32xf32>
    %388 = arith.addf %387, %386 : vector<8x32xf32>
    %389 = arith.divf %387, %388 : vector<8x32xf32>
    %c8_i32_204 = arith.constant 8 : i32
    %390 = arith.addi %c8_i32_204, %c4_i32 : i32
    %391 = arith.index_cast %390 : i32 to index
    %c0_205 = arith.constant 0 : index
    %c0_206 = arith.constant 0 : index
    %392 = vector.load %arg9[%391, %c0_205, %c0_206] : memref<32x8x32xf32, #tpu.memory_space<vmem>>, vector<1x8x32xf32>
    %393 = vector.shape_cast %392 : vector<1x8x32xf32> to vector<8x32xf32>
    %cst_207 = arith.constant dense<0.000000e+00> : vector<8x32xf32>
    %394 = tpu.matmul %378, %173, %cst_207 {dimension_numbers = #tpu.dot_dimension_numbers<[1], [0], [0], [1], [0, 0, 1, 1], [], []>} : vector<8x32xbf16>, vector<32x32xbf16>, vector<8x32xf32> -> vector<8x32xf32>
    %395 = arith.addf %393, %394 : vector<8x32xf32>
    %396 = arith.negf %395 : vector<8x32xf32>
    %397 = math.exp %396 : vector<8x32xf32>
    %cst_208 = arith.constant 1.000000e+00 : f32
    %398 = vector.broadcast %cst_208 : f32 to vector<8x32xf32>
    %399 = arith.addf %398, %397 : vector<8x32xf32>
    %400 = arith.divf %398, %399 : vector<8x32xf32>
    %c16_i32_209 = arith.constant 16 : i32
    %401 = arith.addi %c16_i32_209, %c4_i32 : i32
    %402 = arith.index_cast %401 : i32 to index
    %c0_210 = arith.constant 0 : index
    %c0_211 = arith.constant 0 : index
    %403 = vector.load %arg9[%402, %c0_210, %c0_211] : memref<32x8x32xf32, #tpu.memory_space<vmem>>, vector<1x8x32xf32>
    %404 = vector.shape_cast %403 : vector<1x8x32xf32> to vector<8x32xf32>
    %cst_212 = arith.constant dense<0.000000e+00> : vector<8x32xf32>
    %405 = tpu.matmul %378, %175, %cst_212 {dimension_numbers = #tpu.dot_dimension_numbers<[1], [0], [0], [1], [0, 0, 1, 1], [], []>} : vector<8x32xbf16>, vector<32x32xbf16>, vector<8x32xf32> -> vector<8x32xf32>
    %406 = arith.addf %404, %405 : vector<8x32xf32>
    %407 = math.tanh %406 : vector<8x32xf32>
    %c24_i32_213 = arith.constant 24 : i32
    %408 = arith.addi %c24_i32_213, %c4_i32 : i32
    %409 = arith.index_cast %408 : i32 to index
    %c0_214 = arith.constant 0 : index
    %c0_215 = arith.constant 0 : index
    %410 = vector.load %arg9[%409, %c0_214, %c0_215] : memref<32x8x32xf32, #tpu.memory_space<vmem>>, vector<1x8x32xf32>
    %411 = vector.shape_cast %410 : vector<1x8x32xf32> to vector<8x32xf32>
    %cst_216 = arith.constant dense<0.000000e+00> : vector<8x32xf32>
    %412 = tpu.matmul %378, %177, %cst_216 {dimension_numbers = #tpu.dot_dimension_numbers<[1], [0], [0], [1], [0, 0, 1, 1], [], []>} : vector<8x32xbf16>, vector<32x32xbf16>, vector<8x32xf32> -> vector<8x32xf32>
    %413 = arith.addf %411, %412 : vector<8x32xf32>
    %414 = arith.negf %413 : vector<8x32xf32>
    %415 = math.exp %414 : vector<8x32xf32>
    %cst_217 = arith.constant 1.000000e+00 : f32
    %416 = vector.broadcast %cst_217 : f32 to vector<8x32xf32>
    %417 = arith.addf %416, %415 : vector<8x32xf32>
    %418 = arith.divf %416, %417 : vector<8x32xf32>
    %419 = arith.mulf %400, %371 : vector<8x32xf32>
    %420 = arith.mulf %389, %407 : vector<8x32xf32>
    %421 = arith.addf %419, %420 : vector<8x32xf32>
    %422 = math.tanh %421 : vector<8x32xf32>
    %423 = arith.mulf %418, %422 : vector<8x32xf32>
    %424 = arith.index_cast %c4_i32 : i32 to index
    %c0_218 = arith.constant 0 : index
    %c0_219 = arith.constant 0 : index
    %425 = vector.load %arg7[%424, %c0_218, %c0_219] : memref<8x8x32xf32, #tpu.memory_space<vmem>>, vector<1x8x32xf32>
    %426 = vector.shape_cast %425 : vector<1x8x32xf32> to vector<8x32xf32>
    %427 = vector.shape_cast %423 : vector<8x32xf32> to vector<1x8x32xf32>
    tpu.vector_store %arg7[%424, %c0_218, %c0_219], %427 {strides = array<i32>} : memref<8x8x32xf32, #tpu.memory_space<vmem>>, vector<1x8x32xf32>,
    %c5_i32 = arith.constant 5 : i32
    %428 = arith.truncf %423 : vector<8x32xf32> to vector<8x32xbf16>
    %c0_i32_220 = arith.constant 0 : i32
    %429 = arith.addi %c0_i32_220, %c5_i32 : i32
    %430 = arith.index_cast %429 : i32 to index
    %c0_221 = arith.constant 0 : index
    %c0_222 = arith.constant 0 : index
    %431 = vector.load %arg9[%430, %c0_221, %c0_222] : memref<32x8x32xf32, #tpu.memory_space<vmem>>, vector<1x8x32xf32>
    %432 = vector.shape_cast %431 : vector<1x8x32xf32> to vector<8x32xf32>
    %cst_223 = arith.constant dense<0.000000e+00> : vector<8x32xf32>
    %433 = tpu.matmul %428, %171, %cst_223 {dimension_numbers = #tpu.dot_dimension_numbers<[1], [0], [0], [1], [0, 0, 1, 1], [], []>} : vector<8x32xbf16>, vector<32x32xbf16>, vector<8x32xf32> -> vector<8x32xf32>
    %434 = arith.addf %432, %433 : vector<8x32xf32>
    %435 = arith.negf %434 : vector<8x32xf32>
    %436 = math.exp %435 : vector<8x32xf32>
    %cst_224 = arith.constant 1.000000e+00 : f32
    %437 = vector.broadcast %cst_224 : f32 to vector<8x32xf32>
    %438 = arith.addf %437, %436 : vector<8x32xf32>
    %439 = arith.divf %437, %438 : vector<8x32xf32>
    %c8_i32_225 = arith.constant 8 : i32
    %440 = arith.addi %c8_i32_225, %c5_i32 : i32
    %441 = arith.index_cast %440 : i32 to index
    %c0_226 = arith.constant 0 : index
    %c0_227 = arith.constant 0 : index
    %442 = vector.load %arg9[%441, %c0_226, %c0_227] : memref<32x8x32xf32, #tpu.memory_space<vmem>>, vector<1x8x32xf32>
    %443 = vector.shape_cast %442 : vector<1x8x32xf32> to vector<8x32xf32>
    %cst_228 = arith.constant dense<0.000000e+00> : vector<8x32xf32>
    %444 = tpu.matmul %428, %173, %cst_228 {dimension_numbers = #tpu.dot_dimension_numbers<[1], [0], [0], [1], [0, 0, 1, 1], [], []>} : vector<8x32xbf16>, vector<32x32xbf16>, vector<8x32xf32> -> vector<8x32xf32>
    %445 = arith.addf %443, %444 : vector<8x32xf32>
    %446 = arith.negf %445 : vector<8x32xf32>
    %447 = math.exp %446 : vector<8x32xf32>
    %cst_229 = arith.constant 1.000000e+00 : f32
    %448 = vector.broadcast %cst_229 : f32 to vector<8x32xf32>
    %449 = arith.addf %448, %447 : vector<8x32xf32>
    %450 = arith.divf %448, %449 : vector<8x32xf32>
    %c16_i32_230 = arith.constant 16 : i32
    %451 = arith.addi %c16_i32_230, %c5_i32 : i32
    %452 = arith.index_cast %451 : i32 to index
    %c0_231 = arith.constant 0 : index
    %c0_232 = arith.constant 0 : index
    %453 = vector.load %arg9[%452, %c0_231, %c0_232] : memref<32x8x32xf32, #tpu.memory_space<vmem>>, vector<1x8x32xf32>
    %454 = vector.shape_cast %453 : vector<1x8x32xf32> to vector<8x32xf32>
    %cst_233 = arith.constant dense<0.000000e+00> : vector<8x32xf32>
    %455 = tpu.matmul %428, %175, %cst_233 {dimension_numbers = #tpu.dot_dimension_numbers<[1], [0], [0], [1], [0, 0, 1, 1], [], []>} : vector<8x32xbf16>, vector<32x32xbf16>, vector<8x32xf32> -> vector<8x32xf32>
    %456 = arith.addf %454, %455 : vector<8x32xf32>
    %457 = math.tanh %456 : vector<8x32xf32>
    %c24_i32_234 = arith.constant 24 : i32
    %458 = arith.addi %c24_i32_234, %c5_i32 : i32
    %459 = arith.index_cast %458 : i32 to index
    %c0_235 = arith.constant 0 : index
    %c0_236 = arith.constant 0 : index
    %460 = vector.load %arg9[%459, %c0_235, %c0_236] : memref<32x8x32xf32, #tpu.memory_space<vmem>>, vector<1x8x32xf32>
    %461 = vector.shape_cast %460 : vector<1x8x32xf32> to vector<8x32xf32>
    %cst_237 = arith.constant dense<0.000000e+00> : vector<8x32xf32>
    %462 = tpu.matmul %428, %177, %cst_237 {dimension_numbers = #tpu.dot_dimension_numbers<[1], [0], [0], [1], [0, 0, 1, 1], [], []>} : vector<8x32xbf16>, vector<32x32xbf16>, vector<8x32xf32> -> vector<8x32xf32>
    %463 = arith.addf %461, %462 : vector<8x32xf32>
    %464 = arith.negf %463 : vector<8x32xf32>
    %465 = math.exp %464 : vector<8x32xf32>
    %cst_238 = arith.constant 1.000000e+00 : f32
    %466 = vector.broadcast %cst_238 : f32 to vector<8x32xf32>
    %467 = arith.addf %466, %465 : vector<8x32xf32>
    %468 = arith.divf %466, %467 : vector<8x32xf32>
    %469 = arith.mulf %450, %421 : vector<8x32xf32>
    %470 = arith.mulf %439, %457 : vector<8x32xf32>
    %471 = arith.addf %469, %470 : vector<8x32xf32>
    %472 = math.tanh %471 : vector<8x32xf32>
    %473 = arith.mulf %468, %472 : vector<8x32xf32>
    %474 = arith.index_cast %c5_i32 : i32 to index
    %c0_239 = arith.constant 0 : index
    %c0_240 = arith.constant 0 : index
    %475 = vector.load %arg7[%474, %c0_239, %c0_240] : memref<8x8x32xf32, #tpu.memory_space<vmem>>, vector<1x8x32xf32>
    %476 = vector.shape_cast %475 : vector<1x8x32xf32> to vector<8x32xf32>
    %477 = vector.shape_cast %473 : vector<8x32xf32> to vector<1x8x32xf32>
    tpu.vector_store %arg7[%474, %c0_239, %c0_240], %477 {strides = array<i32>} : memref<8x8x32xf32, #tpu.memory_space<vmem>>, vector<1x8x32xf32>,
    %c6_i32_241 = arith.constant 6 : i32
    %478 = arith.truncf %473 : vector<8x32xf32> to vector<8x32xbf16>
    %c0_i32_242 = arith.constant 0 : i32
    %479 = arith.addi %c0_i32_242, %c6_i32_241 : i32
    %480 = arith.index_cast %479 : i32 to index
    %c0_243 = arith.constant 0 : index
    %c0_244 = arith.constant 0 : index
    %481 = vector.load %arg9[%480, %c0_243, %c0_244] : memref<32x8x32xf32, #tpu.memory_space<vmem>>, vector<1x8x32xf32>
    %482 = vector.shape_cast %481 : vector<1x8x32xf32> to vector<8x32xf32>
    %cst_245 = arith.constant dense<0.000000e+00> : vector<8x32xf32>
    %483 = tpu.matmul %478, %171, %cst_245 {dimension_numbers = #tpu.dot_dimension_numbers<[1], [0], [0], [1], [0, 0, 1, 1], [], []>} : vector<8x32xbf16>, vector<32x32xbf16>, vector<8x32xf32> -> vector<8x32xf32>
    %484 = arith.addf %482, %483 : vector<8x32xf32>
    %485 = arith.negf %484 : vector<8x32xf32>
    %486 = math.exp %485 : vector<8x32xf32>
    %cst_246 = arith.constant 1.000000e+00 : f32
    %487 = vector.broadcast %cst_246 : f32 to vector<8x32xf32>
    %488 = arith.addf %487, %486 : vector<8x32xf32>
    %489 = arith.divf %487, %488 : vector<8x32xf32>
    %c8_i32_247 = arith.constant 8 : i32
    %490 = arith.addi %c8_i32_247, %c6_i32_241 : i32
    %491 = arith.index_cast %490 : i32 to index
    %c0_248 = arith.constant 0 : index
    %c0_249 = arith.constant 0 : index
    %492 = vector.load %arg9[%491, %c0_248, %c0_249] : memref<32x8x32xf32, #tpu.memory_space<vmem>>, vector<1x8x32xf32>
    %493 = vector.shape_cast %492 : vector<1x8x32xf32> to vector<8x32xf32>
    %cst_250 = arith.constant dense<0.000000e+00> : vector<8x32xf32>
    %494 = tpu.matmul %478, %173, %cst_250 {dimension_numbers = #tpu.dot_dimension_numbers<[1], [0], [0], [1], [0, 0, 1, 1], [], []>} : vector<8x32xbf16>, vector<32x32xbf16>, vector<8x32xf32> -> vector<8x32xf32>
    %495 = arith.addf %493, %494 : vector<8x32xf32>
    %496 = arith.negf %495 : vector<8x32xf32>
    %497 = math.exp %496 : vector<8x32xf32>
    %cst_251 = arith.constant 1.000000e+00 : f32
    %498 = vector.broadcast %cst_251 : f32 to vector<8x32xf32>
    %499 = arith.addf %498, %497 : vector<8x32xf32>
    %500 = arith.divf %498, %499 : vector<8x32xf32>
    %c16_i32_252 = arith.constant 16 : i32
    %501 = arith.addi %c16_i32_252, %c6_i32_241 : i32
    %502 = arith.index_cast %501 : i32 to index
    %c0_253 = arith.constant 0 : index
    %c0_254 = arith.constant 0 : index
    %503 = vector.load %arg9[%502, %c0_253, %c0_254] : memref<32x8x32xf32, #tpu.memory_space<vmem>>, vector<1x8x32xf32>
    %504 = vector.shape_cast %503 : vector<1x8x32xf32> to vector<8x32xf32>
    %cst_255 = arith.constant dense<0.000000e+00> : vector<8x32xf32>
    %505 = tpu.matmul %478, %175, %cst_255 {dimension_numbers = #tpu.dot_dimension_numbers<[1], [0], [0], [1], [0, 0, 1, 1], [], []>} : vector<8x32xbf16>, vector<32x32xbf16>, vector<8x32xf32> -> vector<8x32xf32>
    %506 = arith.addf %504, %505 : vector<8x32xf32>
    %507 = math.tanh %506 : vector<8x32xf32>
    %c24_i32_256 = arith.constant 24 : i32
    %508 = arith.addi %c24_i32_256, %c6_i32_241 : i32
    %509 = arith.index_cast %508 : i32 to index
    %c0_257 = arith.constant 0 : index
    %c0_258 = arith.constant 0 : index
    %510 = vector.load %arg9[%509, %c0_257, %c0_258] : memref<32x8x32xf32, #tpu.memory_space<vmem>>, vector<1x8x32xf32>
    %511 = vector.shape_cast %510 : vector<1x8x32xf32> to vector<8x32xf32>
    %cst_259 = arith.constant dense<0.000000e+00> : vector<8x32xf32>
    %512 = tpu.matmul %478, %177, %cst_259 {dimension_numbers = #tpu.dot_dimension_numbers<[1], [0], [0], [1], [0, 0, 1, 1], [], []>} : vector<8x32xbf16>, vector<32x32xbf16>, vector<8x32xf32> -> vector<8x32xf32>
    %513 = arith.addf %511, %512 : vector<8x32xf32>
    %514 = arith.negf %513 : vector<8x32xf32>
    %515 = math.exp %514 : vector<8x32xf32>
    %cst_260 = arith.constant 1.000000e+00 : f32
    %516 = vector.broadcast %cst_260 : f32 to vector<8x32xf32>
    %517 = arith.addf %516, %515 : vector<8x32xf32>
    %518 = arith.divf %516, %517 : vector<8x32xf32>
    %519 = arith.mulf %500, %471 : vector<8x32xf32>
    %520 = arith.mulf %489, %507 : vector<8x32xf32>
    %521 = arith.addf %519, %520 : vector<8x32xf32>
    %522 = math.tanh %521 : vector<8x32xf32>
    %523 = arith.mulf %518, %522 : vector<8x32xf32>
    %524 = arith.index_cast %c6_i32_241 : i32 to index
    %c0_261 = arith.constant 0 : index
    %c0_262 = arith.constant 0 : index
    %525 = vector.load %arg7[%524, %c0_261, %c0_262] : memref<8x8x32xf32, #tpu.memory_space<vmem>>, vector<1x8x32xf32>
    %526 = vector.shape_cast %525 : vector<1x8x32xf32> to vector<8x32xf32>
    %527 = vector.shape_cast %523 : vector<8x32xf32> to vector<1x8x32xf32>
    tpu.vector_store %arg7[%524, %c0_261, %c0_262], %527 {strides = array<i32>} : memref<8x8x32xf32, #tpu.memory_space<vmem>>, vector<1x8x32xf32>,
    %c7_i32 = arith.constant 7 : i32
    %528 = arith.truncf %523 : vector<8x32xf32> to vector<8x32xbf16>
    %c0_i32_263 = arith.constant 0 : i32
    %529 = arith.addi %c0_i32_263, %c7_i32 : i32
    %530 = arith.index_cast %529 : i32 to index
    %c0_264 = arith.constant 0 : index
    %c0_265 = arith.constant 0 : index
    %531 = vector.load %arg9[%530, %c0_264, %c0_265] : memref<32x8x32xf32, #tpu.memory_space<vmem>>, vector<1x8x32xf32>
    %532 = vector.shape_cast %531 : vector<1x8x32xf32> to vector<8x32xf32>
    %cst_266 = arith.constant dense<0.000000e+00> : vector<8x32xf32>
    %533 = tpu.matmul %528, %171, %cst_266 {dimension_numbers = #tpu.dot_dimension_numbers<[1], [0], [0], [1], [0, 0, 1, 1], [], []>} : vector<8x32xbf16>, vector<32x32xbf16>, vector<8x32xf32> -> vector<8x32xf32>
    %534 = arith.addf %532, %533 : vector<8x32xf32>
    %535 = arith.negf %534 : vector<8x32xf32>
    %536 = math.exp %535 : vector<8x32xf32>
    %cst_267 = arith.constant 1.000000e+00 : f32
    %537 = vector.broadcast %cst_267 : f32 to vector<8x32xf32>
    %538 = arith.addf %537, %536 : vector<8x32xf32>
    %539 = arith.divf %537, %538 : vector<8x32xf32>
    %c8_i32_268 = arith.constant 8 : i32
    %540 = arith.addi %c8_i32_268, %c7_i32 : i32
    %541 = arith.index_cast %540 : i32 to index
    %c0_269 = arith.constant 0 : index
    %c0_270 = arith.constant 0 : index
    %542 = vector.load %arg9[%541, %c0_269, %c0_270] : memref<32x8x32xf32, #tpu.memory_space<vmem>>, vector<1x8x32xf32>
    %543 = vector.shape_cast %542 : vector<1x8x32xf32> to vector<8x32xf32>
    %cst_271 = arith.constant dense<0.000000e+00> : vector<8x32xf32>
    %544 = tpu.matmul %528, %173, %cst_271 {dimension_numbers = #tpu.dot_dimension_numbers<[1], [0], [0], [1], [0, 0, 1, 1], [], []>} : vector<8x32xbf16>, vector<32x32xbf16>, vector<8x32xf32> -> vector<8x32xf32>
    %545 = arith.addf %543, %544 : vector<8x32xf32>
    %546 = arith.negf %545 : vector<8x32xf32>
    %547 = math.exp %546 : vector<8x32xf32>
    %cst_272 = arith.constant 1.000000e+00 : f32
    %548 = vector.broadcast %cst_272 : f32 to vector<8x32xf32>
    %549 = arith.addf %548, %547 : vector<8x32xf32>
    %550 = arith.divf %548, %549 : vector<8x32xf32>
    %c16_i32_273 = arith.constant 16 : i32
    %551 = arith.addi %c16_i32_273, %c7_i32 : i32
    %552 = arith.index_cast %551 : i32 to index
    %c0_274 = arith.constant 0 : index
    %c0_275 = arith.constant 0 : index
    %553 = vector.load %arg9[%552, %c0_274, %c0_275] : memref<32x8x32xf32, #tpu.memory_space<vmem>>, vector<1x8x32xf32>
    %554 = vector.shape_cast %553 : vector<1x8x32xf32> to vector<8x32xf32>
    %cst_276 = arith.constant dense<0.000000e+00> : vector<8x32xf32>
    %555 = tpu.matmul %528, %175, %cst_276 {dimension_numbers = #tpu.dot_dimension_numbers<[1], [0], [0], [1], [0, 0, 1, 1], [], []>} : vector<8x32xbf16>, vector<32x32xbf16>, vector<8x32xf32> -> vector<8x32xf32>
    %556 = arith.addf %554, %555 : vector<8x32xf32>
    %557 = math.tanh %556 : vector<8x32xf32>
    %c24_i32_277 = arith.constant 24 : i32
    %558 = arith.addi %c24_i32_277, %c7_i32 : i32
    %559 = arith.index_cast %558 : i32 to index
    %c0_278 = arith.constant 0 : index
    %c0_279 = arith.constant 0 : index
    %560 = vector.load %arg9[%559, %c0_278, %c0_279] : memref<32x8x32xf32, #tpu.memory_space<vmem>>, vector<1x8x32xf32>
    %561 = vector.shape_cast %560 : vector<1x8x32xf32> to vector<8x32xf32>
    %cst_280 = arith.constant dense<0.000000e+00> : vector<8x32xf32>
    %562 = tpu.matmul %528, %177, %cst_280 {dimension_numbers = #tpu.dot_dimension_numbers<[1], [0], [0], [1], [0, 0, 1, 1], [], []>} : vector<8x32xbf16>, vector<32x32xbf16>, vector<8x32xf32> -> vector<8x32xf32>
    %563 = arith.addf %561, %562 : vector<8x32xf32>
    %564 = arith.negf %563 : vector<8x32xf32>
    %565 = math.exp %564 : vector<8x32xf32>
    %cst_281 = arith.constant 1.000000e+00 : f32
    %566 = vector.broadcast %cst_281 : f32 to vector<8x32xf32>
    %567 = arith.addf %566, %565 : vector<8x32xf32>
    %568 = arith.divf %566, %567 : vector<8x32xf32>
    %569 = arith.mulf %550, %521 : vector<8x32xf32>
    %570 = arith.mulf %539, %557 : vector<8x32xf32>
    %571 = arith.addf %569, %570 : vector<8x32xf32>
    %572 = math.tanh %571 : vector<8x32xf32>
    %573 = arith.mulf %568, %572 : vector<8x32xf32>
    %574 = arith.index_cast %c7_i32 : i32 to index
    %c0_282 = arith.constant 0 : index
    %c0_283 = arith.constant 0 : index
    %575 = vector.load %arg7[%574, %c0_282, %c0_283] : memref<8x8x32xf32, #tpu.memory_space<vmem>>, vector<1x8x32xf32>
    %576 = vector.shape_cast %575 : vector<1x8x32xf32> to vector<8x32xf32>
    %577 = vector.shape_cast %573 : vector<8x32xf32> to vector<1x8x32xf32>
    tpu.vector_store %arg7[%574, %c0_282, %c0_283], %577 {strides = array<i32>} : memref<8x8x32xf32, #tpu.memory_space<vmem>>, vector<1x8x32xf32>,
    %c8_i32_284 = arith.constant 8 : i32
    %c0_285 = arith.constant 0 : index
    %c0_286 = arith.constant 0 : index
    %578 = vector.load %arg8[%c0_285, %c0_286] : memref<8x32xf32, #tpu.memory_space<vmem>>, vector<8x32xf32>
    tpu.vector_store %arg8[%c0_285, %c0_286], %571 {strides = array<i32>} : memref<8x32xf32, #tpu.memory_space<vmem>>, vector<8x32xf32>,
    return
  }
}

</mosaic_0001>

<llo_original>
// kernel: pe_stance_lstm_forward.1
$region0: #{pe_stance_lstm_forward.1}
  #allocation0 [shape = 'u32[]', space=smem, size = 0x4, offset = 0x4, fixed_abs, tag = 'smem constant byte address 0x4 - core index']
  #allocation1 [shape = 'u32[144,128]{1,0:T(1,128)}', space=vmem, size = 0x12000, scoped, tag = 'internal scratch']
  #allocation2 [shape = 'f32[32,8,32]{2,1,0:T(8,128)}', space=vmem, size = 0x20000, scoped, tag = 'scratch operand']
  %s0 = inlined_call_operand.vmem [shape: s32[8,8], index: 0, kind: input, shape index: {}]
  %s1 = inlined_call_operand.vmem [shape: f32[2,8,32], index: 1, kind: input, shape index: {}]
  %s2 = inlined_call_operand.vmem [shape: bf16[8,8,32], index: 2, kind: input, shape index: {}]
  %s3 = inlined_call_operand.vmem [shape: bf16[6,64,64], index: 3, kind: input, shape index: {}]
  %s4 = inlined_call_operand.vmem [shape: bf16[4,128,32], index: 4, kind: input, shape index: {}]
  %s5 = inlined_call_operand.vmem [shape: bf16[8,32,32], index: 5, kind: input, shape index: {}]
  %s6 = inlined_call_operand.vmem [shape: f32[10,1,128], index: 6, kind: input, shape index: {}]
  %s7 = inlined_call_operand.vmem [shape: f32[8,8,32], index: 7, kind: output, shape index: {0}]
  %s8 = inlined_call_operand.vmem [shape: f32[8,32], index: 8, kind: output, shape index: {1}]
  %9 = xla_tuple %s7, %s8
  %s10 = sld [smem:[#allocation0]]
  $region46: #{pe_stance_lstm_forward.1} parent=0
    _
  %s12 = ssub.s32 1, %s10
  %s13 = scalar_select 0, %s12, %s10
  // Predicated region
  $region2: #{pe_stance_lstm_forward.1} parent=0 // pred_check
    _
  $region3: #{pe_stance_lstm_forward.1} parent=0 // pred_check_branch
    %15 = sbr.rel (0) target = $region5
  $region4: #{pe_stance_lstm_forward.1} parent=0 // pred_region
    _
  $region5: #{pe_stance_lstm_forward.1} parent=0 // pred_fallthru
    _
  // Predicated region
  $region6: #{pe_stance_lstm_forward.1} parent=0 // pred_check
    _
  $region7: #{pe_stance_lstm_forward.1} parent=0 // pred_check_branch
    %17 = sbr.rel (0) target = $region9
  $region8: #{pe_stance_lstm_forward.1} parent=0 // pred_region
    _
  $region9: #{pe_stance_lstm_forward.1} parent=0 // pred_fallthru
    _
  // Predicated region
  $region10: #{pe_stance_lstm_forward.1} parent=0 // pred_check
    _
  $region11: #{pe_stance_lstm_forward.1} parent=0 // pred_check_branch
    %19 = sbr.rel (0) target = $region13
  $region12: #{pe_stance_lstm_forward.1} parent=0 // pred_region
    _
  $region13: #{pe_stance_lstm_forward.1} parent=0 // pred_fallthru
    _
  // Predicated region
  $region14: #{pe_stance_lstm_forward.1} parent=0 // pred_check
    _
  $region15: #{pe_stance_lstm_forward.1} parent=0 // pred_check_branch
    %21 = sbr.rel (0) target = $region17
  $region16: #{pe_stance_lstm_forward.1} parent=0 // pred_region
    _
  $region17: #{pe_stance_lstm_forward.1} parent=0 // pred_fallthru
    _
  // Predicated region
  $region18: #{pe_stance_lstm_forward.1} parent=0 // pred_check
    _
  $region19: #{pe_stance_lstm_forward.1} parent=0 // pred_check_branch
    %23 = sbr.rel (0) target = $region21
  $region20: #{pe_stance_lstm_forward.1} parent=0 // pred_region
    _
  $region21: #{pe_stance_lstm_forward.1} parent=0 // pred_fallthru
    _
  // Predicated region
  $region22: #{pe_stance_lstm_forward.1} parent=0 // pred_check
    _
  $region23: #{pe_stance_lstm_forward.1} parent=0 // pred_check_branch
    %25 = sbr.rel (0) target = $region25
  $region24: #{pe_stance_lstm_forward.1} parent=0 // pred_region
    _
  $region25: #{pe_stance_lstm_forward.1} parent=0 // pred_fallthru
    _
  // Predicated region
  $region26: #{pe_stance_lstm_forward.1} parent=0 // pred_check
    _
  $region27: #{pe_stance_lstm_forward.1} parent=0 // pred_check_branch
    %27 = sbr.rel (0) target = $region29
  $region28: #{pe_stance_lstm_forward.1} parent=0 // pred_region
    _
  $region29: #{pe_stance_lstm_forward.1} parent=0 // pred_fallthru
    _
  %v29 = vld [vmem:[%s2] sm:$0xf]
  %v30 = vld [vmem:[%s2 + $0x4] sm:$0xf]
  %v31 = vld [vmem:[%s2 + $0x8] sm:$0xf]
  %v32 = vld [vmem:[%s2 + $0xc] sm:$0xf]
  %v33 = vld [vmem:[%s2 + $0x10] sm:$0xf]
  %v34 = vld [vmem:[%s2 + $0x14] sm:$0xf]
  %v35 = vld [vmem:[%s2 + $0x18] sm:$0xf]
  %v36 = vld [vmem:[%s2 + $0x1c] sm:$0xf]
  %v37 = vld [vmem:[%s3] sm:$0xf]
  %v38 = vld [vmem:[%s3 + $0x4] sm:$0xf]
  %v39 = vld [vmem:[%s3 + $0x8] sm:$0xf]
  %v40 = vld [vmem:[%s3 + $0xc] sm:$0xf]
  %v41 = vld [vmem:[%s6] sm:$0x1]
  %v43 = vlaneseq
  %v44 = vshrl.u32 %v43, 7
  %v45 = vsub.s32 0, %v44
  %v46 = vrot.slane %v41, %v45
  %v56 = vunpack.c.l.b16 %v29
  %v57 = vunpack.c.l.b16 %v30
  %v58 = vunpack.c.l.b16 %v31
  %v59 = vunpack.c.l.b16 %v32
  %v60 = vunpack.c.l.b16 %v33
  %v61 = vunpack.c.l.b16 %v34
  %v62 = vunpack.c.l.b16 %v35
  %v63 = vunpack.c.l.b16 %v36
  %v64 = vpack.c.b16 %v57, %v56
  %v65 = vpack.c.b16 %v59, %v58
  %v66 = vpack.c.b16 %v61, %v60
  %v67 = vpack.c.b16 %v63, %v62
  %v72 = vunpack.c.l.b16 %v37
  %v73 = vunpack.c.l.b16 %v38
  %v74 = vunpack.c.l.b16 %v39
  %v75 = vunpack.c.l.b16 %v40
  %v76 = vpack.c.b16 %v73, %v72
  %v77 = vpack.c.b16 %v75, %v74
  %vm80 = vcmask 261120
  %v82 = vsel %vm80, %v64, 0
  %v85 = vsel %vm80, %v65, 0
  %v88 = vsel %vm80, %v66, 0
  %v91 = vsel %vm80, %v67, 0
  %93 = vmatprep.subr.bf16.mxu0 0
  %94 = vmatpush1.bf16.msra.mxu0 %v76
  %95 = vmatprep.subr.bf16.mxu0 0
  %96 = vmatpush1.bf16.msra.mxu0 %v77
  %97 = vmatprep.subr.bf16.mxu0 0
  %98 = vmatpush1.bf16.msra.mxu0 0
  %99 = vmatprep.subr.bf16.mxu0 0
  %100 = vmatpush1.bf16.msra.mxu0 0
  %101 = vmatprep.subr.bf16.mxu0 0
  %102 = vmatpush1.bf16.msra.mxu0 0
  %103 = vmatprep.subr.bf16.mxu0 0
  %104 = vmatpush1.bf16.msra.mxu0 0
  %105 = vmatprep.subr.bf16.mxu0 0
  %106 = vmatpush1.bf16.msra.mxu0 0
  %107 = vmatprep.subr.bf16.mxu0 0
  %108 = vmatpush1.bf16.msra.mxu0 0
  %109 = vmatprep.subr.bf16.mxu0 0
  %110 = vmatpush1.bf16.msra.mxu0 0
  %111 = vmatprep.subr.bf16.mxu0 0
  %112 = vmatpush1.bf16.msra.mxu0 0
  %113 = vmatprep.subr.bf16.mxu0 0
  %114 = vmatpush1.bf16.msra.mxu0 0
  %115 = vmatprep.subr.bf16.mxu0 0
  %116 = vmatpush1.bf16.msra.mxu0 0
  %117 = vmatprep.subr.bf16.mxu0 0
  %118 = vmatpush1.bf16.msra.mxu0 0
  %119 = vmatprep.subr.bf16.mxu0 0
  %120 = vmatpush1.bf16.msra.mxu0 0
  %121 = vmatprep.subr.bf16.mxu0 0
  %122 = vmatpush1.bf16.msra.mxu0 0
  %123 = vmatprep.subr.bf16.mxu0 0
  %124 = vmatpush1.bf16.msra.mxu0 0
  %125 = vmatprep.mubr.bf16.mxu0 0
  %126 = vmatmul.mubr.bf16.gmra.mrb[0].mxu0 %v82
  %v127 = vpop.f32.mrb[0].mxu0
  %v128 = vadd.f32 %v46, %v127
  %v129 = vpop.f32.mrb[0].mxu0
  %v130 = vpop.f32.mrb[0].mxu0
  %v131 = vadd.f32 %v46, %v130
  %v132 = vpop.f32.mrb[0].mxu0
  %133 = vmatprep.mubr.bf16.mxu0 0
  %134 = vmatmul.mubr.bf16.gmra.mrb[0].mxu0 %v85
  %v135 = vpop.f32.mrb[0].mxu0
  %v136 = vadd.f32 %v46, %v135
  %v137 = vpop.f32.mrb[0].mxu0
  %v138 = vpop.f32.mrb[0].mxu0
  %v139 = vadd.f32 %v46, %v138
  %v140 = vpop.f32.mrb[0].mxu0
  %141 = vmatprep.mubr.bf16.mxu0 0
  %142 = vmatmul.mubr.bf16.gmra.mrb[0].mxu0 %v88
  %v143 = vpop.f32.mrb[0].mxu0
  %v144 = vadd.f32 %v46, %v143
  %v145 = vpop.f32.mrb[0].mxu0
  %v146 = vpop.f32.mrb[0].mxu0
  %v147 = vadd.f32 %v46, %v146
  %v148 = vpop.f32.mrb[0].mxu0
  %149 = vmatprep.mubr.bf16.mxu0 0
  %150 = vmatmul.mubr.bf16.gmra.mrb[0].mxu0 %v91
  %v151 = vpop.f32.mrb[0].mxu0
  %v152 = vadd.f32 %v46, %v151
  %v153 = vpop.f32.mrb[0].mxu0
  %v154 = vpop.f32.mrb[0].mxu0
  %v155 = vadd.f32 %v46, %v154
  %v156 = vpop.f32.mrb[0].mxu0
  %157 = vdwg.mxu0
  %v158 = vmax.f32 %v128, 0.0
  %v159 = vmax.f32 %v131, 0.0
  %v160 = vmax.f32 %v136, 0.0
  %v161 = vmax.f32 %v139, 0.0
  %v162 = vmax.f32 %v144, 0.0
  %v163 = vmax.f32 %v147, 0.0
  %v164 = vmax.f32 %v152, 0.0
  %v165 = vmax.f32 %v155, 0.0
  %v166 = vpack.c.bf16 %v159, %v158
  %v167 = vpack.c.bf16 %v161, %v160
  %v168 = vpack.c.bf16 %v163, %v162
  %v169 = vpack.c.bf16 %v165, %v164
  %s170 = scalar_lea.vmem %s3, 32
  %v171 = vld [vmem:[%s170] sm:$0xf]
  %v172 = vld [vmem:[%s170 + $0x4] sm:$0xf]
  %v173 = vld [vmem:[%s170 + $0x8] sm:$0xf]
  %v174 = vld [vmem:[%s170 + $0xc] sm:$0xf]
  %v175 = vld [vmem:[%s170 + $0x10] sm:$0xf]
  %v176 = vld [vmem:[%s170 + $0x14] sm:$0xf]
  %v177 = vld [vmem:[%s170 + $0x18] sm:$0xf]
  %v178 = vld [vmem:[%s170 + $0x1c] sm:$0xf]
  %s179 = scalar_lea.vmem %s6, 1
  %v180 = vld [vmem:[%s179] sm:$0x1]
  %v182 = vlaneseq
  %v183 = vshrl.u32 %v182, 7
  %v184 = vsub.s32 0, %v183
  %v185 = vrot.slane %v180, %v184
  %v195 = vunpack.c.l.b16 %v171
  %v196 = vunpack.c.l.b16 %v172
  %v197 = vunpack.c.l.b16 %v173
  %v198 = vunpack.c.l.b16 %v174
  %v199 = vunpack.c.l.b16 %v175
  %v200 = vunpack.c.l.b16 %v176
  %v201 = vunpack.c.l.b16 %v177
  %v202 = vunpack.c.l.b16 %v178
  %v203 = vpack.c.b16 %v196, %v195
  %v204 = vpack.c.b16 %v198, %v197
  %v205 = vpack.c.b16 %v200, %v199
  %v206 = vpack.c.b16 %v202, %v201
  %vm211 = vcmask 523264
  %v213 = vsel %vm211, %v166, 0
  %v216 = vsel %vm211, %v167, 0
  %v219 = vsel %vm211, %v168, 0
  %v222 = vsel %vm211, %v169, 0
  %224 = vmatprep.subr.bf16.mxu0 0
  %225 = vmatpush1.bf16.msra.mxu0 %v203
  %226 = vmatprep.subr.bf16.mxu0 0
  %227 = vmatpush1.bf16.msra.mxu0 %v204
  %228 = vmatprep.subr.bf16.mxu0 0
  %229 = vmatpush1.bf16.msra.mxu0 %v205
  %230 = vmatprep.subr.bf16.mxu0 0
  %231 = vmatpush1.bf16.msra.mxu0 %v206
  %232 = vmatprep.subr.bf16.mxu0 0
  %233 = vmatpush1.bf16.msra.mxu0 0
  %234 = vmatprep.subr.bf16.mxu0 0
  %235 = vmatpush1.bf16.msra.mxu0 0
  %236 = vmatprep.subr.bf16.mxu0 0
  %237 = vmatpush1.bf16.msra.mxu0 0
  %238 = vmatprep.subr.bf16.mxu0 0
  %239 = vmatpush1.bf16.msra.mxu0 0
  %240 = vmatprep.subr.bf16.mxu0 0
  %241 = vmatpush1.bf16.msra.mxu0 0
  %242 = vmatprep.subr.bf16.mxu0 0
  %243 = vmatpush1.bf16.msra.mxu0 0
  %244 = vmatprep.subr.bf16.mxu0 0
  %245 = vmatpush1.bf16.msra.mxu0 0
  %246 = vmatprep.subr.bf16.mxu0 0
  %247 = vmatpush1.bf16.msra.mxu0 0
  %248 = vmatprep.subr.bf16.mxu0 0
  %249 = vmatpush1.bf16.msra.mxu0 0
  %250 = vmatprep.subr.bf16.mxu0 0
  %251 = vmatpush1.bf16.msra.mxu0 0
  %252 = vmatprep.subr.bf16.mxu0 0
  %253 = vmatpush1.bf16.msra.mxu0 0
  %254 = vmatprep.subr.bf16.mxu0 0
  %255 = vmatpush1.bf16.msra.mxu0 0
  %256 = vmatprep.mubr.bf16.mxu0 0
  %257 = vmatmul.mubr.bf16.gmra.mrb[0].mxu0 %v213
  %v258 = vpop.f32.mrb[0].mxu0
  %v259 = vadd.f32 %v185, %v258
  %v260 = vpop.f32.mrb[0].mxu0
  %v261 = vpop.f32.mrb[0].mxu0
  %v262 = vadd.f32 %v185, %v261
  %v263 = vpop.f32.mrb[0].mxu0
  %264 = vmatprep.mubr.bf16.mxu0 0
  %265 = vmatmul.mubr.bf16.gmra.mrb[0].mxu0 %v216
  %v266 = vpop.f32.mrb[0].mxu0
  %v267 = vadd.f32 %v185, %v266
  %v268 = vpop.f32.mrb[0].mxu0
  %v269 = vpop.f32.mrb[0].mxu0
  %v270 = vadd.f32 %v185, %v269
  %v271 = vpop.f32.mrb[0].mxu0
  %272 = vmatprep.mubr.bf16.mxu0 0
  %273 = vmatmul.mubr.bf16.gmra.mrb[0].mxu0 %v219
  %v274 = vpop.f32.mrb[0].mxu0
  %v275 = vadd.f32 %v185, %v274
  %v276 = vpop.f32.mrb[0].mxu0
  %v277 = vpop.f32.mrb[0].mxu0
  %v278 = vadd.f32 %v185, %v277
  %v279 = vpop.f32.mrb[0].mxu0
  %280 = vmatprep.mubr.bf16.mxu0 0
  %281 = vmatmul.mubr.bf16.gmra.mrb[0].mxu0 %v222
  %v282 = vpop.f32.mrb[0].mxu0
  %v283 = vadd.f32 %v185, %v282
  %v284 = vpop.f32.mrb[0].mxu0
  %v285 = vpop.f32.mrb[0].mxu0
  %v286 = vadd.f32 %v185, %v285
  %v287 = vpop.f32.mrb[0].mxu0
  %288 = vdwg.mxu0
  %v289 = vmax.f32 %v259, 0.0
  %v290 = vmax.f32 %v262, 0.0
  %v291 = vmax.f32 %v267, 0.0
  %v292 = vmax.f32 %v270, 0.0
  %v293 = vmax.f32 %v275, 0.0
  %v294 = vmax.f32 %v278, 0.0
  %v295 = vmax.f32 %v283, 0.0
  %v296 = vmax.f32 %v286, 0.0
  %v297 = vpack.c.bf16 %v290, %v289
  %v298 = vpack.c.bf16 %v292, %v291
  %v299 = vpack.c.bf16 %v294, %v293
  %v300 = vpack.c.bf16 %v296, %v295
  %v301 = vld [vmem:[%s1] sm:$0xff]
  %s302 = scalar_lea.vmem %s1, 8
  %v303 = vld [vmem:[%s302] sm:$0xff]
  %v304 = vpack.c.bf16 %v301, %v301
  %s305 = scalar_lea.vmem %s3, 64
  %v306 = vld [vmem:[%s305] sm:$0xf]
  %v307 = vld [vmem:[%s305 + $0x4] sm:$0xf]
  %v308 = vld [vmem:[%s305 + $0x8] sm:$0xf]
  %v309 = vld [vmem:[%s305 + $0xc] sm:$0xf]
  %s310 = scalar_lea.vmem %s6, 2
  %v311 = vld [vmem:[%s310] sm:$0x1]
  %v313 = vlaneseq
  %v314 = vshrl.u32 %v313, 7
  %v315 = vsub.s32 0, %v314
  %v316 = vrot.slane %v311, %v315
  %v322 = vunpack.c.l.b16 %v306
  %v323 = vunpack.c.l.b16 %v307
  %v324 = vunpack.c.l.b16 %v308
  %v325 = vunpack.c.l.b16 %v309
  %v326 = vpack.c.b16 %v323, %v322
  %v327 = vpack.c.b16 %v325, %v324
  %v331 = vsel %vm80, %v304, 0
  %333 = vmatprep.subr.bf16.mxu0 0
  %334 = vmatpush1.bf16.msra.mxu0 %v326
  %335 = vmatprep.subr.bf16.mxu0 0
  %336 = vmatpush1.bf16.msra.mxu0 %v327
  %337 = vmatprep.subr.bf16.mxu0 0
  %338 = vmatpush1.bf16.msra.mxu0 0
  %339 = vmatprep.subr.bf16.mxu0 0
  %340 = vmatpush1.bf16.msra.mxu0 0
  %341 = vmatprep.subr.bf16.mxu0 0
  %342 = vmatpush1.bf16.msra.mxu0 0
  %343 = vmatprep.subr.bf16.mxu0 0
  %344 = vmatpush1.bf16.msra.mxu0 0
  %345 = vmatprep.subr.bf16.mxu0 0
  %346 = vmatpush1.bf16.msra.mxu0 0
  %347 = vmatprep.subr.bf16.mxu0 0
  %348 = vmatpush1.bf16.msra.mxu0 0
  %349 = vmatprep.subr.bf16.mxu0 0
  %350 = vmatpush1.bf16.msra.mxu0 0
  %351 = vmatprep.subr.bf16.mxu0 0
  %352 = vmatpush1.bf16.msra.mxu0 0
  %353 = vmatprep.subr.bf16.mxu0 0
  %354 = vmatpush1.bf16.msra.mxu0 0
  %355 = vmatprep.subr.bf16.mxu0 0
  %356 = vmatpush1.bf16.msra.mxu0 0
  %357 = vmatprep.subr.bf16.mxu0 0
  %358 = vmatpush1.bf16.msra.mxu0 0
  %359 = vmatprep.subr.bf16.mxu0 0
  %360 = vmatpush1.bf16.msra.mxu0 0
  %361 = vmatprep.subr.bf16.mxu0 0
  %362 = vmatpush1.bf16.msra.mxu0 0
  %363 = vmatprep.subr.bf16.mxu0 0
  %364 = vmatpush1.bf16.msra.mxu0 0
  %365 = vmatprep.mubr.bf16.mxu0 0
  %366 = vmatmul.mubr.bf16.gmra.mrb[0].mxu0 %v331
  %v367 = vpop.f32.mrb[0].mxu0
  %v368 = vadd.f32 %v316, %v367
  %v369 = vpop.f32.mrb[0].mxu0
  %v370 = vpop.f32.mrb[0].mxu0
  %v371 = vpop.f32.mrb[0].mxu0
  %372 = vdwg.mxu0
  %v373 = vmul.f32 %v368, 0.17677669
  %s374 = scalar_lea.vmem %s3, 96
  %v375 = vld [vmem:[%s374] sm:$0xf]
  %v376 = vld [vmem:[%s374 + $0x4] sm:$0xf]
  %v377 = vld [vmem:[%s374 + $0x8] sm:$0xf]
  %v378 = vld [vmem:[%s374 + $0xc] sm:$0xf]
  %s379 = scalar_lea.vmem %s6, 3
  %v380 = vld [vmem:[%s379] sm:$0x1]
  %v382 = vlaneseq
  %v383 = vshrl.u32 %v382, 7
  %v384 = vsub.s32 0, %v383
  %v385 = vrot.slane %v380, %v384
  %v391 = vunpack.c.l.b16 %v375
  %v392 = vunpack.c.l.b16 %v376
  %v393 = vunpack.c.l.b16 %v377
  %v394 = vunpack.c.l.b16 %v378
  %v395 = vpack.c.b16 %v392, %v391
  %v396 = vpack.c.b16 %v394, %v393
  %v400 = vsel %vm80, %v297, 0
  %v403 = vsel %vm80, %v298, 0
  %v406 = vsel %vm80, %v299, 0
  %v409 = vsel %vm80, %v300, 0
  %411 = vmatprep.subr.bf16.mxu0 0
  %412 = vmatpush1.bf16.msra.mxu0 %v395
  %413 = vmatprep.subr.bf16.mxu0 0
  %414 = vmatpush1.bf16.msra.mxu0 %v396
  %415 = vmatprep.subr.bf16.mxu0 0
  %416 = vmatpush1.bf16.msra.mxu0 0
  %417 = vmatprep.subr.bf16.mxu0 0
  %418 = vmatpush1.bf16.msra.mxu0 0
  %419 = vmatprep.subr.bf16.mxu0 0
  %420 = vmatpush1.bf16.msra.mxu0 0
  %421 = vmatprep.subr.bf16.mxu0 0
  %422 = vmatpush1.bf16.msra.mxu0 0
  %423 = vmatprep.subr.bf16.mxu0 0
  %424 = vmatpush1.bf16.msra.mxu0 0
  %425 = vmatprep.subr.bf16.mxu0 0
  %426 = vmatpush1.bf16.msra.mxu0 0
  %427 = vmatprep.subr.bf16.mxu0 0
  %428 = vmatpush1.bf16.msra.mxu0 0
  %429 = vmatprep.subr.bf16.mxu0 0
  %430 = vmatpush1.bf16.msra.mxu0 0
  %431 = vmatprep.subr.bf16.mxu0 0
  %432 = vmatpush1.bf16.msra.mxu0 0
  %433 = vmatprep.subr.bf16.mxu0 0
  %434 = vmatpush1.bf16.msra.mxu0 0
  %435 = vmatprep.subr.bf16.mxu0 0
  %436 = vmatpush1.bf16.msra.mxu0 0
  %437 = vmatprep.subr.bf16.mxu0 0
  %438 = vmatpush1.bf16.msra.mxu0 0
  %439 = vmatprep.subr.bf16.mxu0 0
  %440 = vmatpush1.bf16.msra.mxu0 0
  %441 = vmatprep.subr.bf16.mxu0 0
  %442 = vmatpush1.bf16.msra.mxu0 0
  %443 = vmatprep.mubr.bf16.mxu0 0
  %444 = vmatmul.mubr.bf16.gmra.mrb[0].mxu0 %v400
  %v445 = vpop.f32.mrb[0].mxu0
  %v446 = vadd.f32 %v385, %v445
  %v447 = vpop.f32.mrb[0].mxu0
  %v448 = vpop.f32.mrb[0].mxu0
  %v449 = vadd.f32 %v385, %v448
  %v450 = vpop.f32.mrb[0].mxu0
  %451 = vmatprep.mubr.bf16.mxu0 0
  %452 = vmatmul.mubr.bf16.gmra.mrb[0].mxu0 %v403
  %v453 = vpop.f32.mrb[0].mxu0
  %v454 = vadd.f32 %v385, %v453
  %v455 = vpop.f32.mrb[0].mxu0
  %v456 = vpop.f32.mrb[0].mxu0
  %v457 = vadd.f32 %v385, %v456
  %v458 = vpop.f32.mrb[0].mxu0
  %459 = vmatprep.mubr.bf16.mxu0 0
  %460 = vmatmul.mubr.bf16.gmra.mrb[0].mxu0 %v406
  %v461 = vpop.f32.mrb[0].mxu0
  %v462 = vadd.f32 %v385, %v461
  %v463 = vpop.f32.mrb[0].mxu0
  %v464 = vpop.f32.mrb[0].mxu0
  %v465 = vadd.f32 %v385, %v464
  %v466 = vpop.f32.mrb[0].mxu0
  %467 = vmatprep.mubr.bf16.mxu0 0
  %468 = vmatmul.mubr.bf16.gmra.mrb[0].mxu0 %v409
  %v469 = vpop.f32.mrb[0].mxu0
  %v470 = vadd.f32 %v385, %v469
  %v471 = vpop.f32.mrb[0].mxu0
  %v472 = vpop.f32.mrb[0].mxu0
  %v473 = vadd.f32 %v385, %v472
  %v474 = vpop.f32.mrb[0].mxu0
  %475 = vdwg.mxu0
  %s476 = scalar_lea.vmem %s3, 128
  %v477 = vld [vmem:[%s476] sm:$0xf]
  %v478 = vld [vmem:[%s476 + $0x4] sm:$0xf]
  %v479 = vld [vmem:[%s476 + $0x8] sm:$0xf]
  %v480 = vld [vmem:[%s476 + $0xc] sm:$0xf]
  %s481 = scalar_lea.vmem %s6, 4
  %v482 = vld [vmem:[%s481] sm:$0x1]
  %v484 = vlaneseq
  %v485 = vshrl.u32 %v484, 7
  %v486 = vsub.s32 0, %v485
  %v487 = vrot.slane %v482, %v486
  %v493 = vunpack.c.l.b16 %v477
  %v494 = vunpack.c.l.b16 %v478
  %v495 = vunpack.c.l.b16 %v479
  %v496 = vunpack.c.l.b16 %v480
  %v497 = vpack.c.b16 %v494, %v493
  %v498 = vpack.c.b16 %v496, %v495
  %501 = vmatprep.subr.bf16.mxu0 0
  %502 = vmatpush1.bf16.msra.mxu0 %v497
  %503 = vmatprep.subr.bf16.mxu0 0
  %504 = vmatpush1.bf16.msra.mxu0 %v498
  %505 = vmatprep.subr.bf16.mxu0 0
  %506 = vmatpush1.bf16.msra.mxu0 0
  %507 = vmatprep.subr.bf16.mxu0 0
  %508 = vmatpush1.bf16.msra.mxu0 0
  %509 = vmatprep.subr.bf16.mxu0 0
  %510 = vmatpush1.bf16.msra.mxu0 0
  %511 = vmatprep.subr.bf16.mxu0 0
  %512 = vmatpush1.bf16.msra.mxu0 0
  %513 = vmatprep.subr.bf16.mxu0 0
  %514 = vmatpush1.bf16.msra.mxu0 0
  %515 = vmatprep.subr.bf16.mxu0 0
  %516 = vmatpush1.bf16.msra.mxu0 0
  %517 = vmatprep.subr.bf16.mxu0 0
  %518 = vmatpush1.bf16.msra.mxu0 0
  %519 = vmatprep.subr.bf16.mxu0 0
  %520 = vmatpush1.bf16.msra.mxu0 0
  %521 = vmatprep.subr.bf16.mxu0 0
  %522 = vmatpush1.bf16.msra.mxu0 0
  %523 = vmatprep.subr.bf16.mxu0 0
  %524 = vmatpush1.bf16.msra.mxu0 0
  %525 = vmatprep.subr.bf16.mxu0 0
  %526 = vmatpush1.bf16.msra.mxu0 0
  %527 = vmatprep.subr.bf16.mxu0 0
  %528 = vmatpush1.bf16.msra.mxu0 0
  %529 = vmatprep.subr.bf16.mxu0 0
  %530 = vmatpush1.bf16.msra.mxu0 0
  %531 = vmatprep.subr.bf16.mxu0 0
  %532 = vmatpush1.bf16.msra.mxu0 0
  %533 = vmatprep.mubr.bf16.mxu0 0
  %534 = vmatmul.mubr.bf16.gmra.mrb[0].mxu0 %v400
  %v535 = vpop.f32.mrb[0].mxu0
  %v536 = vadd.f32 %v487, %v535
  %v537 = vpop.f32.mrb[0].mxu0
  %v538 = vpop.f32.mrb[0].mxu0
  %v539 = vadd.f32 %v487, %v538
  %v540 = vpop.f32.mrb[0].mxu0
  %541 = vmatprep.mubr.bf16.mxu0 0
  %542 = vmatmul.mubr.bf16.gmra.mrb[0].mxu0 %v403
  %v543 = vpop.f32.mrb[0].mxu0
  %v544 = vadd.f32 %v487, %v543
  %v545 = vpop.f32.mrb[0].mxu0
  %v546 = vpop.f32.mrb[0].mxu0
  %v547 = vadd.f32 %v487, %v546
  %v548 = vpop.f32.mrb[0].mxu0
  %549 = vmatprep.mubr.bf16.mxu0 0
  %550 = vmatmul.mubr.bf16.gmra.mrb[0].mxu0 %v406
  %v551 = vpop.f32.mrb[0].mxu0
  %v552 = vadd.f32 %v487, %v551
  %v553 = vpop.f32.mrb[0].mxu0
  %v554 = vpop.f32.mrb[0].mxu0
  %v555 = vadd.f32 %v487, %v554
  %v556 = vpop.f32.mrb[0].mxu0
  %557 = vmatprep.mubr.bf16.mxu0 0
  %558 = vmatmul.mubr.bf16.gmra.mrb[0].mxu0 %v409
  %v559 = vpop.f32.mrb[0].mxu0
  %v560 = vadd.f32 %v487, %v559
  %v561 = vpop.f32.mrb[0].mxu0
  %v562 = vpop.f32.mrb[0].mxu0
  %v563 = vadd.f32 %v487, %v562
  %v564 = vpop.f32.mrb[0].mxu0
  %565 = vdwg.mxu0
  %v567 = vcombine.high %v373, %v373
  %v569 = vunpack.c.l.s4 1966171168
  %v570 = vunpack.c.0.s8 %v569
  %v571 = vlaneseq
  %v572 = vshrl.u32 %v571, 7
  %v573 = vsub.s32 %v570, %v572
  %v574 = vrot.slane %v373, %v573
  %v576 = vunpack.c.l.s4 1966171168
  %v577 = vunpack.c.0.s8 %v576
  %v578 = vlaneseq
  %v579 = vshrl.u32 %v578, 7
  %v580 = vsub.s32 %v577, %v579
  %v581 = vrot.slane %v567, %v580
  %v582 = vcombine.high %v574, %v574
  %v583 = vcombine.high %v581, %v581
  %v585 = vunpack.c.l.s4 1966171168
  %v586 = vunpack.c.0.s8 %v585
  %v587 = vlaneseq
  %v588 = vshrl.u32 %v587, 7
  %v589 = vsub.s32 %v586, %v588
  %v590 = vrot.slane %v574, %v589
  %v592 = vunpack.c.l.s4 1966171168
  %v593 = vunpack.c.0.s8 %v592
  %v594 = vlaneseq
  %v595 = vshrl.u32 %v594, 7
  %v596 = vsub.s32 %v593, %v595
  %v597 = vrot.slane %v581, %v596
  %v599 = vunpack.c.l.s4 1966171168
  %v600 = vunpack.c.0.s8 %v599
  %v601 = vlaneseq
  %v602 = vshrl.u32 %v601, 7
  %v603 = vsub.s32 %v600, %v602
  %v604 = vrot.slane %v582, %v603
  %v606 = vunpack.c.l.s4 1966171168
  %v607 = vunpack.c.0.s8 %v606
  %v608 = vlaneseq
  %v609 = vshrl.u32 %v608, 7
  %v610 = vsub.s32 %v607, %v609
  %v611 = vrot.slane %v583, %v610
  %v612 = vcombine.high %v590, %v590
  %v613 = vcombine.high %v597, %v597
  %v614 = vcombine.high %v604, %v604
  %v615 = vcombine.high %v611, %v611
  %v616 = vlaneseq
  %v617 = vshrl.u32 %v616, 7
  %v618 = vsub.s32 0, %v617
  %v619 = vrot.slane %v590, %v618
  %v620 = vlaneseq
  %v621 = vshrl.u32 %v620, 7
  %v622 = vsub.s32 0, %v621
  %v623 = vrot.slane %v604, %v622
  %v624 = vlaneseq
  %v625 = vshrl.u32 %v624, 7
  %v626 = vsub.s32 0, %v625
  %v627 = vrot.slane %v612, %v626
  %v628 = vlaneseq
  %v629 = vshrl.u32 %v628, 7
  %v630 = vsub.s32 0, %v629
  %v631 = vrot.slane %v614, %v630
  %v632 = vlaneseq
  %v633 = vshrl.u32 %v632, 7
  %v634 = vsub.s32 0, %v633
  %v635 = vrot.slane %v597, %v634
  %v636 = vlaneseq
  %v637 = vshrl.u32 %v636, 7
  %v638 = vsub.s32 0, %v637
  %v639 = vrot.slane %v611, %v638
  %v640 = vlaneseq
  %v641 = vshrl.u32 %v640, 7
  %v642 = vsub.s32 0, %v641
  %v643 = vrot.slane %v613, %v642
  %v644 = vlaneseq
  %v645 = vshrl.u32 %v644, 7
  %v646 = vsub.s32 0, %v645
  %v647 = vrot.slane %v615, %v646
  %v656 = vmul.f32 %v619, %v446
  %v657 = vmul.f32 %v623, %v449
  %v658 = vmul.f32 %v627, %v454
  %v659 = vmul.f32 %v631, %v457
  %v660 = vmul.f32 %v635, %v462
  %v661 = vmul.f32 %v639, %v465
  %v662 = vmul.f32 %v643, %v470
  %v663 = vmul.f32 %v647, %v473
  %v664 = vsel %vm80, %v656, 0.0
  %665 = vadd.xlane.f32.xlu0 %v664
  %v666 = vpop.xlane.xlu0 %665
  %v667 = vsel %vm80, %v657, 0.0
  %668 = vadd.xlane.f32.xlu0 %v667
  %v669 = vpop.xlane.xlu0 %668
  %v670 = vsel %vm80, %v658, 0.0
  %671 = vadd.xlane.f32.xlu0 %v670
  %v672 = vpop.xlane.xlu0 %671
  %v673 = vsel %vm80, %v659, 0.0
  %674 = vadd.xlane.f32.xlu0 %v673
  %v675 = vpop.xlane.xlu0 %674
  %v676 = vsel %vm80, %v660, 0.0
  %677 = vadd.xlane.f32.xlu0 %v676
  %v678 = vpop.xlane.xlu0 %677
  %v679 = vsel %vm80, %v661, 0.0
  %680 = vadd.xlane.f32.xlu0 %v679
  %v681 = vpop.xlane.xlu0 %680
  %v682 = vsel %vm80, %v662, 0.0
  %683 = vadd.xlane.f32.xlu0 %v682
  %v684 = vpop.xlane.xlu0 %683
  %v685 = vsel %vm80, %v663, 0.0
  %686 = vadd.xlane.f32.xlu0 %v685
  %v687 = vpop.xlane.xlu0 %686
  %v688 = vlaneseq
  %v689 = vand.u32 %v688, 127
  %vm690 = vcmp.lt.s32.totalorder %v689, 6
  %v699 = vlaneseq
  %v700 = vshrl.u32 %v699, 7
  %v701 = vsub.s32 %v689, %v700
  %v702 = vrot.slane %v666, %v701
  %v703 = vlaneseq
  %v704 = vshrl.u32 %v703, 7
  %v705 = vsub.s32 %v689, %v704
  %v706 = vrot.slane %v669, %v705
  %v707 = vlaneseq
  %v708 = vshrl.u32 %v707, 7
  %v709 = vsub.s32 %v689, %v708
  %v710 = vrot.slane %v672, %v709
  %v711 = vlaneseq
  %v712 = vshrl.u32 %v711, 7
  %v713 = vsub.s32 %v689, %v712
  %v714 = vrot.slane %v675, %v713
  %v715 = vlaneseq
  %v716 = vshrl.u32 %v715, 7
  %v717 = vsub.s32 %v689, %v716
  %v718 = vrot.slane %v678, %v717
  %v719 = vlaneseq
  %v720 = vshrl.u32 %v719, 7
  %v721 = vsub.s32 %v689, %v720
  %v722 = vrot.slane %v681, %v721
  %v723 = vlaneseq
  %v724 = vshrl.u32 %v723, 7
  %v725 = vsub.s32 %v689, %v724
  %v726 = vrot.slane %v684, %v725
  %v727 = vlaneseq
  %v728 = vshrl.u32 %v727, 7
  %v729 = vsub.s32 %v689, %v728
  %v730 = vrot.slane %v687, %v729
  %vm731 = vcmask 1041409
  %v732 = vsel %vm731, %v706, %v702
  %vm733 = vcmask 1042434
  %v734 = vsel %vm733, %v710, %v732
  %vm735 = vcmask 1043459
  %v736 = vsel %vm735, %v714, %v734
  %vm737 = vcmask 1044484
  %v738 = vsel %vm737, %v718, %v736
  %vm739 = vcmask 1045509
  %v740 = vsel %vm739, %v722, %v738
  %vm741 = vcmask 1046534
  %v742 = vsel %vm741, %v726, %v740
  %vm743 = vcmask 1047559
  %v744 = vsel %vm743, %v730, %v742
  %v746 = vsel %vm690, %v744, -1e+30
  %vm747 = vcmask 64512
  %v748 = vsel %vm747, %v746, -inf
  %749 = vmax.xlane.f32.xlu0 %v748
  %v750 = vpop.xlane.xlu0 %749
  %v751 = vsub.f32 %v746, %v750
  %v752 = vmul.f32 %v751, 1.442695
  %v753 = vpow.pop %v752
  %v754 = vsel %vm747, %v753, 0.0
  %755 = vadd.xlane.f32.xlu0 %v754
  %v756 = vpop.xlane.xlu0 %755
  %v757 = vrcp.pop %v756
  %v758 = vmul.f32 %v753, %v757
  %v759 = vlaneseq
  %v760 = vshrl.u32 %v759, 7
  %v761 = vsub.s32 0, %v760
  %v762 = vrot.slane %v758, %v761
  %764 = vbcast.lane.b32.xlu0 %v762, 256
  %v765 = vpop.permute.xlu0 %764
  %v766 = vlaneseq
  %v767 = vshrl.u32 %v766, 7
  %v768 = vsub.s32 1, %v767
  %v769 = vrot.slane %v758, %v768
  %771 = vbcast.lane.b32.xlu0 %v769, 256
  %v772 = vpop.permute.xlu0 %771
  %v773 = vlaneseq
  %v774 = vshrl.u32 %v773, 7
  %v775 = vsub.s32 2, %v774
  %v776 = vrot.slane %v758, %v775
  %778 = vbcast.lane.b32.xlu0 %v776, 256
  %v779 = vpop.permute.xlu0 %778
  %v780 = vlaneseq
  %v781 = vshrl.u32 %v780, 7
  %v782 = vsub.s32 3, %v781
  %v783 = vrot.slane %v758, %v782
  %785 = vbcast.lane.b32.xlu0 %v783, 256
  %v786 = vpop.permute.xlu0 %785
  %v787 = vlaneseq
  %v788 = vshrl.u32 %v787, 7
  %v789 = vsub.s32 4, %v788
  %v790 = vrot.slane %v758, %v789
  %792 = vbcast.lane.b32.xlu0 %v790, 256
  %v793 = vpop.permute.xlu0 %792
  %v794 = vlaneseq
  %v795 = vshrl.u32 %v794, 7
  %v796 = vsub.s32 5, %v795
  %v797 = vrot.slane %v758, %v796
  %799 = vbcast.lane.b32.xlu0 %v797, 256
  %v800 = vpop.permute.xlu0 %799
  %v801 = vlaneseq
  %v802 = vshrl.u32 %v801, 7
  %v803 = vsub.s32 6, %v802
  %v804 = vrot.slane %v758, %v803
  %806 = vbcast.lane.b32.xlu0 %v804, 256
  %v807 = vpop.permute.xlu0 %806
  %v808 = vlaneseq
  %v809 = vshrl.u32 %v808, 7
  %v810 = vsub.s32 7, %v809
  %v811 = vrot.slane %v758, %v810
  %813 = vbcast.lane.b32.xlu0 %v811, 256
  %v814 = vpop.permute.xlu0 %813
  %v815 = vmul.f32 %v765, %v536
  %v816 = vmul.f32 %v772, %v539
  %v817 = vmul.f32 %v779, %v544
  %v818 = vmul.f32 %v786, %v547
  %v819 = vmul.f32 %v793, %v552
  %v820 = vmul.f32 %v800, %v555
  %v821 = vmul.f32 %v807, %v560
  %v822 = vmul.f32 %v814, %v563
  %v823 = vsel %vm80, %v815, 0.0
  %v824 = vrot.slane %v823, 4
  %v825 = vadd.f32 %v823, %v824
  %v826 = vrot.slane %v825, 2
  %v827 = vadd.f32 %v825, %v826
  %v828 = vrot.slane %v827, 1
  %v829 = vadd.f32 %v827, %v828
  %v830 = vsel %vm80, %v816, 0.0
  %v831 = vrot.slane %v830, 4
  %v832 = vadd.f32 %v830, %v831
  %v833 = vrot.slane %v832, 2
  %v834 = vadd.f32 %v832, %v833
  %v835 = vrot.slane %v834, 1
  %v836 = vadd.f32 %v834, %v835
  %v837 = vsel %vm80, %v817, 0.0
  %v838 = vrot.slane %v837, 4
  %v839 = vadd.f32 %v837, %v838
  %v840 = vrot.slane %v839, 2
  %v841 = vadd.f32 %v839, %v840
  %v842 = vrot.slane %v841, 1
  %v843 = vadd.f32 %v841, %v842
  %v844 = vsel %vm80, %v818, 0.0
  %v845 = vrot.slane %v844, 4
  %v846 = vadd.f32 %v844, %v845
  %v847 = vrot.slane %v846, 2
  %v848 = vadd.f32 %v846, %v847
  %v849 = vrot.slane %v848, 1
  %v850 = vadd.f32 %v848, %v849
  %v851 = vsel %vm80, %v819, 0.0
  %v852 = vrot.slane %v851, 4
  %v853 = vadd.f32 %v851, %v852
  %v854 = vrot.slane %v853, 2
  %v855 = vadd.f32 %v853, %v854
  %v856 = vrot.slane %v855, 1
  %v857 = vadd.f32 %v855, %v856
  %v858 = vsel %vm80, %v820, 0.0
  %v859 = vrot.slane %v858, 4
  %v860 = vadd.f32 %v858, %v859
  %v861 = vrot.slane %v860, 2
  %v862 = vadd.f32 %v860, %v861
  %v863 = vrot.slane %v862, 1
  %v864 = vadd.f32 %v862, %v863
  %v865 = vsel %vm80, %v821, 0.0
  %v866 = vrot.slane %v865, 4
  %v867 = vadd.f32 %v865, %v866
  %v868 = vrot.slane %v867, 2
  %v869 = vadd.f32 %v867, %v868
  %v870 = vrot.slane %v869, 1
  %v871 = vadd.f32 %v869, %v870
  %v872 = vsel %vm80, %v822, 0.0
  %v873 = vrot.slane %v872, 4
  %v874 = vadd.f32 %v872, %v873
  %v875 = vrot.slane %v874, 2
  %v876 = vadd.f32 %v874, %v875
  %v877 = vrot.slane %v876, 1
  %v878 = vadd.f32 %v876, %v877
  %v879 = vpack.c.bf16 %v829, %v829
  %v880 = vpack.c.bf16 %v836, %v836
  %v881 = vpack.c.bf16 %v843, %v843
  %v882 = vpack.c.bf16 %v850, %v850
  %v883 = vpack.c.bf16 %v857, %v857
  %v884 = vpack.c.bf16 %v864, %v864
  %v885 = vpack.c.bf16 %v871, %v871
  %v886 = vpack.c.bf16 %v878, %v878
  %s887 = scalar_lea.vmem %s3, 160
  %v888 = vld [vmem:[%s887] sm:$0xf]
  %v889 = vld [vmem:[%s887 + $0x4] sm:$0xf]
  %v890 = vld [vmem:[%s887 + $0x8] sm:$0xf]
  %v891 = vld [vmem:[%s887 + $0xc] sm:$0xf]
  %s892 = scalar_lea.vmem %s6, 5
  %v893 = vld [vmem:[%s892] sm:$0x1]
  %v895 = vlaneseq
  %v896 = vshrl.u32 %v895, 7
  %v897 = vsub.s32 0, %v896
  %v898 = vrot.slane %v893, %v897
  %v908 = vunpack.c.l.b16 %v879
  %v909 = vunpack.c.l.b16 %v880
  %v910 = vunpack.c.l.b16 %v881
  %v911 = vunpack.c.l.b16 %v882
  %v912 = vunpack.c.l.b16 %v883
  %v913 = vunpack.c.l.b16 %v884
  %v914 = vunpack.c.l.b16 %v885
  %v915 = vunpack.c.l.b16 %v886
  %v916 = vsel %vm731, %v909, %v908
  %v917 = vsel %vm733, %v910, %v916
  %v918 = vsel %vm735, %v911, %v917
  %v919 = vsel %vm737, %v912, %v918
  %v920 = vsel %vm739, %v913, %v919
  %v921 = vsel %vm741, %v914, %v920
  %v922 = vsel %vm743, %v915, %v921
  %v923 = vpack.c.b16 %v922, %v922
  %v928 = vunpack.c.l.b16 %v888
  %v929 = vunpack.c.l.b16 %v889
  %v930 = vunpack.c.l.b16 %v890
  %v931 = vunpack.c.l.b16 %v891
  %v932 = vpack.c.b16 %v929, %v928
  %v933 = vpack.c.b16 %v931, %v930
  %v937 = vsel %vm80, %v923, 0
  %939 = vmatprep.subr.bf16.mxu0 0
  %940 = vmatpush1.bf16.msra.mxu0 %v932
  %941 = vmatprep.subr.bf16.mxu0 0
  %942 = vmatpush1.bf16.msra.mxu0 %v933
  %943 = vmatprep.subr.bf16.mxu0 0
  %944 = vmatpush1.bf16.msra.mxu0 0
  %945 = vmatprep.subr.bf16.mxu0 0
  %946 = vmatpush1.bf16.msra.mxu0 0
  %947 = vmatprep.subr.bf16.mxu0 0
  %948 = vmatpush1.bf16.msra.mxu0 0
  %949 = vmatprep.subr.bf16.mxu0 0
  %950 = vmatpush1.bf16.msra.mxu0 0
  %951 = vmatprep.subr.bf16.mxu0 0
  %952 = vmatpush1.bf16.msra.mxu0 0
  %953 = vmatprep.subr.bf16.mxu0 0
  %954 = vmatpush1.bf16.msra.mxu0 0
  %955 = vmatprep.subr.bf16.mxu0 0
  %956 = vmatpush1.bf16.msra.mxu0 0
  %957 = vmatprep.subr.bf16.mxu0 0
  %958 = vmatpush1.bf16.msra.mxu0 0
  %959 = vmatprep.subr.bf16.mxu0 0
  %960 = vmatpush1.bf16.msra.mxu0 0
  %961 = vmatprep.subr.bf16.mxu0 0
  %962 = vmatpush1.bf16.msra.mxu0 0
  %963 = vmatprep.subr.bf16.mxu0 0
  %964 = vmatpush1.bf16.msra.mxu0 0
  %965 = vmatprep.subr.bf16.mxu0 0
  %966 = vmatpush1.bf16.msra.mxu0 0
  %967 = vmatprep.subr.bf16.mxu0 0
  %968 = vmatpush1.bf16.msra.mxu0 0
  %969 = vmatprep.subr.bf16.mxu0 0
  %970 = vmatpush1.bf16.msra.mxu0 0
  %971 = vmatprep.mubr.bf16.mxu0 0
  %972 = vmatmul.mubr.bf16.gmra.mrb[0].mxu0 %v937
  %v973 = vpop.f32.mrb[0].mxu0
  %v974 = vadd.f32 %v898, %v973
  %v975 = vpop.f32.mrb[0].mxu0
  %v976 = vpop.f32.mrb[0].mxu0
  %v977 = vpop.f32.mrb[0].mxu0
  %978 = vdwg.mxu0
  %v979 = vpack.c.bf16 %v974, %v974
  %v980 = vld [vmem:[%s0] sm:$0xff]
  %v981 = vlaneseq
  %v982 = vshrl.u32 %v981, 7
  %v983 = vsub.s32 0, %v982
  %v984 = vrot.slane %v980, %v983
  %986 = vbcast.lane.b32.xlu0 %v984, 256
  %v987 = vpop.permute.xlu0 %986
  %v988 = vlaneseq
  %v989 = vshrl.u32 %v988, 7
  %v990 = vsub.s32 1, %v989
  %v991 = vrot.slane %v980, %v990
  %993 = vbcast.lane.b32.xlu0 %v991, 256
  %v994 = vpop.permute.xlu0 %993
  %v995 = vlaneseq
  %v996 = vshrl.u32 %v995, 7
  %v997 = vsub.s32 2, %v996
  %v998 = vrot.slane %v980, %v997
  %1000 = vbcast.lane.b32.xlu0 %v998, 256
  %v1001 = vpop.permute.xlu0 %1000
  %v1002 = vlaneseq
  %v1003 = vshrl.u32 %v1002, 7
  %v1004 = vsub.s32 3, %v1003
  %v1005 = vrot.slane %v980, %v1004
  %1007 = vbcast.lane.b32.xlu0 %v1005, 256
  %v1008 = vpop.permute.xlu0 %1007
  %v1009 = vlaneseq
  %v1010 = vshrl.u32 %v1009, 7
  %v1011 = vsub.s32 4, %v1010
  %v1012 = vrot.slane %v980, %v1011
  %1014 = vbcast.lane.b32.xlu0 %v1012, 256
  %v1015 = vpop.permute.xlu0 %1014
  %v1016 = vlaneseq
  %v1017 = vshrl.u32 %v1016, 7
  %v1018 = vsub.s32 5, %v1017
  %v1019 = vrot.slane %v980, %v1018
  %1021 = vbcast.lane.b32.xlu0 %v1019, 256
  %v1022 = vpop.permute.xlu0 %1021
  %v1023 = vlaneseq
  %v1024 = vshrl.u32 %v1023, 7
  %v1025 = vsub.s32 6, %v1024
  %v1026 = vrot.slane %v980, %v1025
  %1028 = vbcast.lane.b32.xlu0 %v1026, 256
  %v1029 = vpop.permute.xlu0 %1028
  %v1030 = vlaneseq
  %v1031 = vshrl.u32 %v1030, 7
  %v1032 = vsub.s32 7, %v1031
  %v1033 = vrot.slane %v980, %v1032
  %1035 = vbcast.lane.b32.xlu0 %v1033, 256
  %v1036 = vpop.permute.xlu0 %1035
  %vm1037 = vcmp.eq.s32.totalorder %v689, %v987
  %vm1038 = vcmp.eq.s32.totalorder %v689, %v994
  %vm1039 = vcmp.eq.s32.totalorder %v689, %v1001
  %vm1040 = vcmp.eq.s32.totalorder %v689, %v1008
  %vm1041 = vcmp.eq.s32.totalorder %v689, %v1015
  %vm1042 = vcmp.eq.s32.totalorder %v689, %v1022
  %vm1043 = vcmp.eq.s32.totalorder %v689, %v1029
  %vm1044 = vcmp.eq.s32.totalorder %v689, %v1036
  %v1045 = vsel %vm1037, 1.0, 0.0
  %v1046 = vsel %vm1038, 1.0, 0.0
  %v1047 = vsel %vm1039, 1.0, 0.0
  %v1048 = vsel %vm1040, 1.0, 0.0
  %v1049 = vsel %vm1041, 1.0, 0.0
  %v1050 = vsel %vm1042, 1.0, 0.0
  %v1051 = vsel %vm1043, 1.0, 0.0
  %v1052 = vsel %vm1044, 1.0, 0.0
  %v1053 = vpack.c.bf16 %v1045, %v1045
  %v1054 = vpack.c.bf16 %v1046, %v1046
  %v1055 = vpack.c.bf16 %v1047, %v1047
  %v1056 = vpack.c.bf16 %v1048, %v1048
  %v1057 = vpack.c.bf16 %v1049, %v1049
  %v1058 = vpack.c.bf16 %v1050, %v1050
  %v1059 = vpack.c.bf16 %v1051, %v1051
  %v1060 = vpack.c.bf16 %v1052, %v1052
  %v1061 = vld [vmem:[%s4] sm:$0xf]
  %v1062 = vld [vmem:[%s4 + $0x4] sm:$0xf]
  %v1063 = vld [vmem:[%s4 + $0x8] sm:$0xf]
  %v1064 = vld [vmem:[%s4 + $0xc] sm:$0xf]
  %v1065 = vld [vmem:[%s4 + $0x10] sm:$0xf]
  %v1066 = vld [vmem:[%s4 + $0x14] sm:$0xf]
  %v1067 = vld [vmem:[%s4 + $0x18] sm:$0xf]
  %v1068 = vld [vmem:[%s4 + $0x1c] sm:$0xf]
  %v1069 = vld [vmem:[%s4 + $0x20] sm:$0xf]
  %v1070 = vld [vmem:[%s4 + $0x24] sm:$0xf]
  %v1071 = vld [vmem:[%s4 + $0x28] sm:$0xf]
  %v1072 = vld [vmem:[%s4 + $0x2c] sm:$0xf]
  %v1073 = vld [vmem:[%s4 + $0x30] sm:$0xf]
  %v1074 = vld [vmem:[%s4 + $0x34] sm:$0xf]
  %v1075 = vld [vmem:[%s4 + $0x38] sm:$0xf]
  %v1076 = vld [vmem:[%s4 + $0x3c] sm:$0xf]
  %v1085 = vunpack.c.l.b16 %v1053
  %v1086 = vunpack.c.l.b16 %v1054
  %v1087 = vunpack.c.l.b16 %v1055
  %v1088 = vunpack.c.l.b16 %v1056
  %v1089 = vunpack.c.l.b16 %v1057
  %v1090 = vunpack.c.l.b16 %v1058
  %v1091 = vunpack.c.l.b16 %v1059
  %v1092 = vunpack.c.l.b16 %v1060
  %v1093 = vpack.c.b16 %v1086, %v1085
  %v1094 = vpack.c.b16 %v1088, %v1087
  %v1095 = vpack.c.b16 %v1090, %v1089
  %v1096 = vpack.c.b16 %v1092, %v1091
  %v1117 = vunpack.c.l.b16 %v1061
  %v1118 = vunpack.c.l.b16 %v1062
  %v1119 = vunpack.c.l.b16 %v1063
  %v1120 = vunpack.c.l.b16 %v1064
  %v1121 = vunpack.c.l.b16 %v1065
  %v1122 = vunpack.c.l.b16 %v1066
  %v1123 = vunpack.c.l.b16 %v1067
  %v1124 = vunpack.c.l.b16 %v1068
  %v1125 = vunpack.c.l.b16 %v1069
  %v1126 = vunpack.c.l.b16 %v1070
  %v1127 = vunpack.c.l.b16 %v1071
  %v1128 = vunpack.c.l.b16 %v1072
  %v1129 = vunpack.c.l.b16 %v1073
  %v1130 = vunpack.c.l.b16 %v1074
  %v1131 = vunpack.c.l.b16 %v1075
  %v1132 = vunpack.c.l.b16 %v1076
  %v1133 = vpack.c.b16 %v1118, %v1117
  %v1134 = vpack.c.b16 %v1120, %v1119
  %v1135 = vpack.c.b16 %v1122, %v1121
  %v1136 = vpack.c.b16 %v1124, %v1123
  %v1137 = vpack.c.b16 %v1126, %v1125
  %v1138 = vpack.c.b16 %v1128, %v1127
  %v1139 = vpack.c.b16 %v1130, %v1129
  %v1140 = vpack.c.b16 %v1132, %v1131
  %1149 = vmatprep.subr.bf16.mxu0 0
  %1150 = vmatpush1.bf16.msra.mxu0 %v1133
  %1151 = vmatprep.subr.bf16.mxu0 0
  %1152 = vmatpush1.bf16.msra.mxu0 %v1134
  %1153 = vmatprep.subr.bf16.mxu0 0
  %1154 = vmatpush1.bf16.msra.mxu0 %v1135
  %1155 = vmatprep.subr.bf16.mxu0 0
  %1156 = vmatpush1.bf16.msra.mxu0 %v1136
  %1157 = vmatprep.subr.bf16.mxu0 0
  %1158 = vmatpush1.bf16.msra.mxu0 %v1137
  %1159 = vmatprep.subr.bf16.mxu0 0
  %1160 = vmatpush1.bf16.msra.mxu0 %v1138
  %1161 = vmatprep.subr.bf16.mxu0 0
  %1162 = vmatpush1.bf16.msra.mxu0 %v1139
  %1163 = vmatprep.subr.bf16.mxu0 0
  %1164 = vmatpush1.bf16.msra.mxu0 %v1140
  %1165 = vmatprep.subr.bf16.mxu0 0
  %1166 = vmatpush1.bf16.msra.mxu0 0
  %1167 = vmatprep.subr.bf16.mxu0 0
  %1168 = vmatpush1.bf16.msra.mxu0 0
  %1169 = vmatprep.subr.bf16.mxu0 0
  %1170 = vmatpush1.bf16.msra.mxu0 0
  %1171 = vmatprep.subr.bf16.mxu0 0
  %1172 = vmatpush1.bf16.msra.mxu0 0
  %1173 = vmatprep.subr.bf16.mxu0 0
  %1174 = vmatpush1.bf16.msra.mxu0 0
  %1175 = vmatprep.subr.bf16.mxu0 0
  %1176 = vmatpush1.bf16.msra.mxu0 0
  %1177 = vmatprep.subr.bf16.mxu0 0
  %1178 = vmatpush1.bf16.msra.mxu0 0
  %1179 = vmatprep.subr.bf16.mxu0 0
  %1180 = vmatpush1.bf16.msra.mxu0 0
  %1181 = vmatprep.mubr.bf16.mxu0 0
  %1182 = vmatmul.mubr.bf16.gmra.mrb[0].mxu0 %v1093
  %v1183 = vpop.f32.mrb[0].mxu0
  %v1184 = vadd.f32 0.0, %v1183
  %v1185 = vpop.f32.mrb[0].mxu0
  %v1186 = vpop.f32.mrb[0].mxu0
  %v1187 = vadd.f32 0.0, %v1186
  %v1188 = vpop.f32.mrb[0].mxu0
  %1189 = vmatprep.mubr.bf16.mxu0 0
  %1190 = vmatmul.mubr.bf16.gmra.mrb[0].mxu0 %v1094
  %v1191 = vpop.f32.mrb[0].mxu0
  %v1192 = vadd.f32 0.0, %v1191
  %v1193 = vpop.f32.mrb[0].mxu0
  %v1194 = vpop.f32.mrb[0].mxu0
  %v1195 = vadd.f32 0.0, %v1194
  %v1196 = vpop.f32.mrb[0].mxu0
  %1197 = vmatprep.mubr.bf16.mxu0 0
  %1198 = vmatmul.mubr.bf16.gmra.mrb[0].mxu0 %v1095
  %v1199 = vpop.f32.mrb[0].mxu0
  %v1200 = vadd.f32 0.0, %v1199
  %v1201 = vpop.f32.mrb[0].mxu0
  %v1202 = vpop.f32.mrb[0].mxu0
  %v1203 = vadd.f32 0.0, %v1202
  %v1204 = vpop.f32.mrb[0].mxu0
  %1205 = vmatprep.mubr.bf16.mxu0 0
  %1206 = vmatmul.mubr.bf16.gmra.mrb[0].mxu0 %v1096
  %v1207 = vpop.f32.mrb[0].mxu0
  %v1208 = vadd.f32 0.0, %v1207
  %v1209 = vpop.f32.mrb[0].mxu0
  %v1210 = vpop.f32.mrb[0].mxu0
  %v1211 = vadd.f32 0.0, %v1210
  %v1212 = vpop.f32.mrb[0].mxu0
  %1213 = vdwg.mxu0
  %v1214 = vld [vmem:[%s5] sm:$0xf]
  %v1215 = vld [vmem:[%s5 + $0x4] sm:$0xf]
  %v1216 = vld [vmem:[%s5 + $0x8] sm:$0xf]
  %v1217 = vld [vmem:[%s5 + $0xc] sm:$0xf]
  %s1218 = scalar_lea.vmem %s6, 6
  %v1219 = vld [vmem:[%s1218] sm:$0x1]
  %v1221 = vlaneseq
  %v1222 = vshrl.u32 %v1221, 7
  %v1223 = vsub.s32 0, %v1222
  %v1224 = vrot.slane %v1219, %v1223
  %v1230 = vunpack.c.l.b16 %v1214
  %v1231 = vunpack.c.l.b16 %v1215
  %v1232 = vunpack.c.l.b16 %v1216
  %v1233 = vunpack.c.l.b16 %v1217
  %v1234 = vpack.c.b16 %v1231, %v1230
  %v1235 = vpack.c.b16 %v1233, %v1232
  %v1239 = vsel %vm80, %v979, 0
  %1241 = vmatprep.subr.bf16.mxu0 0
  %1242 = vmatpush1.bf16.msra.mxu0 %v1234
  %1243 = vmatprep.subr.bf16.mxu0 0
  %1244 = vmatpush1.bf16.msra.mxu0 %v1235
  %1245 = vmatprep.subr.bf16.mxu0 0
  %1246 = vmatpush1.bf16.msra.mxu0 0
  %1247 = vmatprep.subr.bf16.mxu0 0
  %1248 = vmatpush1.bf16.msra.mxu0 0
  %1249 = vmatprep.subr.bf16.mxu0 0
  %1250 = vmatpush1.bf16.msra.mxu0 0
  %1251 = vmatprep.subr.bf16.mxu0 0
  %1252 = vmatpush1.bf16.msra.mxu0 0
  %1253 = vmatprep.subr.bf16.mxu0 0
  %1254 = vmatpush1.bf16.msra.mxu0 0
  %1255 = vmatprep.subr.bf16.mxu0 0
  %1256 = vmatpush1.bf16.msra.mxu0 0
  %1257 = vmatprep.subr.bf16.mxu0 0
  %1258 = vmatpush1.bf16.msra.mxu0 0
  %1259 = vmatprep.subr.bf16.mxu0 0
  %1260 = vmatpush1.bf16.msra.mxu0 0
  %1261 = vmatprep.subr.bf16.mxu0 0
  %1262 = vmatpush1.bf16.msra.mxu0 0
  %1263 = vmatprep.subr.bf16.mxu0 0
  %1264 = vmatpush1.bf16.msra.mxu0 0
  %1265 = vmatprep.subr.bf16.mxu0 0
  %1266 = vmatpush1.bf16.msra.mxu0 0
  %1267 = vmatprep.subr.bf16.mxu0 0
  %1268 = vmatpush1.bf16.msra.mxu0 0
  %1269 = vmatprep.subr.bf16.mxu0 0
  %1270 = vmatpush1.bf16.msra.mxu0 0
  %1271 = vmatprep.subr.bf16.mxu0 0
  %1272 = vmatpush1.bf16.msra.mxu0 0
  %1273 = vmatprep.mubr.bf16.mxu0 0
  %1274 = vmatmul.mubr.bf16.gmra.mrb[0].mxu0 %v1239
  %v1275 = vpop.f32.mrb[0].mxu0
  %v1276 = vadd.f32 %v1224, %v1275
  %v1277 = vpop.f32.mrb[0].mxu0
  %v1278 = vpop.f32.mrb[0].mxu0
  %v1279 = vpop.f32.mrb[0].mxu0
  %1280 = vdwg.mxu0
  %v1281 = vadd.f32 %v1184, %v1276
  %v1282 = vadd.f32 %v1187, %v1276
  %v1283 = vadd.f32 %v1192, %v1276
  %v1284 = vadd.f32 %v1195, %v1276
  %v1285 = vadd.f32 %v1200, %v1276
  %v1286 = vadd.f32 %v1203, %v1276
  %v1287 = vadd.f32 %v1208, %v1276
  %v1288 = vadd.f32 %v1211, %v1276
  %1289 = vst.msk [vmem:[#allocation2] sm:$0xff] %vm80, %v1281
  %1290 = vst.msk [vmem:[#allocation2 + $0x8] sm:$0xff] %vm80, %v1282
  %1291 = vst.msk [vmem:[#allocation2 + $0x10] sm:$0xff] %vm80, %v1283
  %1292 = vst.msk [vmem:[#allocation2 + $0x18] sm:$0xff] %vm80, %v1284
  %1293 = vst.msk [vmem:[#allocation2 + $0x20] sm:$0xff] %vm80, %v1285
  %1294 = vst.msk [vmem:[#allocation2 + $0x28] sm:$0xff] %vm80, %v1286
  %1295 = vst.msk [vmem:[#allocation2 + $0x30] sm:$0xff] %vm80, %v1287
  %1296 = vst.msk [vmem:[#allocation2 + $0x38] sm:$0xff] %vm80, %v1288
  %s1297 = scalar_lea.vmem %s4, 64
  %v1298 = vld [vmem:[%s1297] sm:$0xf]
  %v1299 = vld [vmem:[%s1297 + $0x4] sm:$0xf]
  %v1300 = vld [vmem:[%s1297 + $0x8] sm:$0xf]
  %v1301 = vld [vmem:[%s1297 + $0xc] sm:$0xf]
  %v1302 = vld [vmem:[%s1297 + $0x10] sm:$0xf]
  %v1303 = vld [vmem:[%s1297 + $0x14] sm:$0xf]
  %v1304 = vld [vmem:[%s1297 + $0x18] sm:$0xf]
  %v1305 = vld [vmem:[%s1297 + $0x1c] sm:$0xf]
  %v1306 = vld [vmem:[%s1297 + $0x20] sm:$0xf]
  %v1307 = vld [vmem:[%s1297 + $0x24] sm:$0xf]
  %v1308 = vld [vmem:[%s1297 + $0x28] sm:$0xf]
  %v1309 = vld [vmem:[%s1297 + $0x2c] sm:$0xf]
  %v1310 = vld [vmem:[%s1297 + $0x30] sm:$0xf]
  %v1311 = vld [vmem:[%s1297 + $0x34] sm:$0xf]
  %v1312 = vld [vmem:[%s1297 + $0x38] sm:$0xf]
  %v1313 = vld [vmem:[%s1297 + $0x3c] sm:$0xf]
  %v1330 = vunpack.c.l.b16 %v1298
  %v1331 = vunpack.c.l.b16 %v1299
  %v1332 = vunpack.c.l.b16 %v1300
  %v1333 = vunpack.c.l.b16 %v1301
  %v1334 = vunpack.c.l.b16 %v1302
  %v1335 = vunpack.c.l.b16 %v1303
  %v1336 = vunpack.c.l.b16 %v1304
  %v1337 = vunpack.c.l.b16 %v1305
  %v1338 = vunpack.c.l.b16 %v1306
  %v1339 = vunpack.c.l.b16 %v1307
  %v1340 = vunpack.c.l.b16 %v1308
  %v1341 = vunpack.c.l.b16 %v1309
  %v1342 = vunpack.c.l.b16 %v1310
  %v1343 = vunpack.c.l.b16 %v1311
  %v1344 = vunpack.c.l.b16 %v1312
  %v1345 = vunpack.c.l.b16 %v1313
  %v1346 = vpack.c.b16 %v1331, %v1330
  %v1347 = vpack.c.b16 %v1333, %v1332
  %v1348 = vpack.c.b16 %v1335, %v1334
  %v1349 = vpack.c.b16 %v1337, %v1336
  %v1350 = vpack.c.b16 %v1339, %v1338
  %v1351 = vpack.c.b16 %v1341, %v1340
  %v1352 = vpack.c.b16 %v1343, %v1342
  %v1353 = vpack.c.b16 %v1345, %v1344
  %1362 = vmatprep.subr.bf16.mxu0 0
  %1363 = vmatpush1.bf16.msra.mxu0 %v1346
  %1364 = vmatprep.subr.bf16.mxu0 0
  %1365 = vmatpush1.bf16.msra.mxu0 %v1347
  %1366 = vmatprep.subr.bf16.mxu0 0
  %1367 = vmatpush1.bf16.msra.mxu0 %v1348
  %1368 = vmatprep.subr.bf16.mxu0 0
  %1369 = vmatpush1.bf16.msra.mxu0 %v1349
  %1370 = vmatprep.subr.bf16.mxu0 0
  %1371 = vmatpush1.bf16.msra.mxu0 %v1350
  %1372 = vmatprep.subr.bf16.mxu0 0
  %1373 = vmatpush1.bf16.msra.mxu0 %v1351
  %1374 = vmatprep.subr.bf16.mxu0 0
  %1375 = vmatpush1.bf16.msra.mxu0 %v1352
  %1376 = vmatprep.subr.bf16.mxu0 0
  %1377 = vmatpush1.bf16.msra.mxu0 %v1353
  %1378 = vmatprep.subr.bf16.mxu0 0
  %1379 = vmatpush1.bf16.msra.mxu0 0
  %1380 = vmatprep.subr.bf16.mxu0 0
  %1381 = vmatpush1.bf16.msra.mxu0 0
  %1382 = vmatprep.subr.bf16.mxu0 0
  %1383 = vmatpush1.bf16.msra.mxu0 0
  %1384 = vmatprep.subr.bf16.mxu0 0
  %1385 = vmatpush1.bf16.msra.mxu0 0
  %1386 = vmatprep.subr.bf16.mxu0 0
  %1387 = vmatpush1.bf16.msra.mxu0 0
  %1388 = vmatprep.subr.bf16.mxu0 0
  %1389 = vmatpush1.bf16.msra.mxu0 0
  %1390 = vmatprep.subr.bf16.mxu0 0
  %1391 = vmatpush1.bf16.msra.mxu0 0
  %1392 = vmatprep.subr.bf16.mxu0 0
  %1393 = vmatpush1.bf16.msra.mxu0 0
  %1394 = vmatprep.mubr.bf16.mxu0 0
  %1395 = vmatmul.mubr.bf16.gmra.mrb[0].mxu0 %v1093
  %v1396 = vpop.f32.mrb[0].mxu0
  %v1397 = vadd.f32 0.0, %v1396
  %v1398 = vpop.f32.mrb[0].mxu0
  %v1399 = vpop.f32.mrb[0].mxu0
  %v1400 = vadd.f32 0.0, %v1399
  %v1401 = vpop.f32.mrb[0].mxu0
  %1402 = vmatprep.mubr.bf16.mxu0 0
  %1403 = vmatmul.mubr.bf16.gmra.mrb[0].mxu0 %v1094
  %v1404 = vpop.f32.mrb[0].mxu0
  %v1405 = vadd.f32 0.0, %v1404
  %v1406 = vpop.f32.mrb[0].mxu0
  %v1407 = vpop.f32.mrb[0].mxu0
  %v1408 = vadd.f32 0.0, %v1407
  %v1409 = vpop.f32.mrb[0].mxu0
  %1410 = vmatprep.mubr.bf16.mxu0 0
  %1411 = vmatmul.mubr.bf16.gmra.mrb[0].mxu0 %v1095
  %v1412 = vpop.f32.mrb[0].mxu0
  %v1413 = vadd.f32 0.0, %v1412
  %v1414 = vpop.f32.mrb[0].mxu0
  %v1415 = vpop.f32.mrb[0].mxu0
  %v1416 = vadd.f32 0.0, %v1415
  %v1417 = vpop.f32.mrb[0].mxu0
  %1418 = vmatprep.mubr.bf16.mxu0 0
  %1419 = vmatmul.mubr.bf16.gmra.mrb[0].mxu0 %v1096
  %v1420 = vpop.f32.mrb[0].mxu0
  %v1421 = vadd.f32 0.0, %v1420
  %v1422 = vpop.f32.mrb[0].mxu0
  %v1423 = vpop.f32.mrb[0].mxu0
  %v1424 = vadd.f32 0.0, %v1423
  %v1425 = vpop.f32.mrb[0].mxu0
  %1426 = vdwg.mxu0
  %s1427 = scalar_lea.vmem %s5, 16
  %v1428 = vld [vmem:[%s1427] sm:$0xf]
  %v1429 = vld [vmem:[%s1427 + $0x4] sm:$0xf]
  %v1430 = vld [vmem:[%s1427 + $0x8] sm:$0xf]
  %v1431 = vld [vmem:[%s1427 + $0xc] sm:$0xf]
  %s1432 = scalar_lea.vmem %s6, 7
  %v1433 = vld [vmem:[%s1432] sm:$0x1]
  %v1435 = vlaneseq
  %v1436 = vshrl.u32 %v1435, 7
  %v1437 = vsub.s32 0, %v1436
  %v1438 = vrot.slane %v1433, %v1437
  %v1444 = vunpack.c.l.b16 %v1428
  %v1445 = vunpack.c.l.b16 %v1429
  %v1446 = vunpack.c.l.b16 %v1430
  %v1447 = vunpack.c.l.b16 %v1431
  %v1448 = vpack.c.b16 %v1445, %v1444
  %v1449 = vpack.c.b16 %v1447, %v1446
  %1452 = vmatprep.subr.bf16.mxu0 0
  %1453 = vmatpush1.bf16.msra.mxu0 %v1448
  %1454 = vmatprep.subr.bf16.mxu0 0
  %1455 = vmatpush1.bf16.msra.mxu0 %v1449
  %1456 = vmatprep.subr.bf16.mxu0 0
  %1457 = vmatpush1.bf16.msra.mxu0 0
  %1458 = vmatprep.subr.bf16.mxu0 0
  %1459 = vmatpush1.bf16.msra.mxu0 0
  %1460 = vmatprep.subr.bf16.mxu0 0
  %1461 = vmatpush1.bf16.msra.mxu0 0
  %1462 = vmatprep.subr.bf16.mxu0 0
  %1463 = vmatpush1.bf16.msra.mxu0 0
  %1464 = vmatprep.subr.bf16.mxu0 0
  %1465 = vmatpush1.bf16.msra.mxu0 0
  %1466 = vmatprep.subr.bf16.mxu0 0
  %1467 = vmatpush1.bf16.msra.mxu0 0
  %1468 = vmatprep.subr.bf16.mxu0 0
  %1469 = vmatpush1.bf16.msra.mxu0 0
  %1470 = vmatprep.subr.bf16.mxu0 0
  %1471 = vmatpush1.bf16.msra.mxu0 0
  %1472 = vmatprep.subr.bf16.mxu0 0
  %1473 = vmatpush1.bf16.msra.mxu0 0
  %1474 = vmatprep.subr.bf16.mxu0 0
  %1475 = vmatpush1.bf16.msra.mxu0 0
  %1476 = vmatprep.subr.bf16.mxu0 0
  %1477 = vmatpush1.bf16.msra.mxu0 0
  %1478 = vmatprep.subr.bf16.mxu0 0
  %1479 = vmatpush1.bf16.msra.mxu0 0
  %1480 = vmatprep.subr.bf16.mxu0 0
  %1481 = vmatpush1.bf16.msra.mxu0 0
  %1482 = vmatprep.subr.bf16.mxu0 0
  %1483 = vmatpush1.bf16.msra.mxu0 0
  %1484 = vmatprep.mubr.bf16.mxu0 0
  %1485 = vmatmul.mubr.bf16.gmra.mrb[0].mxu0 %v1239
  %v1486 = vpop.f32.mrb[0].mxu0
  %v1487 = vadd.f32 %v1438, %v1486
  %v1488 = vpop.f32.mrb[0].mxu0
  %v1489 = vpop.f32.mrb[0].mxu0
  %v1490 = vpop.f32.mrb[0].mxu0
  %1491 = vdwg.mxu0
  %v1492 = vadd.f32 %v1397, %v1487
  %v1493 = vadd.f32 %v1400, %v1487
  %v1494 = vadd.f32 %v1405, %v1487
  %v1495 = vadd.f32 %v1408, %v1487
  %v1496 = vadd.f32 %v1413, %v1487
  %v1497 = vadd.f32 %v1416, %v1487
  %v1498 = vadd.f32 %v1421, %v1487
  %v1499 = vadd.f32 %v1424, %v1487
  %s1500 = scalar_lea.vmem [#allocation2], 64
  %1501 = vst.msk [vmem:[%s1500] sm:$0xff] %vm80, %v1492
  %1502 = vst.msk [vmem:[%s1500 + $0x8] sm:$0xff] %vm80, %v1493
  %1503 = vst.msk [vmem:[%s1500 + $0x10] sm:$0xff] %vm80, %v1494
  %1504 = vst.msk [vmem:[%s1500 + $0x18] sm:$0xff] %vm80, %v1495
  %1505 = vst.msk [vmem:[%s1500 + $0x20] sm:$0xff] %vm80, %v1496
  %1506 = vst.msk [vmem:[%s1500 + $0x28] sm:$0xff] %vm80, %v1497
  %1507 = vst.msk [vmem:[%s1500 + $0x30] sm:$0xff] %vm80, %v1498
  %1508 = vst.msk [vmem:[%s1500 + $0x38] sm:$0xff] %vm80, %v1499
  %s1509 = scalar_lea.vmem %s4, 128
  %v1510 = vld [vmem:[%s1509] sm:$0xf]
  %v1511 = vld [vmem:[%s1509 + $0x4] sm:$0xf]
  %v1512 = vld [vmem:[%s1509 + $0x8] sm:$0xf]
  %v1513 = vld [vmem:[%s1509 + $0xc] sm:$0xf]
  %v1514 = vld [vmem:[%s1509 + $0x10] sm:$0xf]
  %v1515 = vld [vmem:[%s1509 + $0x14] sm:$0xf]
  %v1516 = vld [vmem:[%s1509 + $0x18] sm:$0xf]
  %v1517 = vld [vmem:[%s1509 + $0x1c] sm:$0xf]
  %v1518 = vld [vmem:[%s1509 + $0x20] sm:$0xf]
  %v1519 = vld [vmem:[%s1509 + $0x24] sm:$0xf]
  %v1520 = vld [vmem:[%s1509 + $0x28] sm:$0xf]
  %v1521 = vld [vmem:[%s1509 + $0x2c] sm:$0xf]
  %v1522 = vld [vmem:[%s1509 + $0x30] sm:$0xf]
  %v1523 = vld [vmem:[%s1509 + $0x34] sm:$0xf]
  %v1524 = vld [vmem:[%s1509 + $0x38] sm:$0xf]
  %v1525 = vld [vmem:[%s1509 + $0x3c] sm:$0xf]
  %v1542 = vunpack.c.l.b16 %v1510
  %v1543 = vunpack.c.l.b16 %v1511
  %v1544 = vunpack.c.l.b16 %v1512
  %v1545 = vunpack.c.l.b16 %v1513
  %v1546 = vunpack.c.l.b16 %v1514
  %v1547 = vunpack.c.l.b16 %v1515
  %v1548 = vunpack.c.l.b16 %v1516
  %v1549 = vunpack.c.l.b16 %v1517
  %v1550 = vunpack.c.l.b16 %v1518
  %v1551 = vunpack.c.l.b16 %v1519
  %v1552 = vunpack.c.l.b16 %v1520
  %v1553 = vunpack.c.l.b16 %v1521
  %v1554 = vunpack.c.l.b16 %v1522
  %v1555 = vunpack.c.l.b16 %v1523
  %v1556 = vunpack.c.l.b16 %v1524
  %v1557 = vunpack.c.l.b16 %v1525
  %v1558 = vpack.c.b16 %v1543, %v1542
  %v1559 = vpack.c.b16 %v1545, %v1544
  %v1560 = vpack.c.b16 %v1547, %v1546
  %v1561 = vpack.c.b16 %v1549, %v1548
  %v1562 = vpack.c.b16 %v1551, %v1550
  %v1563 = vpack.c.b16 %v1553, %v1552
  %v1564 = vpack.c.b16 %v1555, %v1554
  %v1565 = vpack.c.b16 %v1557, %v1556
  %1574 = vmatprep.subr.bf16.mxu0 0
  %1575 = vmatpush1.bf16.msra.mxu0 %v1558
  %1576 = vmatprep.subr.bf16.mxu0 0
  %1577 = vmatpush1.bf16.msra.mxu0 %v1559
  %1578 = vmatprep.subr.bf16.mxu0 0
  %1579 = vmatpush1.bf16.msra.mxu0 %v1560
  %1580 = vmatprep.subr.bf16.mxu0 0
  %1581 = vmatpush1.bf16.msra.mxu0 %v1561
  %1582 = vmatprep.subr.bf16.mxu0 0
  %1583 = vmatpush1.bf16.msra.mxu0 %v1562
  %1584 = vmatprep.subr.bf16.mxu0 0
  %1585 = vmatpush1.bf16.msra.mxu0 %v1563
  %1586 = vmatprep.subr.bf16.mxu0 0
  %1587 = vmatpush1.bf16.msra.mxu0 %v1564
  %1588 = vmatprep.subr.bf16.mxu0 0
  %1589 = vmatpush1.bf16.msra.mxu0 %v1565
  %1590 = vmatprep.subr.bf16.mxu0 0
  %1591 = vmatpush1.bf16.msra.mxu0 0
  %1592 = vmatprep.subr.bf16.mxu0 0
  %1593 = vmatpush1.bf16.msra.mxu0 0
  %1594 = vmatprep.subr.bf16.mxu0 0
  %1595 = vmatpush1.bf16.msra.mxu0 0
  %1596 = vmatprep.subr.bf16.mxu0 0
  %1597 = vmatpush1.bf16.msra.mxu0 0
  %1598 = vmatprep.subr.bf16.mxu0 0
  %1599 = vmatpush1.bf16.msra.mxu0 0
  %1600 = vmatprep.subr.bf16.mxu0 0
  %1601 = vmatpush1.bf16.msra.mxu0 0
  %1602 = vmatprep.subr.bf16.mxu0 0
  %1603 = vmatpush1.bf16.msra.mxu0 0
  %1604 = vmatprep.subr.bf16.mxu0 0
  %1605 = vmatpush1.bf16.msra.mxu0 0
  %1606 = vmatprep.mubr.bf16.mxu0 0
  %1607 = vmatmul.mubr.bf16.gmra.mrb[0].mxu0 %v1093
  %v1608 = vpop.f32.mrb[0].mxu0
  %v1609 = vadd.f32 0.0, %v1608
  %v1610 = vpop.f32.mrb[0].mxu0
  %v1611 = vpop.f32.mrb[0].mxu0
  %v1612 = vadd.f32 0.0, %v1611
  %v1613 = vpop.f32.mrb[0].mxu0
  %1614 = vmatprep.mubr.bf16.mxu0 0
  %1615 = vmatmul.mubr.bf16.gmra.mrb[0].mxu0 %v1094
  %v1616 = vpop.f32.mrb[0].mxu0
  %v1617 = vadd.f32 0.0, %v1616
  %v1618 = vpop.f32.mrb[0].mxu0
  %v1619 = vpop.f32.mrb[0].mxu0
  %v1620 = vadd.f32 0.0, %v1619
  %v1621 = vpop.f32.mrb[0].mxu0
  %1622 = vmatprep.mubr.bf16.mxu0 0
  %1623 = vmatmul.mubr.bf16.gmra.mrb[0].mxu0 %v1095
  %v1624 = vpop.f32.mrb[0].mxu0
  %v1625 = vadd.f32 0.0, %v1624
  %v1626 = vpop.f32.mrb[0].mxu0
  %v1627 = vpop.f32.mrb[0].mxu0
  %v1628 = vadd.f32 0.0, %v1627
  %v1629 = vpop.f32.mrb[0].mxu0
  %1630 = vmatprep.mubr.bf16.mxu0 0
  %1631 = vmatmul.mubr.bf16.gmra.mrb[0].mxu0 %v1096
  %v1632 = vpop.f32.mrb[0].mxu0
  %v1633 = vadd.f32 0.0, %v1632
  %v1634 = vpop.f32.mrb[0].mxu0
  %v1635 = vpop.f32.mrb[0].mxu0
  %v1636 = vadd.f32 0.0, %v1635
  %v1637 = vpop.f32.mrb[0].mxu0
  %1638 = vdwg.mxu0
  %s1639 = scalar_lea.vmem %s5, 32
  %v1640 = vld [vmem:[%s1639] sm:$0xf]
  %v1641 = vld [vmem:[%s1639 + $0x4] sm:$0xf]
  %v1642 = vld [vmem:[%s1639 + $0x8] sm:$0xf]
  %v1643 = vld [vmem:[%s1639 + $0xc] sm:$0xf]
  %s1644 = scalar_lea.vmem %s6, 8
  %v1645 = vld [vmem:[%s1644] sm:$0x1]
  %v1647 = vlaneseq
  %v1648 = vshrl.u32 %v1647, 7
  %v1649 = vsub.s32 0, %v1648
  %v1650 = vrot.slane %v1645, %v1649
  %v1656 = vunpack.c.l.b16 %v1640
  %v1657 = vunpack.c.l.b16 %v1641
  %v1658 = vunpack.c.l.b16 %v1642
  %v1659 = vunpack.c.l.b16 %v1643
  %v1660 = vpack.c.b16 %v1657, %v1656
  %v1661 = vpack.c.b16 %v1659, %v1658
  %1664 = vmatprep.subr.bf16.mxu0 0
  %1665 = vmatpush1.bf16.msra.mxu0 %v1660
  %1666 = vmatprep.subr.bf16.mxu0 0
  %1667 = vmatpush1.bf16.msra.mxu0 %v1661
  %1668 = vmatprep.subr.bf16.mxu0 0
  %1669 = vmatpush1.bf16.msra.mxu0 0
  %1670 = vmatprep.subr.bf16.mxu0 0
  %1671 = vmatpush1.bf16.msra.mxu0 0
  %1672 = vmatprep.subr.bf16.mxu0 0
  %1673 = vmatpush1.bf16.msra.mxu0 0
  %1674 = vmatprep.subr.bf16.mxu0 0
  %1675 = vmatpush1.bf16.msra.mxu0 0
  %1676 = vmatprep.subr.bf16.mxu0 0
  %1677 = vmatpush1.bf16.msra.mxu0 0
  %1678 = vmatprep.subr.bf16.mxu0 0
  %1679 = vmatpush1.bf16.msra.mxu0 0
  %1680 = vmatprep.subr.bf16.mxu0 0
  %1681 = vmatpush1.bf16.msra.mxu0 0
  %1682 = vmatprep.subr.bf16.mxu0 0
  %1683 = vmatpush1.bf16.msra.mxu0 0
  %1684 = vmatprep.subr.bf16.mxu0 0
  %1685 = vmatpush1.bf16.msra.mxu0 0
  %1686 = vmatprep.subr.bf16.mxu0 0
  %1687 = vmatpush1.bf16.msra.mxu0 0
  %1688 = vmatprep.subr.bf16.mxu0 0
  %1689 = vmatpush1.bf16.msra.mxu0 0
  %1690 = vmatprep.subr.bf16.mxu0 0
  %1691 = vmatpush1.bf16.msra.mxu0 0
  %1692 = vmatprep.subr.bf16.mxu0 0
  %1693 = vmatpush1.bf16.msra.mxu0 0
  %1694 = vmatprep.subr.bf16.mxu0 0
  %1695 = vmatpush1.bf16.msra.mxu0 0
  %1696 = vmatprep.mubr.bf16.mxu0 0
  %1697 = vmatmul.mubr.bf16.gmra.mrb[0].mxu0 %v1239
  %v1698 = vpop.f32.mrb[0].mxu0
  %v1699 = vadd.f32 %v1650, %v1698
  %v1700 = vpop.f32.mrb[0].mxu0
  %v1701 = vpop.f32.mrb[0].mxu0
  %v1702 = vpop.f32.mrb[0].mxu0
  %1703 = vdwg.mxu0
  %v1704 = vadd.f32 %v1609, %v1699
  %v1705 = vadd.f32 %v1612, %v1699
  %v1706 = vadd.f32 %v1617, %v1699
  %v1707 = vadd.f32 %v1620, %v1699
  %v1708 = vadd.f32 %v1625, %v1699
  %v1709 = vadd.f32 %v1628, %v1699
  %v1710 = vadd.f32 %v1633, %v1699
  %v1711 = vadd.f32 %v1636, %v1699
  %s1712 = scalar_lea.vmem [#allocation2], 128
  %1713 = vst.msk [vmem:[%s1712] sm:$0xff] %vm80, %v1704
  %1714 = vst.msk [vmem:[%s1712 + $0x8] sm:$0xff] %vm80, %v1705
  %1715 = vst.msk [vmem:[%s1712 + $0x10] sm:$0xff] %vm80, %v1706
  %1716 = vst.msk [vmem:[%s1712 + $0x18] sm:$0xff] %vm80, %v1707
  %1717 = vst.msk [vmem:[%s1712 + $0x20] sm:$0xff] %vm80, %v1708
  %1718 = vst.msk [vmem:[%s1712 + $0x28] sm:$0xff] %vm80, %v1709
  %1719 = vst.msk [vmem:[%s1712 + $0x30] sm:$0xff] %vm80, %v1710
  %1720 = vst.msk [vmem:[%s1712 + $0x38] sm:$0xff] %vm80, %v1711
  %s1721 = scalar_lea.vmem %s4, 192
  %v1722 = vld [vmem:[%s1721] sm:$0xf]
  %v1723 = vld [vmem:[%s1721 + $0x4] sm:$0xf]
  %v1724 = vld [vmem:[%s1721 + $0x8] sm:$0xf]
  %v1725 = vld [vmem:[%s1721 + $0xc] sm:$0xf]
  %v1726 = vld [vmem:[%s1721 + $0x10] sm:$0xf]
  %v1727 = vld [vmem:[%s1721 + $0x14] sm:$0xf]
  %v1728 = vld [vmem:[%s1721 + $0x18] sm:$0xf]
  %v1729 = vld [vmem:[%s1721 + $0x1c] sm:$0xf]
  %v1730 = vld [vmem:[%s1721 + $0x20] sm:$0xf]
  %v1731 = vld [vmem:[%s1721 + $0x24] sm:$0xf]
  %v1732 = vld [vmem:[%s1721 + $0x28] sm:$0xf]
  %v1733 = vld [vmem:[%s1721 + $0x2c] sm:$0xf]
  %v1734 = vld [vmem:[%s1721 + $0x30] sm:$0xf]
  %v1735 = vld [vmem:[%s1721 + $0x34] sm:$0xf]
  %v1736 = vld [vmem:[%s1721 + $0x38] sm:$0xf]
  %v1737 = vld [vmem:[%s1721 + $0x3c] sm:$0xf]
  %v1754 = vunpack.c.l.b16 %v1722
  %v1755 = vunpack.c.l.b16 %v1723
  %v1756 = vunpack.c.l.b16 %v1724
  %v1757 = vunpack.c.l.b16 %v1725
  %v1758 = vunpack.c.l.b16 %v1726
  %v1759 = vunpack.c.l.b16 %v1727
  %v1760 = vunpack.c.l.b16 %v1728
  %v1761 = vunpack.c.l.b16 %v1729
  %v1762 = vunpack.c.l.b16 %v1730
  %v1763 = vunpack.c.l.b16 %v1731
  %v1764 = vunpack.c.l.b16 %v1732
  %v1765 = vunpack.c.l.b16 %v1733
  %v1766 = vunpack.c.l.b16 %v1734
  %v1767 = vunpack.c.l.b16 %v1735
  %v1768 = vunpack.c.l.b16 %v1736
  %v1769 = vunpack.c.l.b16 %v1737
  %v1770 = vpack.c.b16 %v1755, %v1754
  %v1771 = vpack.c.b16 %v1757, %v1756
  %v1772 = vpack.c.b16 %v1759, %v1758
  %v1773 = vpack.c.b16 %v1761, %v1760
  %v1774 = vpack.c.b16 %v1763, %v1762
  %v1775 = vpack.c.b16 %v1765, %v1764
  %v1776 = vpack.c.b16 %v1767, %v1766
  %v1777 = vpack.c.b16 %v1769, %v1768
  %1786 = vmatprep.subr.bf16.mxu0 0
  %1787 = vmatpush1.bf16.msra.mxu0 %v1770
  %1788 = vmatprep.subr.bf16.mxu0 0
  %1789 = vmatpush1.bf16.msra.mxu0 %v1771
  %1790 = vmatprep.subr.bf16.mxu0 0
  %1791 = vmatpush1.bf16.msra.mxu0 %v1772
  %1792 = vmatprep.subr.bf16.mxu0 0
  %1793 = vmatpush1.bf16.msra.mxu0 %v1773
  %1794 = vmatprep.subr.bf16.mxu0 0
  %1795 = vmatpush1.bf16.msra.mxu0 %v1774
  %1796 = vmatprep.subr.bf16.mxu0 0
  %1797 = vmatpush1.bf16.msra.mxu0 %v1775
  %1798 = vmatprep.subr.bf16.mxu0 0
  %1799 = vmatpush1.bf16.msra.mxu0 %v1776
  %1800 = vmatprep.subr.bf16.mxu0 0
  %1801 = vmatpush1.bf16.msra.mxu0 %v1777
  %1802 = vmatprep.subr.bf16.mxu0 0
  %1803 = vmatpush1.bf16.msra.mxu0 0
  %1804 = vmatprep.subr.bf16.mxu0 0
  %1805 = vmatpush1.bf16.msra.mxu0 0
  %1806 = vmatprep.subr.bf16.mxu0 0
  %1807 = vmatpush1.bf16.msra.mxu0 0
  %1808 = vmatprep.subr.bf16.mxu0 0
  %1809 = vmatpush1.bf16.msra.mxu0 0
  %1810 = vmatprep.subr.bf16.mxu0 0
  %1811 = vmatpush1.bf16.msra.mxu0 0
  %1812 = vmatprep.subr.bf16.mxu0 0
  %1813 = vmatpush1.bf16.msra.mxu0 0
  %1814 = vmatprep.subr.bf16.mxu0 0
  %1815 = vmatpush1.bf16.msra.mxu0 0
  %1816 = vmatprep.subr.bf16.mxu0 0
  %1817 = vmatpush1.bf16.msra.mxu0 0
  %1818 = vmatprep.mubr.bf16.mxu0 0
  %1819 = vmatmul.mubr.bf16.gmra.mrb[0].mxu0 %v1093
  %v1820 = vpop.f32.mrb[0].mxu0
  %v1821 = vadd.f32 0.0, %v1820
  %v1822 = vpop.f32.mrb[0].mxu0
  %v1823 = vpop.f32.mrb[0].mxu0
  %v1824 = vadd.f32 0.0, %v1823
  %v1825 = vpop.f32.mrb[0].mxu0
  %1826 = vmatprep.mubr.bf16.mxu0 0
  %1827 = vmatmul.mubr.bf16.gmra.mrb[0].mxu0 %v1094
  %v1828 = vpop.f32.mrb[0].mxu0
  %v1829 = vadd.f32 0.0, %v1828
  %v1830 = vpop.f32.mrb[0].mxu0
  %v1831 = vpop.f32.mrb[0].mxu0
  %v1832 = vadd.f32 0.0, %v1831
  %v1833 = vpop.f32.mrb[0].mxu0
  %1834 = vmatprep.mubr.bf16.mxu0 0
  %1835 = vmatmul.mubr.bf16.gmra.mrb[0].mxu0 %v1095
  %v1836 = vpop.f32.mrb[0].mxu0
  %v1837 = vadd.f32 0.0, %v1836
  %v1838 = vpop.f32.mrb[0].mxu0
  %v1839 = vpop.f32.mrb[0].mxu0
  %v1840 = vadd.f32 0.0, %v1839
  %v1841 = vpop.f32.mrb[0].mxu0
  %1842 = vmatprep.mubr.bf16.mxu0 0
  %1843 = vmatmul.mubr.bf16.gmra.mrb[0].mxu0 %v1096
  %v1844 = vpop.f32.mrb[0].mxu0
  %v1845 = vadd.f32 0.0, %v1844
  %v1846 = vpop.f32.mrb[0].mxu0
  %v1847 = vpop.f32.mrb[0].mxu0
  %v1848 = vadd.f32 0.0, %v1847
  %v1849 = vpop.f32.mrb[0].mxu0
  %1850 = vdwg.mxu0
  %s1851 = scalar_lea.vmem %s5, 48
  %v1852 = vld [vmem:[%s1851] sm:$0xf]
  %v1853 = vld [vmem:[%s1851 + $0x4] sm:$0xf]
  %v1854 = vld [vmem:[%s1851 + $0x8] sm:$0xf]
  %v1855 = vld [vmem:[%s1851 + $0xc] sm:$0xf]
  %s1856 = scalar_lea.vmem %s6, 9
  %v1857 = vld [vmem:[%s1856] sm:$0x1]
  %v1859 = vlaneseq
  %v1860 = vshrl.u32 %v1859, 7
  %v1861 = vsub.s32 0, %v1860
  %v1862 = vrot.slane %v1857, %v1861
  %v1868 = vunpack.c.l.b16 %v1852
  %v1869 = vunpack.c.l.b16 %v1853
  %v1870 = vunpack.c.l.b16 %v1854
  %v1871 = vunpack.c.l.b16 %v1855
  %v1872 = vpack.c.b16 %v1869, %v1868
  %v1873 = vpack.c.b16 %v1871, %v1870
  %1876 = vmatprep.subr.bf16.mxu0 0
  %1877 = vmatpush1.bf16.msra.mxu0 %v1872
  %1878 = vmatprep.subr.bf16.mxu0 0
  %1879 = vmatpush1.bf16.msra.mxu0 %v1873
  %1880 = vmatprep.subr.bf16.mxu0 0
  %1881 = vmatpush1.bf16.msra.mxu0 0
  %1882 = vmatprep.subr.bf16.mxu0 0
  %1883 = vmatpush1.bf16.msra.mxu0 0
  %1884 = vmatprep.subr.bf16.mxu0 0
  %1885 = vmatpush1.bf16.msra.mxu0 0
  %1886 = vmatprep.subr.bf16.mxu0 0
  %1887 = vmatpush1.bf16.msra.mxu0 0
  %1888 = vmatprep.subr.bf16.mxu0 0
  %1889 = vmatpush1.bf16.msra.mxu0 0
  %1890 = vmatprep.subr.bf16.mxu0 0
  %1891 = vmatpush1.bf16.msra.mxu0 0
  %1892 = vmatprep.subr.bf16.mxu0 0
  %1893 = vmatpush1.bf16.msra.mxu0 0
  %1894 = vmatprep.subr.bf16.mxu0 0
  %1895 = vmatpush1.bf16.msra.mxu0 0
  %1896 = vmatprep.subr.bf16.mxu0 0
  %1897 = vmatpush1.bf16.msra.mxu0 0
  %1898 = vmatprep.subr.bf16.mxu0 0
  %1899 = vmatpush1.bf16.msra.mxu0 0
  %1900 = vmatprep.subr.bf16.mxu0 0
  %1901 = vmatpush1.bf16.msra.mxu0 0
  %1902 = vmatprep.subr.bf16.mxu0 0
  %1903 = vmatpush1.bf16.msra.mxu0 0
  %1904 = vmatprep.subr.bf16.mxu0 0
  %1905 = vmatpush1.bf16.msra.mxu0 0
  %1906 = vmatprep.subr.bf16.mxu0 0
  %1907 = vmatpush1.bf16.msra.mxu0 0
  %1908 = vmatprep.mubr.bf16.mxu0 0
  %1909 = vmatmul.mubr.bf16.gmra.mrb[0].mxu0 %v1239
  %v1910 = vpop.f32.mrb[0].mxu0
  %v1911 = vadd.f32 %v1862, %v1910
  %v1912 = vpop.f32.mrb[0].mxu0
  %v1913 = vpop.f32.mrb[0].mxu0
  %v1914 = vpop.f32.mrb[0].mxu0
  %1915 = vdwg.mxu0
  %v1916 = vadd.f32 %v1821, %v1911
  %v1917 = vadd.f32 %v1824, %v1911
  %v1918 = vadd.f32 %v1829, %v1911
  %v1919 = vadd.f32 %v1832, %v1911
  %v1920 = vadd.f32 %v1837, %v1911
  %v1921 = vadd.f32 %v1840, %v1911
  %v1922 = vadd.f32 %v1845, %v1911
  %v1923 = vadd.f32 %v1848, %v1911
  %s1924 = scalar_lea.vmem [#allocation2], 192
  %1925 = vst.msk [vmem:[%s1924] sm:$0xff] %vm80, %v1916
  %1926 = vst.msk [vmem:[%s1924 + $0x8] sm:$0xff] %vm80, %v1917
  %1927 = vst.msk [vmem:[%s1924 + $0x10] sm:$0xff] %vm80, %v1918
  %1928 = vst.msk [vmem:[%s1924 + $0x18] sm:$0xff] %vm80, %v1919
  %1929 = vst.msk [vmem:[%s1924 + $0x20] sm:$0xff] %vm80, %v1920
  %1930 = vst.msk [vmem:[%s1924 + $0x28] sm:$0xff] %vm80, %v1921
  %1931 = vst.msk [vmem:[%s1924 + $0x30] sm:$0xff] %vm80, %v1922
  %1932 = vst.msk [vmem:[%s1924 + $0x38] sm:$0xff] %vm80, %v1923
  %s1933 = scalar_lea.vmem %s5, 64
  %v1934 = vld [vmem:[%s1933] sm:$0xf]
  %v1935 = vld [vmem:[%s1933 + $0x4] sm:$0xf]
  %v1936 = vld [vmem:[%s1933 + $0x8] sm:$0xf]
  %v1937 = vld [vmem:[%s1933 + $0xc] sm:$0xf]
  %s1938 = scalar_lea.vmem %s5, 80
  %v1939 = vld [vmem:[%s1938] sm:$0xf]
  %v1940 = vld [vmem:[%s1938 + $0x4] sm:$0xf]
  %v1941 = vld [vmem:[%s1938 + $0x8] sm:$0xf]
  %v1942 = vld [vmem:[%s1938 + $0xc] sm:$0xf]
  %s1943 = scalar_lea.vmem %s5, 96
  %v1944 = vld [vmem:[%s1943] sm:$0xf]
  %v1945 = vld [vmem:[%s1943 + $0x4] sm:$0xf]
  %v1946 = vld [vmem:[%s1943 + $0x8] sm:$0xf]
  %v1947 = vld [vmem:[%s1943 + $0xc] sm:$0xf]
  %s1948 = scalar_lea.vmem %s5, 112
  %v1949 = vld [vmem:[%s1948] sm:$0xf]
  %v1950 = vld [vmem:[%s1948 + $0x4] sm:$0xf]
  %v1951 = vld [vmem:[%s1948 + $0x8] sm:$0xf]
  %v1952 = vld [vmem:[%s1948 + $0xc] sm:$0xf]
  %v1953 = vld [vmem:[#allocation2] sm:$0xff]
  %v1958 = vunpack.c.l.b16 %v1934
  %v1959 = vunpack.c.l.b16 %v1935
  %v1960 = vunpack.c.l.b16 %v1936
  %v1961 = vunpack.c.l.b16 %v1937
  %v1962 = vpack.c.b16 %v1959, %v1958
  %v1963 = vpack.c.b16 %v1961, %v1960
  %1966 = vmatprep.subr.bf16.mxu0 0
  %1967 = vmatpush1.bf16.msra.mxu0 %v1962
  %1968 = vmatprep.subr.bf16.mxu0 0
  %1969 = vmatpush1.bf16.msra.mxu0 %v1963
  %1970 = vmatprep.subr.bf16.mxu0 0
  %1971 = vmatpush1.bf16.msra.mxu0 0
  %1972 = vmatprep.subr.bf16.mxu0 0
  %1973 = vmatpush1.bf16.msra.mxu0 0
  %1974 = vmatprep.subr.bf16.mxu0 0
  %1975 = vmatpush1.bf16.msra.mxu0 0
  %1976 = vmatprep.subr.bf16.mxu0 0
  %1977 = vmatpush1.bf16.msra.mxu0 0
  %1978 = vmatprep.subr.bf16.mxu0 0
  %1979 = vmatpush1.bf16.msra.mxu0 0
  %1980 = vmatprep.subr.bf16.mxu0 0
  %1981 = vmatpush1.bf16.msra.mxu0 0
  %1982 = vmatprep.subr.bf16.mxu0 0
  %1983 = vmatpush1.bf16.msra.mxu0 0
  %1984 = vmatprep.subr.bf16.mxu0 0
  %1985 = vmatpush1.bf16.msra.mxu0 0
  %1986 = vmatprep.subr.bf16.mxu0 0
  %1987 = vmatpush1.bf16.msra.mxu0 0
  %1988 = vmatprep.subr.bf16.mxu0 0
  %1989 = vmatpush1.bf16.msra.mxu0 0
  %1990 = vmatprep.subr.bf16.mxu0 0
  %1991 = vmatpush1.bf16.msra.mxu0 0
  %1992 = vmatprep.subr.bf16.mxu0 0
  %1993 = vmatpush1.bf16.msra.mxu0 0
  %1994 = vmatprep.subr.bf16.mxu0 0
  %1995 = vmatpush1.bf16.msra.mxu0 0
  %1996 = vmatprep.subr.bf16.mxu0 0
  %1997 = vmatpush1.bf16.msra.mxu0 0
  %1998 = vmatprep.mubr.bf16.mxu0 0
  %1999 = vmatmul.mubr.bf16.gmra.mrb[0].mxu0 %v331
  %v2000 = vpop.f32.mrb[0].mxu0
  %v2001 = vadd.f32 0.0, %v2000
  %v2002 = vpop.f32.mrb[0].mxu0
  %v2003 = vpop.f32.mrb[0].mxu0
  %v2004 = vpop.f32.mrb[0].mxu0
  %2005 = vdwg.mxu0
  %v2006 = vadd.f32 %v1953, %v2001
  %v2007 = vxor.u32 %v2006, 2147483648
  %v2008 = vmul.f32 %v2007, 1.442695
  %v2009 = vpow.pop %v2008
  %v2010 = vadd.f32 %v2009, 1.0
  %v2011 = vrcp.pop %v2010
  %v2012 = vmul.f32 1.0, %v2011
  %v2013 = vld [vmem:[%s1500] sm:$0xff]
  %v2018 = vunpack.c.l.b16 %v1939
  %v2019 = vunpack.c.l.b16 %v1940
  %v2020 = vunpack.c.l.b16 %v1941
  %v2021 = vunpack.c.l.b16 %v1942
  %v2022 = vpack.c.b16 %v2019, %v2018
  %v2023 = vpack.c.b16 %v2021, %v2020
  %2026 = vmatprep.subr.bf16.mxu0 0
  %2027 = vmatpush1.bf16.msra.mxu0 %v2022
  %2028 = vmatprep.subr.bf16.mxu0 0
  %2029 = vmatpush1.bf16.msra.mxu0 %v2023
  %2030 = vmatprep.subr.bf16.mxu0 0
  %2031 = vmatpush1.bf16.msra.mxu0 0
  %2032 = vmatprep.subr.bf16.mxu0 0
  %2033 = vmatpush1.bf16.msra.mxu0 0
  %2034 = vmatprep.subr.bf16.mxu0 0
  %2035 = vmatpush1.bf16.msra.mxu0 0
  %2036 = vmatprep.subr.bf16.mxu0 0
  %2037 = vmatpush1.bf16.msra.mxu0 0
  %2038 = vmatprep.subr.bf16.mxu0 0
  %2039 = vmatpush1.bf16.msra.mxu0 0
  %2040 = vmatprep.subr.bf16.mxu0 0
  %2041 = vmatpush1.bf16.msra.mxu0 0
  %2042 = vmatprep.subr.bf16.mxu0 0
  %2043 = vmatpush1.bf16.msra.mxu0 0
  %2044 = vmatprep.subr.bf16.mxu0 0
  %2045 = vmatpush1.bf16.msra.mxu0 0
  %2046 = vmatprep.subr.bf16.mxu0 0
  %2047 = vmatpush1.bf16.msra.mxu0 0
  %2048 = vmatprep.subr.bf16.mxu0 0
  %2049 = vmatpush1.bf16.msra.mxu0 0
  %2050 = vmatprep.subr.bf16.mxu0 0
  %2051 = vmatpush1.bf16.msra.mxu0 0
  %2052 = vmatprep.subr.bf16.mxu0 0
  %2053 = vmatpush1.bf16.msra.mxu0 0
  %2054 = vmatprep.subr.bf16.mxu0 0
  %2055 = vmatpush1.bf16.msra.mxu0 0
  %2056 = vmatprep.subr.bf16.mxu0 0
  %2057 = vmatpush1.bf16.msra.mxu0 0
  %2058 = vmatprep.mubr.bf16.mxu0 0
  %2059 = vmatmul.mubr.bf16.gmra.mrb[0].mxu0 %v331
  %v2060 = vpop.f32.mrb[0].mxu0
  %v2061 = vadd.f32 0.0, %v2060
  %v2062 = vpop.f32.mrb[0].mxu0
  %v2063 = vpop.f32.mrb[0].mxu0
  %v2064 = vpop.f32.mrb[0].mxu0
  %2065 = vdwg.mxu0
  %v2066 = vadd.f32 %v2013, %v2061
  %v2067 = vxor.u32 %v2066, 2147483648
  %v2068 = vmul.f32 %v2067, 1.442695
  %v2069 = vpow.pop %v2068
  %v2070 = vadd.f32 %v2069, 1.0
  %v2071 = vrcp.pop %v2070
  %v2072 = vmul.f32 1.0, %v2071
  %v2073 = vld [vmem:[%s1712] sm:$0xff]
  %v2078 = vunpack.c.l.b16 %v1944
  %v2079 = vunpack.c.l.b16 %v1945
  %v2080 = vunpack.c.l.b16 %v1946
  %v2081 = vunpack.c.l.b16 %v1947
  %v2082 = vpack.c.b16 %v2079, %v2078
  %v2083 = vpack.c.b16 %v2081, %v2080
  %2086 = vmatprep.subr.bf16.mxu0 0
  %2087 = vmatpush1.bf16.msra.mxu0 %v2082
  %2088 = vmatprep.subr.bf16.mxu0 0
  %2089 = vmatpush1.bf16.msra.mxu0 %v2083
  %2090 = vmatprep.subr.bf16.mxu0 0
  %2091 = vmatpush1.bf16.msra.mxu0 0
  %2092 = vmatprep.subr.bf16.mxu0 0
  %2093 = vmatpush1.bf16.msra.mxu0 0
  %2094 = vmatprep.subr.bf16.mxu0 0
  %2095 = vmatpush1.bf16.msra.mxu0 0
  %2096 = vmatprep.subr.bf16.mxu0 0
  %2097 = vmatpush1.bf16.msra.mxu0 0
  %2098 = vmatprep.subr.bf16.mxu0 0
  %2099 = vmatpush1.bf16.msra.mxu0 0
  %2100 = vmatprep.subr.bf16.mxu0 0
  %2101 = vmatpush1.bf16.msra.mxu0 0
  %2102 = vmatprep.subr.bf16.mxu0 0
  %2103 = vmatpush1.bf16.msra.mxu0 0
  %2104 = vmatprep.subr.bf16.mxu0 0
  %2105 = vmatpush1.bf16.msra.mxu0 0
  %2106 = vmatprep.subr.bf16.mxu0 0
  %2107 = vmatpush1.bf16.msra.mxu0 0
  %2108 = vmatprep.subr.bf16.mxu0 0
  %2109 = vmatpush1.bf16.msra.mxu0 0
  %2110 = vmatprep.subr.bf16.mxu0 0
  %2111 = vmatpush1.bf16.msra.mxu0 0
  %2112 = vmatprep.subr.bf16.mxu0 0
  %2113 = vmatpush1.bf16.msra.mxu0 0
  %2114 = vmatprep.subr.bf16.mxu0 0
  %2115 = vmatpush1.bf16.msra.mxu0 0
  %2116 = vmatprep.subr.bf16.mxu0 0
  %2117 = vmatpush1.bf16.msra.mxu0 0
  %2118 = vmatprep.mubr.bf16.mxu0 0
  %2119 = vmatmul.mubr.bf16.gmra.mrb[0].mxu0 %v331
  %v2120 = vpop.f32.mrb[0].mxu0
  %v2121 = vadd.f32 0.0, %v2120
  %v2122 = vpop.f32.mrb[0].mxu0
  %v2123 = vpop.f32.mrb[0].mxu0
  %v2124 = vpop.f32.mrb[0].mxu0
  %2125 = vdwg.mxu0
  %v2126 = vadd.f32 %v2073, %v2121
  %v2127 = vtanh.pop %v2126
  %v2128 = vld [vmem:[%s1924] sm:$0xff]
  %v2133 = vunpack.c.l.b16 %v1949
  %v2134 = vunpack.c.l.b16 %v1950
  %v2135 = vunpack.c.l.b16 %v1951
  %v2136 = vunpack.c.l.b16 %v1952
  %v2137 = vpack.c.b16 %v2134, %v2133
  %v2138 = vpack.c.b16 %v2136, %v2135
  %2141 = vmatprep.subr.bf16.mxu0 0
  %2142 = vmatpush1.bf16.msra.mxu0 %v2137
  %2143 = vmatprep.subr.bf16.mxu0 0
  %2144 = vmatpush1.bf16.msra.mxu0 %v2138
  %2145 = vmatprep.subr.bf16.mxu0 0
  %2146 = vmatpush1.bf16.msra.mxu0 0
  %2147 = vmatprep.subr.bf16.mxu0 0
  %2148 = vmatpush1.bf16.msra.mxu0 0
  %2149 = vmatprep.subr.bf16.mxu0 0
  %2150 = vmatpush1.bf16.msra.mxu0 0
  %2151 = vmatprep.subr.bf16.mxu0 0
  %2152 = vmatpush1.bf16.msra.mxu0 0
  %2153 = vmatprep.subr.bf16.mxu0 0
  %2154 = vmatpush1.bf16.msra.mxu0 0
  %2155 = vmatprep.subr.bf16.mxu0 0
  %2156 = vmatpush1.bf16.msra.mxu0 0
  %2157 = vmatprep.subr.bf16.mxu0 0
  %2158 = vmatpush1.bf16.msra.mxu0 0
  %2159 = vmatprep.subr.bf16.mxu0 0
  %2160 = vmatpush1.bf16.msra.mxu0 0
  %2161 = vmatprep.subr.bf16.mxu0 0
  %2162 = vmatpush1.bf16.msra.mxu0 0
  %2163 = vmatprep.subr.bf16.mxu0 0
  %2164 = vmatpush1.bf16.msra.mxu0 0
  %2165 = vmatprep.subr.bf16.mxu0 0
  %2166 = vmatpush1.bf16.msra.mxu0 0
  %2167 = vmatprep.subr.bf16.mxu0 0
  %2168 = vmatpush1.bf16.msra.mxu0 0
  %2169 = vmatprep.subr.bf16.mxu0 0
  %2170 = vmatpush1.bf16.msra.mxu0 0
  %2171 = vmatprep.subr.bf16.mxu0 0
  %2172 = vmatpush1.bf16.msra.mxu0 0
  %2173 = vmatprep.mubr.bf16.mxu0 0
  %2174 = vmatmul.mubr.bf16.gmra.mrb[0].mxu0 %v331
  %v2175 = vpop.f32.mrb[0].mxu0
  %v2176 = vadd.f32 0.0, %v2175
  %v2177 = vpop.f32.mrb[0].mxu0
  %v2178 = vpop.f32.mrb[0].mxu0
  %v2179 = vpop.f32.mrb[0].mxu0
  %2180 = vdwg.mxu0
  %v2181 = vadd.f32 %v2128, %v2176
  %v2182 = vxor.u32 %v2181, 2147483648
  %v2183 = vmul.f32 %v2182, 1.442695
  %v2184 = vpow.pop %v2183
  %v2185 = vadd.f32 %v2184, 1.0
  %v2186 = vrcp.pop %v2185
  %v2187 = vmul.f32 1.0, %v2186
  %v2188 = vmul.f32 %v2072, %v303
  %v2189 = vmul.f32 %v2012, %v2127
  %v2190 = vadd.f32 %v2188, %v2189
  %v2191 = vtanh.pop %v2190
  %v2192 = vmul.f32 %v2187, %v2191
  %2193 = vst.msk [vmem:[%s7] sm:$0xff] %vm80, %v2192
  %v2194 = vpack.c.bf16 %v2192, %v2192
  %s2195 = scalar_lea.vmem [#allocation2], 8
  %v2196 = vld [vmem:[%s2195] sm:$0xff]
  %v2198 = vsel %vm80, %v2194, 0
  %2200 = vmatprep.subr.bf16.mxu0 0
  %2201 = vmatpush1.bf16.msra.mxu0 %v1962
  %2202 = vmatprep.subr.bf16.mxu0 0
  %2203 = vmatpush1.bf16.msra.mxu0 %v1963
  %2204 = vmatprep.subr.bf16.mxu0 0
  %2205 = vmatpush1.bf16.msra.mxu0 0
  %2206 = vmatprep.subr.bf16.mxu0 0
  %2207 = vmatpush1.bf16.msra.mxu0 0
  %2208 = vmatprep.subr.bf16.mxu0 0
  %2209 = vmatpush1.bf16.msra.mxu0 0
  %2210 = vmatprep.subr.bf16.mxu0 0
  %2211 = vmatpush1.bf16.msra.mxu0 0
  %2212 = vmatprep.subr.bf16.mxu0 0
  %2213 = vmatpush1.bf16.msra.mxu0 0
  %2214 = vmatprep.subr.bf16.mxu0 0
  %2215 = vmatpush1.bf16.msra.mxu0 0
  %2216 = vmatprep.subr.bf16.mxu0 0
  %2217 = vmatpush1.bf16.msra.mxu0 0
  %2218 = vmatprep.subr.bf16.mxu0 0
  %2219 = vmatpush1.bf16.msra.mxu0 0
  %2220 = vmatprep.subr.bf16.mxu0 0
  %2221 = vmatpush1.bf16.msra.mxu0 0
  %2222 = vmatprep.subr.bf16.mxu0 0
  %2223 = vmatpush1.bf16.msra.mxu0 0
  %2224 = vmatprep.subr.bf16.mxu0 0
  %2225 = vmatpush1.bf16.msra.mxu0 0
  %2226 = vmatprep.subr.bf16.mxu0 0
  %2227 = vmatpush1.bf16.msra.mxu0 0
  %2228 = vmatprep.subr.bf16.mxu0 0
  %2229 = vmatpush1.bf16.msra.mxu0 0
  %2230 = vmatprep.subr.bf16.mxu0 0
  %2231 = vmatpush1.bf16.msra.mxu0 0
  %2232 = vmatprep.mubr.bf16.mxu0 0
  %2233 = vmatmul.mubr.bf16.gmra.mrb[0].mxu0 %v2198
  %v2234 = vpop.f32.mrb[0].mxu0
  %v2235 = vadd.f32 0.0, %v2234
  %v2236 = vpop.f32.mrb[0].mxu0
  %v2237 = vpop.f32.mrb[0].mxu0
  %v2238 = vpop.f32.mrb[0].mxu0
  %2239 = vdwg.mxu0
  %v2240 = vadd.f32 %v2196, %v2235
  %v2241 = vxor.u32 %v2240, 2147483648
  %v2242 = vmul.f32 %v2241, 1.442695
  %v2243 = vpow.pop %v2242
  %v2244 = vadd.f32 %v2243, 1.0
  %v2245 = vrcp.pop %v2244
  %v2246 = vmul.f32 1.0, %v2245
  %s2247 = scalar_lea.vmem [#allocation2], 72
  %v2248 = vld [vmem:[%s2247] sm:$0xff]
  %2249 = vmatprep.subr.bf16.mxu0 0
  %2250 = vmatpush1.bf16.msra.mxu0 %v2022
  %2251 = vmatprep.subr.bf16.mxu0 0
  %2252 = vmatpush1.bf16.msra.mxu0 %v2023
  %2253 = vmatprep.subr.bf16.mxu0 0
  %2254 = vmatpush1.bf16.msra.mxu0 0
  %2255 = vmatprep.subr.bf16.mxu0 0
  %2256 = vmatpush1.bf16.msra.mxu0 0
  %2257 = vmatprep.subr.bf16.mxu0 0
  %2258 = vmatpush1.bf16.msra.mxu0 0
  %2259 = vmatprep.subr.bf16.mxu0 0
  %2260 = vmatpush1.bf16.msra.mxu0 0
  %2261 = vmatprep.subr.bf16.mxu0 0
  %2262 = vmatpush1.bf16.msra.mxu0 0
  %2263 = vmatprep.subr.bf16.mxu0 0
  %2264 = vmatpush1.bf16.msra.mxu0 0
  %2265 = vmatprep.subr.bf16.mxu0 0
  %2266 = vmatpush1.bf16.msra.mxu0 0
  %2267 = vmatprep.subr.bf16.mxu0 0
  %2268 = vmatpush1.bf16.msra.mxu0 0
  %2269 = vmatprep.subr.bf16.mxu0 0
  %2270 = vmatpush1.bf16.msra.mxu0 0
  %2271 = vmatprep.subr.bf16.mxu0 0
  %2272 = vmatpush1.bf16.msra.mxu0 0
  %2273 = vmatprep.subr.bf16.mxu0 0
  %2274 = vmatpush1.bf16.msra.mxu0 0
  %2275 = vmatprep.subr.bf16.mxu0 0
  %2276 = vmatpush1.bf16.msra.mxu0 0
  %2277 = vmatprep.subr.bf16.mxu0 0
  %2278 = vmatpush1.bf16.msra.mxu0 0
  %2279 = vmatprep.subr.bf16.mxu0 0
  %2280 = vmatpush1.bf16.msra.mxu0 0
  %2281 = vmatprep.mubr.bf16.mxu0 0
  %2282 = vmatmul.mubr.bf16.gmra.mrb[0].mxu0 %v2198
  %v2283 = vpop.f32.mrb[0].mxu0
  %v2284 = vadd.f32 0.0, %v2283
  %v2285 = vpop.f32.mrb[0].mxu0
  %v2286 = vpop.f32.mrb[0].mxu0
  %v2287 = vpop.f32.mrb[0].mxu0
  %2288 = vdwg.mxu0
  %v2289 = vadd.f32 %v2248, %v2284
  %v2290 = vxor.u32 %v2289, 2147483648
  %v2291 = vmul.f32 %v2290, 1.442695
  %v2292 = vpow.pop %v2291
  %v2293 = vadd.f32 %v2292, 1.0
  %v2294 = vrcp.pop %v2293
  %v2295 = vmul.f32 1.0, %v2294
  %s2296 = scalar_lea.vmem [#allocation2], 136
  %v2297 = vld [vmem:[%s2296] sm:$0xff]
  %2298 = vmatprep.subr.bf16.mxu0 0
  %2299 = vmatpush1.bf16.msra.mxu0 %v2082
  %2300 = vmatprep.subr.bf16.mxu0 0
  %2301 = vmatpush1.bf16.msra.mxu0 %v2083
  %2302 = vmatprep.subr.bf16.mxu0 0
  %2303 = vmatpush1.bf16.msra.mxu0 0
  %2304 = vmatprep.subr.bf16.mxu0 0
  %2305 = vmatpush1.bf16.msra.mxu0 0
  %2306 = vmatprep.subr.bf16.mxu0 0
  %2307 = vmatpush1.bf16.msra.mxu0 0
  %2308 = vmatprep.subr.bf16.mxu0 0
  %2309 = vmatpush1.bf16.msra.mxu0 0
  %2310 = vmatprep.subr.bf16.mxu0 0
  %2311 = vmatpush1.bf16.msra.mxu0 0
  %2312 = vmatprep.subr.bf16.mxu0 0
  %2313 = vmatpush1.bf16.msra.mxu0 0
  %2314 = vmatprep.subr.bf16.mxu0 0
  %2315 = vmatpush1.bf16.msra.mxu0 0
  %2316 = vmatprep.subr.bf16.mxu0 0
  %2317 = vmatpush1.bf16.msra.mxu0 0
  %2318 = vmatprep.subr.bf16.mxu0 0
  %2319 = vmatpush1.bf16.msra.mxu0 0
  %2320 = vmatprep.subr.bf16.mxu0 0
  %2321 = vmatpush1.bf16.msra.mxu0 0
  %2322 = vmatprep.subr.bf16.mxu0 0
  %2323 = vmatpush1.bf16.msra.mxu0 0
  %2324 = vmatprep.subr.bf16.mxu0 0
  %2325 = vmatpush1.bf16.msra.mxu0 0
  %2326 = vmatprep.subr.bf16.mxu0 0
  %2327 = vmatpush1.bf16.msra.mxu0 0
  %2328 = vmatprep.subr.bf16.mxu0 0
  %2329 = vmatpush1.bf16.msra.mxu0 0
  %2330 = vmatprep.mubr.bf16.mxu0 0
  %2331 = vmatmul.mubr.bf16.gmra.mrb[0].mxu0 %v2198
  %v2332 = vpop.f32.mrb[0].mxu0
  %v2333 = vadd.f32 0.0, %v2332
  %v2334 = vpop.f32.mrb[0].mxu0
  %v2335 = vpop.f32.mrb[0].mxu0
  %v2336 = vpop.f32.mrb[0].mxu0
  %2337 = vdwg.mxu0
  %v2338 = vadd.f32 %v2297, %v2333
  %v2339 = vtanh.pop %v2338
  %s2340 = scalar_lea.vmem [#allocation2], 200
  %v2341 = vld [vmem:[%s2340] sm:$0xff]
  %2342 = vmatprep.subr.bf16.mxu0 0
  %2343 = vmatpush1.bf16.msra.mxu0 %v2137
  %2344 = vmatprep.subr.bf16.mxu0 0
  %2345 = vmatpush1.bf16.msra.mxu0 %v2138
  %2346 = vmatprep.subr.bf16.mxu0 0
  %2347 = vmatpush1.bf16.msra.mxu0 0
  %2348 = vmatprep.subr.bf16.mxu0 0
  %2349 = vmatpush1.bf16.msra.mxu0 0
  %2350 = vmatprep.subr.bf16.mxu0 0
  %2351 = vmatpush1.bf16.msra.mxu0 0
  %2352 = vmatprep.subr.bf16.mxu0 0
  %2353 = vmatpush1.bf16.msra.mxu0 0
  %2354 = vmatprep.subr.bf16.mxu0 0
  %2355 = vmatpush1.bf16.msra.mxu0 0
  %2356 = vmatprep.subr.bf16.mxu0 0
  %2357 = vmatpush1.bf16.msra.mxu0 0
  %2358 = vmatprep.subr.bf16.mxu0 0
  %2359 = vmatpush1.bf16.msra.mxu0 0
  %2360 = vmatprep.subr.bf16.mxu0 0
  %2361 = vmatpush1.bf16.msra.mxu0 0
  %2362 = vmatprep.subr.bf16.mxu0 0
  %2363 = vmatpush1.bf16.msra.mxu0 0
  %2364 = vmatprep.subr.bf16.mxu0 0
  %2365 = vmatpush1.bf16.msra.mxu0 0
  %2366 = vmatprep.subr.bf16.mxu0 0
  %2367 = vmatpush1.bf16.msra.mxu0 0
  %2368 = vmatprep.subr.bf16.mxu0 0
  %2369 = vmatpush1.bf16.msra.mxu0 0
  %2370 = vmatprep.subr.bf16.mxu0 0
  %2371 = vmatpush1.bf16.msra.mxu0 0
  %2372 = vmatprep.subr.bf16.mxu0 0
  %2373 = vmatpush1.bf16.msra.mxu0 0
  %2374 = vmatprep.mubr.bf16.mxu0 0
  %2375 = vmatmul.mubr.bf16.gmra.mrb[0].mxu0 %v2198
  %v2376 = vpop.f32.mrb[0].mxu0
  %v2377 = vadd.f32 0.0, %v2376
  %v2378 = vpop.f32.mrb[0].mxu0
  %v2379 = vpop.f32.mrb[0].mxu0
  %v2380 = vpop.f32.mrb[0].mxu0
  %2381 = vdwg.mxu0
  %v2382 = vadd.f32 %v2341, %v2377
  %v2383 = vxor.u32 %v2382, 2147483648
  %v2384 = vmul.f32 %v2383, 1.442695
  %v2385 = vpow.pop %v2384
  %v2386 = vadd.f32 %v2385, 1.0
  %v2387 = vrcp.pop %v2386
  %v2388 = vmul.f32 1.0, %v2387
  %v2389 = vmul.f32 %v2295, %v2190
  %v2390 = vmul.f32 %v2246, %v2339
  %v2391 = vadd.f32 %v2389, %v2390
  %v2392 = vtanh.pop %v2391
  %v2393 = vmul.f32 %v2388, %v2392
  %s2394 = scalar_lea.vmem %s7, 8
  %2395 = vst.msk [vmem:[%s2394] sm:$0xff] %vm80, %v2393
  %v2396 = vpack.c.bf16 %v2393, %v2393
  %s2397 = scalar_lea.vmem [#allocation2], 16
  %v2398 = vld [vmem:[%s2397] sm:$0xff]
  %v2400 = vsel %vm80, %v2396, 0
  %2402 = vmatprep.subr.bf16.mxu0 0
  %2403 = vmatpush1.bf16.msra.mxu0 %v1962
  %2404 = vmatprep.subr.bf16.mxu0 0
  %2405 = vmatpush1.bf16.msra.mxu0 %v1963
  %2406 = vmatprep.subr.bf16.mxu0 0
  %2407 = vmatpush1.bf16.msra.mxu0 0
  %2408 = vmatprep.subr.bf16.mxu0 0
  %2409 = vmatpush1.bf16.msra.mxu0 0
  %2410 = vmatprep.subr.bf16.mxu0 0
  %2411 = vmatpush1.bf16.msra.mxu0 0
  %2412 = vmatprep.subr.bf16.mxu0 0
  %2413 = vmatpush1.bf16.msra.mxu0 0
  %2414 = vmatprep.subr.bf16.mxu0 0
  %2415 = vmatpush1.bf16.msra.mxu0 0
  %2416 = vmatprep.subr.bf16.mxu0 0
  %2417 = vmatpush1.bf16.msra.mxu0 0
  %2418 = vmatprep.subr.bf16.mxu0 0
  %2419 = vmatpush1.bf16.msra.mxu0 0
  %2420 = vmatprep.subr.bf16.mxu0 0
  %2421 = vmatpush1.bf16.msra.mxu0 0
  %2422 = vmatprep.subr.bf16.mxu0 0
  %2423 = vmatpush1.bf16.msra.mxu0 0
  %2424 = vmatprep.subr.bf16.mxu0 0
  %2425 = vmatpush1.bf16.msra.mxu0 0
  %2426 = vmatprep.subr.bf16.mxu0 0
  %2427 = vmatpush1.bf16.msra.mxu0 0
  %2428 = vmatprep.subr.bf16.mxu0 0
  %2429 = vmatpush1.bf16.msra.mxu0 0
  %2430 = vmatprep.subr.bf16.mxu0 0
  %2431 = vmatpush1.bf16.msra.mxu0 0
  %2432 = vmatprep.subr.bf16.mxu0 0
  %2433 = vmatpush1.bf16.msra.mxu0 0
  %2434 = vmatprep.mubr.bf16.mxu0 0
  %2435 = vmatmul.mubr.bf16.gmra.mrb[0].mxu0 %v2400
  %v2436 = vpop.f32.mrb[0].mxu0
  %v2437 = vadd.f32 0.0, %v2436
  %v2438 = vpop.f32.mrb[0].mxu0
  %v2439 = vpop.f32.mrb[0].mxu0
  %v2440 = vpop.f32.mrb[0].mxu0
  %2441 = vdwg.mxu0
  %v2442 = vadd.f32 %v2398, %v2437
  %v2443 = vxor.u32 %v2442, 2147483648
  %v2444 = vmul.f32 %v2443, 1.442695
  %v2445 = vpow.pop %v2444
  %v2446 = vadd.f32 %v2445, 1.0
  %v2447 = vrcp.pop %v2446
  %v2448 = vmul.f32 1.0, %v2447
  %s2449 = scalar_lea.vmem [#allocation2], 80
  %v2450 = vld [vmem:[%s2449] sm:$0xff]
  %2451 = vmatprep.subr.bf16.mxu0 0
  %2452 = vmatpush1.bf16.msra.mxu0 %v2022
  %2453 = vmatprep.subr.bf16.mxu0 0
  %2454 = vmatpush1.bf16.msra.mxu0 %v2023
  %2455 = vmatprep.subr.bf16.mxu0 0
  %2456 = vmatpush1.bf16.msra.mxu0 0
  %2457 = vmatprep.subr.bf16.mxu0 0
  %2458 = vmatpush1.bf16.msra.mxu0 0
  %2459 = vmatprep.subr.bf16.mxu0 0
  %2460 = vmatpush1.bf16.msra.mxu0 0
  %2461 = vmatprep.subr.bf16.mxu0 0
  %2462 = vmatpush1.bf16.msra.mxu0 0
  %2463 = vmatprep.subr.bf16.mxu0 0
  %2464 = vmatpush1.bf16.msra.mxu0 0
  %2465 = vmatprep.subr.bf16.mxu0 0
  %2466 = vmatpush1.bf16.msra.mxu0 0
  %2467 = vmatprep.subr.bf16.mxu0 0
  %2468 = vmatpush1.bf16.msra.mxu0 0
  %2469 = vmatprep.subr.bf16.mxu0 0
  %2470 = vmatpush1.bf16.msra.mxu0 0
  %2471 = vmatprep.subr.bf16.mxu0 0
  %2472 = vmatpush1.bf16.msra.mxu0 0
  %2473 = vmatprep.subr.bf16.mxu0 0
  %2474 = vmatpush1.bf16.msra.mxu0 0
  %2475 = vmatprep.subr.bf16.mxu0 0
  %2476 = vmatpush1.bf16.msra.mxu0 0
  %2477 = vmatprep.subr.bf16.mxu0 0
  %2478 = vmatpush1.bf16.msra.mxu0 0
  %2479 = vmatprep.subr.bf16.mxu0 0
  %2480 = vmatpush1.bf16.msra.mxu0 0
  %2481 = vmatprep.subr.bf16.mxu0 0
  %2482 = vmatpush1.bf16.msra.mxu0 0
  %2483 = vmatprep.mubr.bf16.mxu0 0
  %2484 = vmatmul.mubr.bf16.gmra.mrb[0].mxu0 %v2400
  %v2485 = vpop.f32.mrb[0].mxu0
  %v2486 = vadd.f32 0.0, %v2485
  %v2487 = vpop.f32.mrb[0].mxu0
  %v2488 = vpop.f32.mrb[0].mxu0
  %v2489 = vpop.f32.mrb[0].mxu0
  %2490 = vdwg.mxu0
  %v2491 = vadd.f32 %v2450, %v2486
  %v2492 = vxor.u32 %v2491, 2147483648
  %v2493 = vmul.f32 %v2492, 1.442695
  %v2494 = vpow.pop %v2493
  %v2495 = vadd.f32 %v2494, 1.0
  %v2496 = vrcp.pop %v2495
  %v2497 = vmul.f32 1.0, %v2496
  %s2498 = scalar_lea.vmem [#allocation2], 144
  %v2499 = vld [vmem:[%s2498] sm:$0xff]
  %2500 = vmatprep.subr.bf16.mxu0 0
  %2501 = vmatpush1.bf16.msra.mxu0 %v2082
  %2502 = vmatprep.subr.bf16.mxu0 0
  %2503 = vmatpush1.bf16.msra.mxu0 %v2083
  %2504 = vmatprep.subr.bf16.mxu0 0
  %2505 = vmatpush1.bf16.msra.mxu0 0
  %2506 = vmatprep.subr.bf16.mxu0 0
  %2507 = vmatpush1.bf16.msra.mxu0 0
  %2508 = vmatprep.subr.bf16.mxu0 0
  %2509 = vmatpush1.bf16.msra.mxu0 0
  %2510 = vmatprep.subr.bf16.mxu0 0
  %2511 = vmatpush1.bf16.msra.mxu0 0
  %2512 = vmatprep.subr.bf16.mxu0 0
  %2513 = vmatpush1.bf16.msra.mxu0 0
  %2514 = vmatprep.subr.bf16.mxu0 0
  %2515 = vmatpush1.bf16.msra.mxu0 0
  %2516 = vmatprep.subr.bf16.mxu0 0
  %2517 = vmatpush1.bf16.msra.mxu0 0
  %2518 = vmatprep.subr.bf16.mxu0 0
  %2519 = vmatpush1.bf16.msra.mxu0 0
  %2520 = vmatprep.subr.bf16.mxu0 0
  %2521 = vmatpush1.bf16.msra.mxu0 0
  %2522 = vmatprep.subr.bf16.mxu0 0
  %2523 = vmatpush1.bf16.msra.mxu0 0
  %2524 = vmatprep.subr.bf16.mxu0 0
  %2525 = vmatpush1.bf16.msra.mxu0 0
  %2526 = vmatprep.subr.bf16.mxu0 0
  %2527 = vmatpush1.bf16.msra.mxu0 0
  %2528 = vmatprep.subr.bf16.mxu0 0
  %2529 = vmatpush1.bf16.msra.mxu0 0
  %2530 = vmatprep.subr.bf16.mxu0 0
  %2531 = vmatpush1.bf16.msra.mxu0 0
  %2532 = vmatprep.mubr.bf16.mxu0 0
  %2533 = vmatmul.mubr.bf16.gmra.mrb[0].mxu0 %v2400
  %v2534 = vpop.f32.mrb[0].mxu0
  %v2535 = vadd.f32 0.0, %v2534
  %v2536 = vpop.f32.mrb[0].mxu0
  %v2537 = vpop.f32.mrb[0].mxu0
  %v2538 = vpop.f32.mrb[0].mxu0
  %2539 = vdwg.mxu0
  %v2540 = vadd.f32 %v2499, %v2535
  %v2541 = vtanh.pop %v2540
  %s2542 = scalar_lea.vmem [#allocation2], 208
  %v2543 = vld [vmem:[%s2542] sm:$0xff]
  %2544 = vmatprep.subr.bf16.mxu0 0
  %2545 = vmatpush1.bf16.msra.mxu0 %v2137
  %2546 = vmatprep.subr.bf16.mxu0 0
  %2547 = vmatpush1.bf16.msra.mxu0 %v2138
  %2548 = vmatprep.subr.bf16.mxu0 0
  %2549 = vmatpush1.bf16.msra.mxu0 0
  %2550 = vmatprep.subr.bf16.mxu0 0
  %2551 = vmatpush1.bf16.msra.mxu0 0
  %2552 = vmatprep.subr.bf16.mxu0 0
  %2553 = vmatpush1.bf16.msra.mxu0 0
  %2554 = vmatprep.subr.bf16.mxu0 0
  %2555 = vmatpush1.bf16.msra.mxu0 0
  %2556 = vmatprep.subr.bf16.mxu0 0
  %2557 = vmatpush1.bf16.msra.mxu0 0
  %2558 = vmatprep.subr.bf16.mxu0 0
  %2559 = vmatpush1.bf16.msra.mxu0 0
  %2560 = vmatprep.subr.bf16.mxu0 0
  %2561 = vmatpush1.bf16.msra.mxu0 0
  %2562 = vmatprep.subr.bf16.mxu0 0
  %2563 = vmatpush1.bf16.msra.mxu0 0
  %2564 = vmatprep.subr.bf16.mxu0 0
  %2565 = vmatpush1.bf16.msra.mxu0 0
  %2566 = vmatprep.subr.bf16.mxu0 0
  %2567 = vmatpush1.bf16.msra.mxu0 0
  %2568 = vmatprep.subr.bf16.mxu0 0
  %2569 = vmatpush1.bf16.msra.mxu0 0
  %2570 = vmatprep.subr.bf16.mxu0 0
  %2571 = vmatpush1.bf16.msra.mxu0 0
  %2572 = vmatprep.subr.bf16.mxu0 0
  %2573 = vmatpush1.bf16.msra.mxu0 0
  %2574 = vmatprep.subr.bf16.mxu0 0
  %2575 = vmatpush1.bf16.msra.mxu0 0
  %2576 = vmatprep.mubr.bf16.mxu0 0
  %2577 = vmatmul.mubr.bf16.gmra.mrb[0].mxu0 %v2400
  %v2578 = vpop.f32.mrb[0].mxu0
  %v2579 = vadd.f32 0.0, %v2578
  %v2580 = vpop.f32.mrb[0].mxu0
  %v2581 = vpop.f32.mrb[0].mxu0
  %v2582 = vpop.f32.mrb[0].mxu0
  %2583 = vdwg.mxu0
  %v2584 = vadd.f32 %v2543, %v2579
  %v2585 = vxor.u32 %v2584, 2147483648
  %v2586 = vmul.f32 %v2585, 1.442695
  %v2587 = vpow.pop %v2586
  %v2588 = vadd.f32 %v2587, 1.0
  %v2589 = vrcp.pop %v2588
  %v2590 = vmul.f32 1.0, %v2589
  %v2591 = vmul.f32 %v2497, %v2391
  %v2592 = vmul.f32 %v2448, %v2541
  %v2593 = vadd.f32 %v2591, %v2592
  %v2594 = vtanh.pop %v2593
  %v2595 = vmul.f32 %v2590, %v2594
  %s2596 = scalar_lea.vmem %s7, 16
  %2597 = vst.msk [vmem:[%s2596] sm:$0xff] %vm80, %v2595
  %v2598 = vpack.c.bf16 %v2595, %v2595
  %s2599 = scalar_lea.vmem [#allocation2], 24
  %v2600 = vld [vmem:[%s2599] sm:$0xff]
  %v2602 = vsel %vm80, %v2598, 0
  %2604 = vmatprep.subr.bf16.mxu0 0
  %2605 = vmatpush1.bf16.msra.mxu0 %v1962
  %2606 = vmatprep.subr.bf16.mxu0 0
  %2607 = vmatpush1.bf16.msra.mxu0 %v1963
  %2608 = vmatprep.subr.bf16.mxu0 0
  %2609 = vmatpush1.bf16.msra.mxu0 0
  %2610 = vmatprep.subr.bf16.mxu0 0
  %2611 = vmatpush1.bf16.msra.mxu0 0
  %2612 = vmatprep.subr.bf16.mxu0 0
  %2613 = vmatpush1.bf16.msra.mxu0 0
  %2614 = vmatprep.subr.bf16.mxu0 0
  %2615 = vmatpush1.bf16.msra.mxu0 0
  %2616 = vmatprep.subr.bf16.mxu0 0
  %2617 = vmatpush1.bf16.msra.mxu0 0
  %2618 = vmatprep.subr.bf16.mxu0 0
  %2619 = vmatpush1.bf16.msra.mxu0 0
  %2620 = vmatprep.subr.bf16.mxu0 0
  %2621 = vmatpush1.bf16.msra.mxu0 0
  %2622 = vmatprep.subr.bf16.mxu0 0
  %2623 = vmatpush1.bf16.msra.mxu0 0
  %2624 = vmatprep.subr.bf16.mxu0 0
  %2625 = vmatpush1.bf16.msra.mxu0 0
  %2626 = vmatprep.subr.bf16.mxu0 0
  %2627 = vmatpush1.bf16.msra.mxu0 0
  %2628 = vmatprep.subr.bf16.mxu0 0
  %2629 = vmatpush1.bf16.msra.mxu0 0
  %2630 = vmatprep.subr.bf16.mxu0 0
  %2631 = vmatpush1.bf16.msra.mxu0 0
  %2632 = vmatprep.subr.bf16.mxu0 0
  %2633 = vmatpush1.bf16.msra.mxu0 0
  %2634 = vmatprep.subr.bf16.mxu0 0
  %2635 = vmatpush1.bf16.msra.mxu0 0
  %2636 = vmatprep.mubr.bf16.mxu0 0
  %2637 = vmatmul.mubr.bf16.gmra.mrb[0].mxu0 %v2602
  %v2638 = vpop.f32.mrb[0].mxu0
  %v2639 = vadd.f32 0.0, %v2638
  %v2640 = vpop.f32.mrb[0].mxu0
  %v2641 = vpop.f32.mrb[0].mxu0
  %v2642 = vpop.f32.mrb[0].mxu0
  %2643 = vdwg.mxu0
  %v2644 = vadd.f32 %v2600, %v2639
  %v2645 = vxor.u32 %v2644, 2147483648
  %v2646 = vmul.f32 %v2645, 1.442695
  %v2647 = vpow.pop %v2646
  %v2648 = vadd.f32 %v2647, 1.0
  %v2649 = vrcp.pop %v2648
  %v2650 = vmul.f32 1.0, %v2649
  %s2651 = scalar_lea.vmem [#allocation2], 88
  %v2652 = vld [vmem:[%s2651] sm:$0xff]
  %2653 = vmatprep.subr.bf16.mxu0 0
  %2654 = vmatpush1.bf16.msra.mxu0 %v2022
  %2655 = vmatprep.subr.bf16.mxu0 0
  %2656 = vmatpush1.bf16.msra.mxu0 %v2023
  %2657 = vmatprep.subr.bf16.mxu0 0
  %2658 = vmatpush1.bf16.msra.mxu0 0
  %2659 = vmatprep.subr.bf16.mxu0 0
  %2660 = vmatpush1.bf16.msra.mxu0 0
  %2661 = vmatprep.subr.bf16.mxu0 0
  %2662 = vmatpush1.bf16.msra.mxu0 0
  %2663 = vmatprep.subr.bf16.mxu0 0
  %2664 = vmatpush1.bf16.msra.mxu0 0
  %2665 = vmatprep.subr.bf16.mxu0 0
  %2666 = vmatpush1.bf16.msra.mxu0 0
  %2667 = vmatprep.subr.bf16.mxu0 0
  %2668 = vmatpush1.bf16.msra.mxu0 0
  %2669 = vmatprep.subr.bf16.mxu0 0
  %2670 = vmatpush1.bf16.msra.mxu0 0
  %2671 = vmatprep.subr.bf16.mxu0 0
  %2672 = vmatpush1.bf16.msra.mxu0 0
  %2673 = vmatprep.subr.bf16.mxu0 0
  %2674 = vmatpush1.bf16.msra.mxu0 0
  %2675 = vmatprep.subr.bf16.mxu0 0
  %2676 = vmatpush1.bf16.msra.mxu0 0
  %2677 = vmatprep.subr.bf16.mxu0 0
  %2678 = vmatpush1.bf16.msra.mxu0 0
  %2679 = vmatprep.subr.bf16.mxu0 0
  %2680 = vmatpush1.bf16.msra.mxu0 0
  %2681 = vmatprep.subr.bf16.mxu0 0
  %2682 = vmatpush1.bf16.msra.mxu0 0
  %2683 = vmatprep.subr.bf16.mxu0 0
  %2684 = vmatpush1.bf16.msra.mxu0 0
  %2685 = vmatprep.mubr.bf16.mxu0 0
  %2686 = vmatmul.mubr.bf16.gmra.mrb[0].mxu0 %v2602
  %v2687 = vpop.f32.mrb[0].mxu0
  %v2688 = vadd.f32 0.0, %v2687
  %v2689 = vpop.f32.mrb[0].mxu0
  %v2690 = vpop.f32.mrb[0].mxu0
  %v2691 = vpop.f32.mrb[0].mxu0
  %2692 = vdwg.mxu0
  %v2693 = vadd.f32 %v2652, %v2688
  %v2694 = vxor.u32 %v2693, 2147483648
  %v2695 = vmul.f32 %v2694, 1.442695
  %v2696 = vpow.pop %v2695
  %v2697 = vadd.f32 %v2696, 1.0
  %v2698 = vrcp.pop %v2697
  %v2699 = vmul.f32 1.0, %v2698
  %s2700 = scalar_lea.vmem [#allocation2], 152
  %v2701 = vld [vmem:[%s2700] sm:$0xff]
  %2702 = vmatprep.subr.bf16.mxu0 0
  %2703 = vmatpush1.bf16.msra.mxu0 %v2082
  %2704 = vmatprep.subr.bf16.mxu0 0
  %2705 = vmatpush1.bf16.msra.mxu0 %v2083
  %2706 = vmatprep.subr.bf16.mxu0 0
  %2707 = vmatpush1.bf16.msra.mxu0 0
  %2708 = vmatprep.subr.bf16.mxu0 0
  %2709 = vmatpush1.bf16.msra.mxu0 0
  %2710 = vmatprep.subr.bf16.mxu0 0
  %2711 = vmatpush1.bf16.msra.mxu0 0
  %2712 = vmatprep.subr.bf16.mxu0 0
  %2713 = vmatpush1.bf16.msra.mxu0 0
  %2714 = vmatprep.subr.bf16.mxu0 0
  %2715 = vmatpush1.bf16.msra.mxu0 0
  %2716 = vmatprep.subr.bf16.mxu0 0
  %2717 = vmatpush1.bf16.msra.mxu0 0
  %2718 = vmatprep.subr.bf16.mxu0 0
  %2719 = vmatpush1.bf16.msra.mxu0 0
  %2720 = vmatprep.subr.bf16.mxu0 0
  %2721 = vmatpush1.bf16.msra.mxu0 0
  %2722 = vmatprep.subr.bf16.mxu0 0
  %2723 = vmatpush1.bf16.msra.mxu0 0
  %2724 = vmatprep.subr.bf16.mxu0 0
  %2725 = vmatpush1.bf16.msra.mxu0 0
  %2726 = vmatprep.subr.bf16.mxu0 0
  %2727 = vmatpush1.bf16.msra.mxu0 0
  %2728 = vmatprep.subr.bf16.mxu0 0
  %2729 = vmatpush1.bf16.msra.mxu0 0
  %2730 = vmatprep.subr.bf16.mxu0 0
  %2731 = vmatpush1.bf16.msra.mxu0 0
  %2732 = vmatprep.subr.bf16.mxu0 0
  %2733 = vmatpush1.bf16.msra.mxu0 0
  %2734 = vmatprep.mubr.bf16.mxu0 0
  %2735 = vmatmul.mubr.bf16.gmra.mrb[0].mxu0 %v2602
  %v2736 = vpop.f32.mrb[0].mxu0
  %v2737 = vadd.f32 0.0, %v2736
  %v2738 = vpop.f32.mrb[0].mxu0
  %v2739 = vpop.f32.mrb[0].mxu0
  %v2740 = vpop.f32.mrb[0].mxu0
  %2741 = vdwg.mxu0
  %v2742 = vadd.f32 %v2701, %v2737
  %v2743 = vtanh.pop %v2742
  %s2744 = scalar_lea.vmem [#allocation2], 216
  %v2745 = vld [vmem:[%s2744] sm:$0xff]
  %2746 = vmatprep.subr.bf16.mxu0 0
  %2747 = vmatpush1.bf16.msra.mxu0 %v2137
  %2748 = vmatprep.subr.bf16.mxu0 0
  %2749 = vmatpush1.bf16.msra.mxu0 %v2138
  %2750 = vmatprep.subr.bf16.mxu0 0
  %2751 = vmatpush1.bf16.msra.mxu0 0
  %2752 = vmatprep.subr.bf16.mxu0 0
  %2753 = vmatpush1.bf16.msra.mxu0 0
  %2754 = vmatprep.subr.bf16.mxu0 0
  %2755 = vmatpush1.bf16.msra.mxu0 0
  %2756 = vmatprep.subr.bf16.mxu0 0
  %2757 = vmatpush1.bf16.msra.mxu0 0
  %2758 = vmatprep.subr.bf16.mxu0 0
  %2759 = vmatpush1.bf16.msra.mxu0 0
  %2760 = vmatprep.subr.bf16.mxu0 0
  %2761 = vmatpush1.bf16.msra.mxu0 0
  %2762 = vmatprep.subr.bf16.mxu0 0
  %2763 = vmatpush1.bf16.msra.mxu0 0
  %2764 = vmatprep.subr.bf16.mxu0 0
  %2765 = vmatpush1.bf16.msra.mxu0 0
  %2766 = vmatprep.subr.bf16.mxu0 0
  %2767 = vmatpush1.bf16.msra.mxu0 0
  %2768 = vmatprep.subr.bf16.mxu0 0
  %2769 = vmatpush1.bf16.msra.mxu0 0
  %2770 = vmatprep.subr.bf16.mxu0 0
  %2771 = vmatpush1.bf16.msra.mxu0 0
  %2772 = vmatprep.subr.bf16.mxu0 0
  %2773 = vmatpush1.bf16.msra.mxu0 0
  %2774 = vmatprep.subr.bf16.mxu0 0
  %2775 = vmatpush1.bf16.msra.mxu0 0
  %2776 = vmatprep.subr.bf16.mxu0 0
  %2777 = vmatpush1.bf16.msra.mxu0 0
  %2778 = vmatprep.mubr.bf16.mxu0 0
  %2779 = vmatmul.mubr.bf16.gmra.mrb[0].mxu0 %v2602
  %v2780 = vpop.f32.mrb[0].mxu0
  %v2781 = vadd.f32 0.0, %v2780
  %v2782 = vpop.f32.mrb[0].mxu0
  %v2783 = vpop.f32.mrb[0].mxu0
  %v2784 = vpop.f32.mrb[0].mxu0
  %2785 = vdwg.mxu0
  %v2786 = vadd.f32 %v2745, %v2781
  %v2787 = vxor.u32 %v2786, 2147483648
  %v2788 = vmul.f32 %v2787, 1.442695
  %v2789 = vpow.pop %v2788
  %v2790 = vadd.f32 %v2789, 1.0
  %v2791 = vrcp.pop %v2790
  %v2792 = vmul.f32 1.0, %v2791
  %v2793 = vmul.f32 %v2699, %v2593
  %v2794 = vmul.f32 %v2650, %v2743
  %v2795 = vadd.f32 %v2793, %v2794
  %v2796 = vtanh.pop %v2795
  %v2797 = vmul.f32 %v2792, %v2796
  %s2798 = scalar_lea.vmem %s7, 24
  %2799 = vst.msk [vmem:[%s2798] sm:$0xff] %vm80, %v2797
  %v2800 = vpack.c.bf16 %v2797, %v2797
  %s2801 = scalar_lea.vmem [#allocation2], 32
  %v2802 = vld [vmem:[%s2801] sm:$0xff]
  %v2804 = vsel %vm80, %v2800, 0
  %2806 = vmatprep.subr.bf16.mxu0 0
  %2807 = vmatpush1.bf16.msra.mxu0 %v1962
  %2808 = vmatprep.subr.bf16.mxu0 0
  %2809 = vmatpush1.bf16.msra.mxu0 %v1963
  %2810 = vmatprep.subr.bf16.mxu0 0
  %2811 = vmatpush1.bf16.msra.mxu0 0
  %2812 = vmatprep.subr.bf16.mxu0 0
  %2813 = vmatpush1.bf16.msra.mxu0 0
  %2814 = vmatprep.subr.bf16.mxu0 0
  %2815 = vmatpush1.bf16.msra.mxu0 0
  %2816 = vmatprep.subr.bf16.mxu0 0
  %2817 = vmatpush1.bf16.msra.mxu0 0
  %2818 = vmatprep.subr.bf16.mxu0 0
  %2819 = vmatpush1.bf16.msra.mxu0 0
  %2820 = vmatprep.subr.bf16.mxu0 0
  %2821 = vmatpush1.bf16.msra.mxu0 0
  %2822 = vmatprep.subr.bf16.mxu0 0
  %2823 = vmatpush1.bf16.msra.mxu0 0
  %2824 = vmatprep.subr.bf16.mxu0 0
  %2825 = vmatpush1.bf16.msra.mxu0 0
  %2826 = vmatprep.subr.bf16.mxu0 0
  %2827 = vmatpush1.bf16.msra.mxu0 0
  %2828 = vmatprep.subr.bf16.mxu0 0
  %2829 = vmatpush1.bf16.msra.mxu0 0
  %2830 = vmatprep.subr.bf16.mxu0 0
  %2831 = vmatpush1.bf16.msra.mxu0 0
  %2832 = vmatprep.subr.bf16.mxu0 0
  %2833 = vmatpush1.bf16.msra.mxu0 0
  %2834 = vmatprep.subr.bf16.mxu0 0
  %2835 = vmatpush1.bf16.msra.mxu0 0
  %2836 = vmatprep.subr.bf16.mxu0 0
  %2837 = vmatpush1.bf16.msra.mxu0 0
  %2838 = vmatprep.mubr.bf16.mxu0 0
  %2839 = vmatmul.mubr.bf16.gmra.mrb[0].mxu0 %v2804
  %v2840 = vpop.f32.mrb[0].mxu0
  %v2841 = vadd.f32 0.0, %v2840
  %v2842 = vpop.f32.mrb[0].mxu0
  %v2843 = vpop.f32.mrb[0].mxu0
  %v2844 = vpop.f32.mrb[0].mxu0
  %2845 = vdwg.mxu0
  %v2846 = vadd.f32 %v2802, %v2841
  %v2847 = vxor.u32 %v2846, 2147483648
  %v2848 = vmul.f32 %v2847, 1.442695
  %v2849 = vpow.pop %v2848
  %v2850 = vadd.f32 %v2849, 1.0
  %v2851 = vrcp.pop %v2850
  %v2852 = vmul.f32 1.0, %v2851
  %s2853 = scalar_lea.vmem [#allocation2], 96
  %v2854 = vld [vmem:[%s2853] sm:$0xff]
  %2855 = vmatprep.subr.bf16.mxu0 0
  %2856 = vmatpush1.bf16.msra.mxu0 %v2022
  %2857 = vmatprep.subr.bf16.mxu0 0
  %2858 = vmatpush1.bf16.msra.mxu0 %v2023
  %2859 = vmatprep.subr.bf16.mxu0 0
  %2860 = vmatpush1.bf16.msra.mxu0 0
  %2861 = vmatprep.subr.bf16.mxu0 0
  %2862 = vmatpush1.bf16.msra.mxu0 0
  %2863 = vmatprep.subr.bf16.mxu0 0
  %2864 = vmatpush1.bf16.msra.mxu0 0
  %2865 = vmatprep.subr.bf16.mxu0 0
  %2866 = vmatpush1.bf16.msra.mxu0 0
  %2867 = vmatprep.subr.bf16.mxu0 0
  %2868 = vmatpush1.bf16.msra.mxu0 0
  %2869 = vmatprep.subr.bf16.mxu0 0
  %2870 = vmatpush1.bf16.msra.mxu0 0
  %2871 = vmatprep.subr.bf16.mxu0 0
  %2872 = vmatpush1.bf16.msra.mxu0 0
  %2873 = vmatprep.subr.bf16.mxu0 0
  %2874 = vmatpush1.bf16.msra.mxu0 0
  %2875 = vmatprep.subr.bf16.mxu0 0
  %2876 = vmatpush1.bf16.msra.mxu0 0
  %2877 = vmatprep.subr.bf16.mxu0 0
  %2878 = vmatpush1.bf16.msra.mxu0 0
  %2879 = vmatprep.subr.bf16.mxu0 0
  %2880 = vmatpush1.bf16.msra.mxu0 0
  %2881 = vmatprep.subr.bf16.mxu0 0
  %2882 = vmatpush1.bf16.msra.mxu0 0
  %2883 = vmatprep.subr.bf16.mxu0 0
  %2884 = vmatpush1.bf16.msra.mxu0 0
  %2885 = vmatprep.subr.bf16.mxu0 0
  %2886 = vmatpush1.bf16.msra.mxu0 0
  %2887 = vmatprep.mubr.bf16.mxu0 0
  %2888 = vmatmul.mubr.bf16.gmra.mrb[0].mxu0 %v2804
  %v2889 = vpop.f32.mrb[0].mxu0
  %v2890 = vadd.f32 0.0, %v2889
  %v2891 = vpop.f32.mrb[0].mxu0
  %v2892 = vpop.f32.mrb[0].mxu0
  %v2893 = vpop.f32.mrb[0].mxu0
  %2894 = vdwg.mxu0
  %v2895 = vadd.f32 %v2854, %v2890
  %v2896 = vxor.u32 %v2895, 2147483648
  %v2897 = vmul.f32 %v2896, 1.442695
  %v2898 = vpow.pop %v2897
  %v2899 = vadd.f32 %v2898, 1.0
  %v2900 = vrcp.pop %v2899
  %v2901 = vmul.f32 1.0, %v2900
  %s2902 = scalar_lea.vmem [#allocation2], 160
  %v2903 = vld [vmem:[%s2902] sm:$0xff]
  %2904 = vmatprep.subr.bf16.mxu0 0
  %2905 = vmatpush1.bf16.msra.mxu0 %v2082
  %2906 = vmatprep.subr.bf16.mxu0 0
  %2907 = vmatpush1.bf16.msra.mxu0 %v2083
  %2908 = vmatprep.subr.bf16.mxu0 0
  %2909 = vmatpush1.bf16.msra.mxu0 0
  %2910 = vmatprep.subr.bf16.mxu0 0
  %2911 = vmatpush1.bf16.msra.mxu0 0
  %2912 = vmatprep.subr.bf16.mxu0 0
  %2913 = vmatpush1.bf16.msra.mxu0 0
  %2914 = vmatprep.subr.bf16.mxu0 0
  %2915 = vmatpush1.bf16.msra.mxu0 0
  %2916 = vmatprep.subr.bf16.mxu0 0
  %2917 = vmatpush1.bf16.msra.mxu0 0
  %2918 = vmatprep.subr.bf16.mxu0 0
  %2919 = vmatpush1.bf16.msra.mxu0 0
  %2920 = vmatprep.subr.bf16.mxu0 0
  %2921 = vmatpush1.bf16.msra.mxu0 0
  %2922 = vmatprep.subr.bf16.mxu0 0
  %2923 = vmatpush1.bf16.msra.mxu0 0
  %2924 = vmatprep.subr.bf16.mxu0 0
  %2925 = vmatpush1.bf16.msra.mxu0 0
  %2926 = vmatprep.subr.bf16.mxu0 0
  %2927 = vmatpush1.bf16.msra.mxu0 0
  %2928 = vmatprep.subr.bf16.mxu0 0
  %2929 = vmatpush1.bf16.msra.mxu0 0
  %2930 = vmatprep.subr.bf16.mxu0 0
  %2931 = vmatpush1.bf16.msra.mxu0 0
  %2932 = vmatprep.subr.bf16.mxu0 0
  %2933 = vmatpush1.bf16.msra.mxu0 0
  %2934 = vmatprep.subr.bf16.mxu0 0
  %2935 = vmatpush1.bf16.msra.mxu0 0
  %2936 = vmatprep.mubr.bf16.mxu0 0
  %2937 = vmatmul.mubr.bf16.gmra.mrb[0].mxu0 %v2804
  %v2938 = vpop.f32.mrb[0].mxu0
  %v2939 = vadd.f32 0.0, %v2938
  %v2940 = vpop.f32.mrb[0].mxu0
  %v2941 = vpop.f32.mrb[0].mxu0
  %v2942 = vpop.f32.mrb[0].mxu0
  %2943 = vdwg.mxu0
  %v2944 = vadd.f32 %v2903, %v2939
  %v2945 = vtanh.pop %v2944
  %s2946 = scalar_lea.vmem [#allocation2], 224
  %v2947 = vld [vmem:[%s2946] sm:$0xff]
  %2948 = vmatprep.subr.bf16.mxu0 0
  %2949 = vmatpush1.bf16.msra.mxu0 %v2137
  %2950 = vmatprep.subr.bf16.mxu0 0
  %2951 = vmatpush1.bf16.msra.mxu0 %v2138
  %2952 = vmatprep.subr.bf16.mxu0 0
  %2953 = vmatpush1.bf16.msra.mxu0 0
  %2954 = vmatprep.subr.bf16.mxu0 0
  %2955 = vmatpush1.bf16.msra.mxu0 0
  %2956 = vmatprep.subr.bf16.mxu0 0
  %2957 = vmatpush1.bf16.msra.mxu0 0
  %2958 = vmatprep.subr.bf16.mxu0 0
  %2959 = vmatpush1.bf16.msra.mxu0 0
  %2960 = vmatprep.subr.bf16.mxu0 0
  %2961 = vmatpush1.bf16.msra.mxu0 0
  %2962 = vmatprep.subr.bf16.mxu0 0
  %2963 = vmatpush1.bf16.msra.mxu0 0
  %2964 = vmatprep.subr.bf16.mxu0 0
  %2965 = vmatpush1.bf16.msra.mxu0 0
  %2966 = vmatprep.subr.bf16.mxu0 0
  %2967 = vmatpush1.bf16.msra.mxu0 0
  %2968 = vmatprep.subr.bf16.mxu0 0
  %2969 = vmatpush1.bf16.msra.mxu0 0
  %2970 = vmatprep.subr.bf16.mxu0 0
  %2971 = vmatpush1.bf16.msra.mxu0 0
  %2972 = vmatprep.subr.bf16.mxu0 0
  %2973 = vmatpush1.bf16.msra.mxu0 0
  %2974 = vmatprep.subr.bf16.mxu0 0
  %2975 = vmatpush1.bf16.msra.mxu0 0
  %2976 = vmatprep.subr.bf16.mxu0 0
  %2977 = vmatpush1.bf16.msra.mxu0 0
  %2978 = vmatprep.subr.bf16.mxu0 0
  %2979 = vmatpush1.bf16.msra.mxu0 0
  %2980 = vmatprep.mubr.bf16.mxu0 0
  %2981 = vmatmul.mubr.bf16.gmra.mrb[0].mxu0 %v2804
  %v2982 = vpop.f32.mrb[0].mxu0
  %v2983 = vadd.f32 0.0, %v2982
  %v2984 = vpop.f32.mrb[0].mxu0
  %v2985 = vpop.f32.mrb[0].mxu0
  %v2986 = vpop.f32.mrb[0].mxu0
  %2987 = vdwg.mxu0
  %v2988 = vadd.f32 %v2947, %v2983
  %v2989 = vxor.u32 %v2988, 2147483648
  %v2990 = vmul.f32 %v2989, 1.442695
  %v2991 = vpow.pop %v2990
  %v2992 = vadd.f32 %v2991, 1.0
  %v2993 = vrcp.pop %v2992
  %v2994 = vmul.f32 1.0, %v2993
  %v2995 = vmul.f32 %v2901, %v2795
  %v2996 = vmul.f32 %v2852, %v2945
  %v2997 = vadd.f32 %v2995, %v2996
  %v2998 = vtanh.pop %v2997
  %v2999 = vmul.f32 %v2994, %v2998
  %s3000 = scalar_lea.vmem %s7, 32
  %3001 = vst.msk [vmem:[%s3000] sm:$0xff] %vm80, %v2999
  %v3002 = vpack.c.bf16 %v2999, %v2999
  %s3003 = scalar_lea.vmem [#allocation2], 40
  %v3004 = vld [vmem:[%s3003] sm:$0xff]
  %v3006 = vsel %vm80, %v3002, 0
  %3008 = vmatprep.subr.bf16.mxu0 0
  %3009 = vmatpush1.bf16.msra.mxu0 %v1962
  %3010 = vmatprep.subr.bf16.mxu0 0
  %3011 = vmatpush1.bf16.msra.mxu0 %v1963
  %3012 = vmatprep.subr.bf16.mxu0 0
  %3013 = vmatpush1.bf16.msra.mxu0 0
  %3014 = vmatprep.subr.bf16.mxu0 0
  %3015 = vmatpush1.bf16.msra.mxu0 0
  %3016 = vmatprep.subr.bf16.mxu0 0
  %3017 = vmatpush1.bf16.msra.mxu0 0
  %3018 = vmatprep.subr.bf16.mxu0 0
  %3019 = vmatpush1.bf16.msra.mxu0 0
  %3020 = vmatprep.subr.bf16.mxu0 0
  %3021 = vmatpush1.bf16.msra.mxu0 0
  %3022 = vmatprep.subr.bf16.mxu0 0
  %3023 = vmatpush1.bf16.msra.mxu0 0
  %3024 = vmatprep.subr.bf16.mxu0 0
  %3025 = vmatpush1.bf16.msra.mxu0 0
  %3026 = vmatprep.subr.bf16.mxu0 0
  %3027 = vmatpush1.bf16.msra.mxu0 0
  %3028 = vmatprep.subr.bf16.mxu0 0
  %3029 = vmatpush1.bf16.msra.mxu0 0
  %3030 = vmatprep.subr.bf16.mxu0 0
  %3031 = vmatpush1.bf16.msra.mxu0 0
  %3032 = vmatprep.subr.bf16.mxu0 0
  %3033 = vmatpush1.bf16.msra.mxu0 0
  %3034 = vmatprep.subr.bf16.mxu0 0
  %3035 = vmatpush1.bf16.msra.mxu0 0
  %3036 = vmatprep.subr.bf16.mxu0 0
  %3037 = vmatpush1.bf16.msra.mxu0 0
  %3038 = vmatprep.subr.bf16.mxu0 0
  %3039 = vmatpush1.bf16.msra.mxu0 0
  %3040 = vmatprep.mubr.bf16.mxu0 0
  %3041 = vmatmul.mubr.bf16.gmra.mrb[0].mxu0 %v3006
  %v3042 = vpop.f32.mrb[0].mxu0
  %v3043 = vadd.f32 0.0, %v3042
  %v3044 = vpop.f32.mrb[0].mxu0
  %v3045 = vpop.f32.mrb[0].mxu0
  %v3046 = vpop.f32.mrb[0].mxu0
  %3047 = vdwg.mxu0
  %v3048 = vadd.f32 %v3004, %v3043
  %v3049 = vxor.u32 %v3048, 2147483648
  %v3050 = vmul.f32 %v3049, 1.442695
  %v3051 = vpow.pop %v3050
  %v3052 = vadd.f32 %v3051, 1.0
  %v3053 = vrcp.pop %v3052
  %v3054 = vmul.f32 1.0, %v3053
  %s3055 = scalar_lea.vmem [#allocation2], 104
  %v3056 = vld [vmem:[%s3055] sm:$0xff]
  %3057 = vmatprep.subr.bf16.mxu0 0
  %3058 = vmatpush1.bf16.msra.mxu0 %v2022
  %3059 = vmatprep.subr.bf16.mxu0 0
  %3060 = vmatpush1.bf16.msra.mxu0 %v2023
  %3061 = vmatprep.subr.bf16.mxu0 0
  %3062 = vmatpush1.bf16.msra.mxu0 0
  %3063 = vmatprep.subr.bf16.mxu0 0
  %3064 = vmatpush1.bf16.msra.mxu0 0
  %3065 = vmatprep.subr.bf16.mxu0 0
  %3066 = vmatpush1.bf16.msra.mxu0 0
  %3067 = vmatprep.subr.bf16.mxu0 0
  %3068 = vmatpush1.bf16.msra.mxu0 0
  %3069 = vmatprep.subr.bf16.mxu0 0
  %3070 = vmatpush1.bf16.msra.mxu0 0
  %3071 = vmatprep.subr.bf16.mxu0 0
  %3072 = vmatpush1.bf16.msra.mxu0 0
  %3073 = vmatprep.subr.bf16.mxu0 0
  %3074 = vmatpush1.bf16.msra.mxu0 0
  %3075 = vmatprep.subr.bf16.mxu0 0
  %3076 = vmatpush1.bf16.msra.mxu0 0
  %3077 = vmatprep.subr.bf16.mxu0 0
  %3078 = vmatpush1.bf16.msra.mxu0 0
  %3079 = vmatprep.subr.bf16.mxu0 0
  %3080 = vmatpush1.bf16.msra.mxu0 0
  %3081 = vmatprep.subr.bf16.mxu0 0
  %3082 = vmatpush1.bf16.msra.mxu0 0
  %3083 = vmatprep.subr.bf16.mxu0 0
  %3084 = vmatpush1.bf16.msra.mxu0 0
  %3085 = vmatprep.subr.bf16.mxu0 0
  %3086 = vmatpush1.bf16.msra.mxu0 0
  %3087 = vmatprep.subr.bf16.mxu0 0
  %3088 = vmatpush1.bf16.msra.mxu0 0
  %3089 = vmatprep.mubr.bf16.mxu0 0
  %3090 = vmatmul.mubr.bf16.gmra.mrb[0].mxu0 %v3006
  %v3091 = vpop.f32.mrb[0].mxu0
  %v3092 = vadd.f32 0.0, %v3091
  %v3093 = vpop.f32.mrb[0].mxu0
  %v3094 = vpop.f32.mrb[0].mxu0
  %v3095 = vpop.f32.mrb[0].mxu0
  %3096 = vdwg.mxu0
  %v3097 = vadd.f32 %v3056, %v3092
  %v3098 = vxor.u32 %v3097, 2147483648
  %v3099 = vmul.f32 %v3098, 1.442695
  %v3100 = vpow.pop %v3099
  %v3101 = vadd.f32 %v3100, 1.0
  %v3102 = vrcp.pop %v3101
  %v3103 = vmul.f32 1.0, %v3102
  %s3104 = scalar_lea.vmem [#allocation2], 168
  %v3105 = vld [vmem:[%s3104] sm:$0xff]
  %3106 = vmatprep.subr.bf16.mxu0 0
  %3107 = vmatpush1.bf16.msra.mxu0 %v2082
  %3108 = vmatprep.subr.bf16.mxu0 0
  %3109 = vmatpush1.bf16.msra.mxu0 %v2083
  %3110 = vmatprep.subr.bf16.mxu0 0
  %3111 = vmatpush1.bf16.msra.mxu0 0
  %3112 = vmatprep.subr.bf16.mxu0 0
  %3113 = vmatpush1.bf16.msra.mxu0 0
  %3114 = vmatprep.subr.bf16.mxu0 0
  %3115 = vmatpush1.bf16.msra.mxu0 0
  %3116 = vmatprep.subr.bf16.mxu0 0
  %3117 = vmatpush1.bf16.msra.mxu0 0
  %3118 = vmatprep.subr.bf16.mxu0 0
  %3119 = vmatpush1.bf16.msra.mxu0 0
  %3120 = vmatprep.subr.bf16.mxu0 0
  %3121 = vmatpush1.bf16.msra.mxu0 0
  %3122 = vmatprep.subr.bf16.mxu0 0
  %3123 = vmatpush1.bf16.msra.mxu0 0
  %3124 = vmatprep.subr.bf16.mxu0 0
  %3125 = vmatpush1.bf16.msra.mxu0 0
  %3126 = vmatprep.subr.bf16.mxu0 0
  %3127 = vmatpush1.bf16.msra.mxu0 0
  %3128 = vmatprep.subr.bf16.mxu0 0
  %3129 = vmatpush1.bf16.msra.mxu0 0
  %3130 = vmatprep.subr.bf16.mxu0 0
  %3131 = vmatpush1.bf16.msra.mxu0 0
  %3132 = vmatprep.subr.bf16.mxu0 0
  %3133 = vmatpush1.bf16.msra.mxu0 0
  %3134 = vmatprep.subr.bf16.mxu0 0
  %3135 = vmatpush1.bf16.msra.mxu0 0
  %3136 = vmatprep.subr.bf16.mxu0 0
  %3137 = vmatpush1.bf16.msra.mxu0 0
  %3138 = vmatprep.mubr.bf16.mxu0 0
  %3139 = vmatmul.mubr.bf16.gmra.mrb[0].mxu0 %v3006
  %v3140 = vpop.f32.mrb[0].mxu0
  %v3141 = vadd.f32 0.0, %v3140
  %v3142 = vpop.f32.mrb[0].mxu0
  %v3143 = vpop.f32.mrb[0].mxu0
  %v3144 = vpop.f32.mrb[0].mxu0
  %3145 = vdwg.mxu0
  %v3146 = vadd.f32 %v3105, %v3141
  %v3147 = vtanh.pop %v3146
  %s3148 = scalar_lea.vmem [#allocation2], 232
  %v3149 = vld [vmem:[%s3148] sm:$0xff]
  %3150 = vmatprep.subr.bf16.mxu0 0
  %3151 = vmatpush1.bf16.msra.mxu0 %v2137
  %3152 = vmatprep.subr.bf16.mxu0 0
  %3153 = vmatpush1.bf16.msra.mxu0 %v2138
  %3154 = vmatprep.subr.bf16.mxu0 0
  %3155 = vmatpush1.bf16.msra.mxu0 0
  %3156 = vmatprep.subr.bf16.mxu0 0
  %3157 = vmatpush1.bf16.msra.mxu0 0
  %3158 = vmatprep.subr.bf16.mxu0 0
  %3159 = vmatpush1.bf16.msra.mxu0 0
  %3160 = vmatprep.subr.bf16.mxu0 0
  %3161 = vmatpush1.bf16.msra.mxu0 0
  %3162 = vmatprep.subr.bf16.mxu0 0
  %3163 = vmatpush1.bf16.msra.mxu0 0
  %3164 = vmatprep.subr.bf16.mxu0 0
  %3165 = vmatpush1.bf16.msra.mxu0 0
  %3166 = vmatprep.subr.bf16.mxu0 0
  %3167 = vmatpush1.bf16.msra.mxu0 0
  %3168 = vmatprep.subr.bf16.mxu0 0
  %3169 = vmatpush1.bf16.msra.mxu0 0
  %3170 = vmatprep.subr.bf16.mxu0 0
  %3171 = vmatpush1.bf16.msra.mxu0 0
  %3172 = vmatprep.subr.bf16.mxu0 0
  %3173 = vmatpush1.bf16.msra.mxu0 0
  %3174 = vmatprep.subr.bf16.mxu0 0
  %3175 = vmatpush1.bf16.msra.mxu0 0
  %3176 = vmatprep.subr.bf16.mxu0 0
  %3177 = vmatpush1.bf16.msra.mxu0 0
  %3178 = vmatprep.subr.bf16.mxu0 0
  %3179 = vmatpush1.bf16.msra.mxu0 0
  %3180 = vmatprep.subr.bf16.mxu0 0
  %3181 = vmatpush1.bf16.msra.mxu0 0
  %3182 = vmatprep.mubr.bf16.mxu0 0
  %3183 = vmatmul.mubr.bf16.gmra.mrb[0].mxu0 %v3006
  %v3184 = vpop.f32.mrb[0].mxu0
  %v3185 = vadd.f32 0.0, %v3184
  %v3186 = vpop.f32.mrb[0].mxu0
  %v3187 = vpop.f32.mrb[0].mxu0
  %v3188 = vpop.f32.mrb[0].mxu0
  %3189 = vdwg.mxu0
  %v3190 = vadd.f32 %v3149, %v3185
  %v3191 = vxor.u32 %v3190, 2147483648
  %v3192 = vmul.f32 %v3191, 1.442695
  %v3193 = vpow.pop %v3192
  %v3194 = vadd.f32 %v3193, 1.0
  %v3195 = vrcp.pop %v3194
  %v3196 = vmul.f32 1.0, %v3195
  %v3197 = vmul.f32 %v3103, %v2997
  %v3198 = vmul.f32 %v3054, %v3147
  %v3199 = vadd.f32 %v3197, %v3198
  %v3200 = vtanh.pop %v3199
  %v3201 = vmul.f32 %v3196, %v3200
  %s3202 = scalar_lea.vmem %s7, 40
  %3203 = vst.msk [vmem:[%s3202] sm:$0xff] %vm80, %v3201
  %v3204 = vpack.c.bf16 %v3201, %v3201
  %s3205 = scalar_lea.vmem [#allocation2], 48
  %v3206 = vld [vmem:[%s3205] sm:$0xff]
  %v3208 = vsel %vm80, %v3204, 0
  %3210 = vmatprep.subr.bf16.mxu0 0
  %3211 = vmatpush1.bf16.msra.mxu0 %v1962
  %3212 = vmatprep.subr.bf16.mxu0 0
  %3213 = vmatpush1.bf16.msra.mxu0 %v1963
  %3214 = vmatprep.subr.bf16.mxu0 0
  %3215 = vmatpush1.bf16.msra.mxu0 0
  %3216 = vmatprep.subr.bf16.mxu0 0
  %3217 = vmatpush1.bf16.msra.mxu0 0
  %3218 = vmatprep.subr.bf16.mxu0 0
  %3219 = vmatpush1.bf16.msra.mxu0 0
  %3220 = vmatprep.subr.bf16.mxu0 0
  %3221 = vmatpush1.bf16.msra.mxu0 0
  %3222 = vmatprep.subr.bf16.mxu0 0
  %3223 = vmatpush1.bf16.msra.mxu0 0
  %3224 = vmatprep.subr.bf16.mxu0 0
  %3225 = vmatpush1.bf16.msra.mxu0 0
  %3226 = vmatprep.subr.bf16.mxu0 0
  %3227 = vmatpush1.bf16.msra.mxu0 0
  %3228 = vmatprep.subr.bf16.mxu0 0
  %3229 = vmatpush1.bf16.msra.mxu0 0
  %3230 = vmatprep.subr.bf16.mxu0 0
  %3231 = vmatpush1.bf16.msra.mxu0 0
  %3232 = vmatprep.subr.bf16.mxu0 0
  %3233 = vmatpush1.bf16.msra.mxu0 0
  %3234 = vmatprep.subr.bf16.mxu0 0
  %3235 = vmatpush1.bf16.msra.mxu0 0
  %3236 = vmatprep.subr.bf16.mxu0 0
  %3237 = vmatpush1.bf16.msra.mxu0 0
  %3238 = vmatprep.subr.bf16.mxu0 0
  %3239 = vmatpush1.bf16.msra.mxu0 0
  %3240 = vmatprep.subr.bf16.mxu0 0
  %3241 = vmatpush1.bf16.msra.mxu0 0
  %3242 = vmatprep.mubr.bf16.mxu0 0
  %3243 = vmatmul.mubr.bf16.gmra.mrb[0].mxu0 %v3208
  %v3244 = vpop.f32.mrb[0].mxu0
  %v3245 = vadd.f32 0.0, %v3244
  %v3246 = vpop.f32.mrb[0].mxu0
  %v3247 = vpop.f32.mrb[0].mxu0
  %v3248 = vpop.f32.mrb[0].mxu0
  %3249 = vdwg.mxu0
  %v3250 = vadd.f32 %v3206, %v3245
  %v3251 = vxor.u32 %v3250, 2147483648
  %v3252 = vmul.f32 %v3251, 1.442695
  %v3253 = vpow.pop %v3252
  %v3254 = vadd.f32 %v3253, 1.0
  %v3255 = vrcp.pop %v3254
  %v3256 = vmul.f32 1.0, %v3255
  %s3257 = scalar_lea.vmem [#allocation2], 112
  %v3258 = vld [vmem:[%s3257] sm:$0xff]
  %3259 = vmatprep.subr.bf16.mxu0 0
  %3260 = vmatpush1.bf16.msra.mxu0 %v2022
  %3261 = vmatprep.subr.bf16.mxu0 0
  %3262 = vmatpush1.bf16.msra.mxu0 %v2023
  %3263 = vmatprep.subr.bf16.mxu0 0
  %3264 = vmatpush1.bf16.msra.mxu0 0
  %3265 = vmatprep.subr.bf16.mxu0 0
  %3266 = vmatpush1.bf16.msra.mxu0 0
  %3267 = vmatprep.subr.bf16.mxu0 0
  %3268 = vmatpush1.bf16.msra.mxu0 0
  %3269 = vmatprep.subr.bf16.mxu0 0
  %3270 = vmatpush1.bf16.msra.mxu0 0
  %3271 = vmatprep.subr.bf16.mxu0 0
  %3272 = vmatpush1.bf16.msra.mxu0 0
  %3273 = vmatprep.subr.bf16.mxu0 0
  %3274 = vmatpush1.bf16.msra.mxu0 0
  %3275 = vmatprep.subr.bf16.mxu0 0
  %3276 = vmatpush1.bf16.msra.mxu0 0
  %3277 = vmatprep.subr.bf16.mxu0 0
  %3278 = vmatpush1.bf16.msra.mxu0 0
  %3279 = vmatprep.subr.bf16.mxu0 0
  %3280 = vmatpush1.bf16.msra.mxu0 0
  %3281 = vmatprep.subr.bf16.mxu0 0
  %3282 = vmatpush1.bf16.msra.mxu0 0
  %3283 = vmatprep.subr.bf16.mxu0 0
  %3284 = vmatpush1.bf16.msra.mxu0 0
  %3285 = vmatprep.subr.bf16.mxu0 0
  %3286 = vmatpush1.bf16.msra.mxu0 0
  %3287 = vmatprep.subr.bf16.mxu0 0
  %3288 = vmatpush1.bf16.msra.mxu0 0
  %3289 = vmatprep.subr.bf16.mxu0 0
  %3290 = vmatpush1.bf16.msra.mxu0 0
  %3291 = vmatprep.mubr.bf16.mxu0 0
  %3292 = vmatmul.mubr.bf16.gmra.mrb[0].mxu0 %v3208
  %v3293 = vpop.f32.mrb[0].mxu0
  %v3294 = vadd.f32 0.0, %v3293
  %v3295 = vpop.f32.mrb[0].mxu0
  %v3296 = vpop.f32.mrb[0].mxu0
  %v3297 = vpop.f32.mrb[0].mxu0
  %3298 = vdwg.mxu0
  %v3299 = vadd.f32 %v3258, %v3294
  %v3300 = vxor.u32 %v3299, 2147483648
  %v3301 = vmul.f32 %v3300, 1.442695
  %v3302 = vpow.pop %v3301
  %v3303 = vadd.f32 %v3302, 1.0
  %v3304 = vrcp.pop %v3303
  %v3305 = vmul.f32 1.0, %v3304
  %s3306 = scalar_lea.vmem [#allocation2], 176
  %v3307 = vld [vmem:[%s3306] sm:$0xff]
  %3308 = vmatprep.subr.bf16.mxu0 0
  %3309 = vmatpush1.bf16.msra.mxu0 %v2082
  %3310 = vmatprep.subr.bf16.mxu0 0
  %3311 = vmatpush1.bf16.msra.mxu0 %v2083
  %3312 = vmatprep.subr.bf16.mxu0 0
  %3313 = vmatpush1.bf16.msra.mxu0 0
  %3314 = vmatprep.subr.bf16.mxu0 0
  %3315 = vmatpush1.bf16.msra.mxu0 0
  %3316 = vmatprep.subr.bf16.mxu0 0
  %3317 = vmatpush1.bf16.msra.mxu0 0
  %3318 = vmatprep.subr.bf16.mxu0 0
  %3319 = vmatpush1.bf16.msra.mxu0 0
  %3320 = vmatprep.subr.bf16.mxu0 0
  %3321 = vmatpush1.bf16.msra.mxu0 0
  %3322 = vmatprep.subr.bf16.mxu0 0
  %3323 = vmatpush1.bf16.msra.mxu0 0
  %3324 = vmatprep.subr.bf16.mxu0 0
  %3325 = vmatpush1.bf16.msra.mxu0 0
  %3326 = vmatprep.subr.bf16.mxu0 0
  %3327 = vmatpush1.bf16.msra.mxu0 0
  %3328 = vmatprep.subr.bf16.mxu0 0
  %3329 = vmatpush1.bf16.msra.mxu0 0
  %3330 = vmatprep.subr.bf16.mxu0 0
  %3331 = vmatpush1.bf16.msra.mxu0 0
  %3332 = vmatprep.subr.bf16.mxu0 0
  %3333 = vmatpush1.bf16.msra.mxu0 0
  %3334 = vmatprep.subr.bf16.mxu0 0
  %3335 = vmatpush1.bf16.msra.mxu0 0
  %3336 = vmatprep.subr.bf16.mxu0 0
  %3337 = vmatpush1.bf16.msra.mxu0 0
  %3338 = vmatprep.subr.bf16.mxu0 0
  %3339 = vmatpush1.bf16.msra.mxu0 0
  %3340 = vmatprep.mubr.bf16.mxu0 0
  %3341 = vmatmul.mubr.bf16.gmra.mrb[0].mxu0 %v3208
  %v3342 = vpop.f32.mrb[0].mxu0
  %v3343 = vadd.f32 0.0, %v3342
  %v3344 = vpop.f32.mrb[0].mxu0
  %v3345 = vpop.f32.mrb[0].mxu0
  %v3346 = vpop.f32.mrb[0].mxu0
  %3347 = vdwg.mxu0
  %v3348 = vadd.f32 %v3307, %v3343
  %v3349 = vtanh.pop %v3348
  %s3350 = scalar_lea.vmem [#allocation2], 240
  %v3351 = vld [vmem:[%s3350] sm:$0xff]
  %3352 = vmatprep.subr.bf16.mxu0 0
  %3353 = vmatpush1.bf16.msra.mxu0 %v2137
  %3354 = vmatprep.subr.bf16.mxu0 0
  %3355 = vmatpush1.bf16.msra.mxu0 %v2138
  %3356 = vmatprep.subr.bf16.mxu0 0
  %3357 = vmatpush1.bf16.msra.mxu0 0
  %3358 = vmatprep.subr.bf16.mxu0 0
  %3359 = vmatpush1.bf16.msra.mxu0 0
  %3360 = vmatprep.subr.bf16.mxu0 0
  %3361 = vmatpush1.bf16.msra.mxu0 0
  %3362 = vmatprep.subr.bf16.mxu0 0
  %3363 = vmatpush1.bf16.msra.mxu0 0
  %3364 = vmatprep.subr.bf16.mxu0 0
  %3365 = vmatpush1.bf16.msra.mxu0 0
  %3366 = vmatprep.subr.bf16.mxu0 0
  %3367 = vmatpush1.bf16.msra.mxu0 0
  %3368 = vmatprep.subr.bf16.mxu0 0
  %3369 = vmatpush1.bf16.msra.mxu0 0
  %3370 = vmatprep.subr.bf16.mxu0 0
  %3371 = vmatpush1.bf16.msra.mxu0 0
  %3372 = vmatprep.subr.bf16.mxu0 0
  %3373 = vmatpush1.bf16.msra.mxu0 0
  %3374 = vmatprep.subr.bf16.mxu0 0
  %3375 = vmatpush1.bf16.msra.mxu0 0
  %3376 = vmatprep.subr.bf16.mxu0 0
  %3377 = vmatpush1.bf16.msra.mxu0 0
  %3378 = vmatprep.subr.bf16.mxu0 0
  %3379 = vmatpush1.bf16.msra.mxu0 0
  %3380 = vmatprep.subr.bf16.mxu0 0
  %3381 = vmatpush1.bf16.msra.mxu0 0
  %3382 = vmatprep.subr.bf16.mxu0 0
  %3383 = vmatpush1.bf16.msra.mxu0 0
  %3384 = vmatprep.mubr.bf16.mxu0 0
  %3385 = vmatmul.mubr.bf16.gmra.mrb[0].mxu0 %v3208
  %v3386 = vpop.f32.mrb[0].mxu0
  %v3387 = vadd.f32 0.0, %v3386
  %v3388 = vpop.f32.mrb[0].mxu0
  %v3389 = vpop.f32.mrb[0].mxu0
  %v3390 = vpop.f32.mrb[0].mxu0
  %3391 = vdwg.mxu0
  %v3392 = vadd.f32 %v3351, %v3387
  %v3393 = vxor.u32 %v3392, 2147483648
  %v3394 = vmul.f32 %v3393, 1.442695
  %v3395 = vpow.pop %v3394
  %v3396 = vadd.f32 %v3395, 1.0
  %v3397 = vrcp.pop %v3396
  %v3398 = vmul.f32 1.0, %v3397
  %v3399 = vmul.f32 %v3305, %v3199
  %v3400 = vmul.f32 %v3256, %v3349
  %v3401 = vadd.f32 %v3399, %v3400
  %v3402 = vtanh.pop %v3401
  %v3403 = vmul.f32 %v3398, %v3402
  %s3404 = scalar_lea.vmem %s7, 48
  %3405 = vst.msk [vmem:[%s3404] sm:$0xff] %vm80, %v3403
  %v3406 = vpack.c.bf16 %v3403, %v3403
  %s3407 = scalar_lea.vmem [#allocation2], 56
  %v3408 = vld [vmem:[%s3407] sm:$0xff]
  %v3410 = vsel %vm80, %v3406, 0
  %3412 = vmatprep.subr.bf16.mxu0 0
  %3413 = vmatpush1.bf16.msra.mxu0 %v1962
  %3414 = vmatprep.subr.bf16.mxu0 0
  %3415 = vmatpush1.bf16.msra.mxu0 %v1963
  %3416 = vmatprep.subr.bf16.mxu0 0
  %3417 = vmatpush1.bf16.msra.mxu0 0
  %3418 = vmatprep.subr.bf16.mxu0 0
  %3419 = vmatpush1.bf16.msra.mxu0 0
  %3420 = vmatprep.subr.bf16.mxu0 0
  %3421 = vmatpush1.bf16.msra.mxu0 0
  %3422 = vmatprep.subr.bf16.mxu0 0
  %3423 = vmatpush1.bf16.msra.mxu0 0
  %3424 = vmatprep.subr.bf16.mxu0 0
  %3425 = vmatpush1.bf16.msra.mxu0 0
  %3426 = vmatprep.subr.bf16.mxu0 0
  %3427 = vmatpush1.bf16.msra.mxu0 0
  %3428 = vmatprep.subr.bf16.mxu0 0
  %3429 = vmatpush1.bf16.msra.mxu0 0
  %3430 = vmatprep.subr.bf16.mxu0 0
  %3431 = vmatpush1.bf16.msra.mxu0 0
  %3432 = vmatprep.subr.bf16.mxu0 0
  %3433 = vmatpush1.bf16.msra.mxu0 0
  %3434 = vmatprep.subr.bf16.mxu0 0
  %3435 = vmatpush1.bf16.msra.mxu0 0
  %3436 = vmatprep.subr.bf16.mxu0 0
  %3437 = vmatpush1.bf16.msra.mxu0 0
  %3438 = vmatprep.subr.bf16.mxu0 0
  %3439 = vmatpush1.bf16.msra.mxu0 0
  %3440 = vmatprep.subr.bf16.mxu0 0
  %3441 = vmatpush1.bf16.msra.mxu0 0
  %3442 = vmatprep.subr.bf16.mxu0 0
  %3443 = vmatpush1.bf16.msra.mxu0 0
  %3444 = vmatprep.mubr.bf16.mxu0 0
  %3445 = vmatmul.mubr.bf16.gmra.mrb[0].mxu0 %v3410
  %v3446 = vpop.f32.mrb[0].mxu0
  %v3447 = vadd.f32 0.0, %v3446
  %v3448 = vpop.f32.mrb[0].mxu0
  %v3449 = vpop.f32.mrb[0].mxu0
  %v3450 = vpop.f32.mrb[0].mxu0
  %3451 = vdwg.mxu0
  %v3452 = vadd.f32 %v3408, %v3447
  %v3453 = vxor.u32 %v3452, 2147483648
  %v3454 = vmul.f32 %v3453, 1.442695
  %v3455 = vpow.pop %v3454
  %v3456 = vadd.f32 %v3455, 1.0
  %v3457 = vrcp.pop %v3456
  %v3458 = vmul.f32 1.0, %v3457
  %s3459 = scalar_lea.vmem [#allocation2], 120
  %v3460 = vld [vmem:[%s3459] sm:$0xff]
  %3461 = vmatprep.subr.bf16.mxu0 0
  %3462 = vmatpush1.bf16.msra.mxu0 %v2022
  %3463 = vmatprep.subr.bf16.mxu0 0
  %3464 = vmatpush1.bf16.msra.mxu0 %v2023
  %3465 = vmatprep.subr.bf16.mxu0 0
  %3466 = vmatpush1.bf16.msra.mxu0 0
  %3467 = vmatprep.subr.bf16.mxu0 0
  %3468 = vmatpush1.bf16.msra.mxu0 0
  %3469 = vmatprep.subr.bf16.mxu0 0
  %3470 = vmatpush1.bf16.msra.mxu0 0
  %3471 = vmatprep.subr.bf16.mxu0 0
  %3472 = vmatpush1.bf16.msra.mxu0 0
  %3473 = vmatprep.subr.bf16.mxu0 0
  %3474 = vmatpush1.bf16.msra.mxu0 0
  %3475 = vmatprep.subr.bf16.mxu0 0
  %3476 = vmatpush1.bf16.msra.mxu0 0
  %3477 = vmatprep.subr.bf16.mxu0 0
  %3478 = vmatpush1.bf16.msra.mxu0 0
  %3479 = vmatprep.subr.bf16.mxu0 0
  %3480 = vmatpush1.bf16.msra.mxu0 0
  %3481 = vmatprep.subr.bf16.mxu0 0
  %3482 = vmatpush1.bf16.msra.mxu0 0
  %3483 = vmatprep.subr.bf16.mxu0 0
  %3484 = vmatpush1.bf16.msra.mxu0 0
  %3485 = vmatprep.subr.bf16.mxu0 0
  %3486 = vmatpush1.bf16.msra.mxu0 0
  %3487 = vmatprep.subr.bf16.mxu0 0
  %3488 = vmatpush1.bf16.msra.mxu0 0
  %3489 = vmatprep.subr.bf16.mxu0 0
  %3490 = vmatpush1.bf16.msra.mxu0 0
  %3491 = vmatprep.subr.bf16.mxu0 0
  %3492 = vmatpush1.bf16.msra.mxu0 0
  %3493 = vmatprep.mubr.bf16.mxu0 0
  %3494 = vmatmul.mubr.bf16.gmra.mrb[0].mxu0 %v3410
  %v3495 = vpop.f32.mrb[0].mxu0
  %v3496 = vadd.f32 0.0, %v3495
  %v3497 = vpop.f32.mrb[0].mxu0
  %v3498 = vpop.f32.mrb[0].mxu0
  %v3499 = vpop.f32.mrb[0].mxu0
  %3500 = vdwg.mxu0
  %v3501 = vadd.f32 %v3460, %v3496
  %v3502 = vxor.u32 %v3501, 2147483648
  %v3503 = vmul.f32 %v3502, 1.442695
  %v3504 = vpow.pop %v3503
  %v3505 = vadd.f32 %v3504, 1.0
  %v3506 = vrcp.pop %v3505
  %v3507 = vmul.f32 1.0, %v3506
  %s3508 = scalar_lea.vmem [#allocation2], 184
  %v3509 = vld [vmem:[%s3508] sm:$0xff]
  %3510 = vmatprep.subr.bf16.mxu0 0
  %3511 = vmatpush1.bf16.msra.mxu0 %v2082
  %3512 = vmatprep.subr.bf16.mxu0 0
  %3513 = vmatpush1.bf16.msra.mxu0 %v2083
  %3514 = vmatprep.subr.bf16.mxu0 0
  %3515 = vmatpush1.bf16.msra.mxu0 0
  %3516 = vmatprep.subr.bf16.mxu0 0
  %3517 = vmatpush1.bf16.msra.mxu0 0
  %3518 = vmatprep.subr.bf16.mxu0 0
  %3519 = vmatpush1.bf16.msra.mxu0 0
  %3520 = vmatprep.subr.bf16.mxu0 0
  %3521 = vmatpush1.bf16.msra.mxu0 0
  %3522 = vmatprep.subr.bf16.mxu0 0
  %3523 = vmatpush1.bf16.msra.mxu0 0
  %3524 = vmatprep.subr.bf16.mxu0 0
  %3525 = vmatpush1.bf16.msra.mxu0 0
  %3526 = vmatprep.subr.bf16.mxu0 0
  %3527 = vmatpush1.bf16.msra.mxu0 0
  %3528 = vmatprep.subr.bf16.mxu0 0
  %3529 = vmatpush1.bf16.msra.mxu0 0
  %3530 = vmatprep.subr.bf16.mxu0 0
  %3531 = vmatpush1.bf16.msra.mxu0 0
  %3532 = vmatprep.subr.bf16.mxu0 0
  %3533 = vmatpush1.bf16.msra.mxu0 0
  %3534 = vmatprep.subr.bf16.mxu0 0
  %3535 = vmatpush1.bf16.msra.mxu0 0
  %3536 = vmatprep.subr.bf16.mxu0 0
  %3537 = vmatpush1.bf16.msra.mxu0 0
  %3538 = vmatprep.subr.bf16.mxu0 0
  %3539 = vmatpush1.bf16.msra.mxu0 0
  %3540 = vmatprep.subr.bf16.mxu0 0
  %3541 = vmatpush1.bf16.msra.mxu0 0
  %3542 = vmatprep.mubr.bf16.mxu0 0
  %3543 = vmatmul.mubr.bf16.gmra.mrb[0].mxu0 %v3410
  %v3544 = vpop.f32.mrb[0].mxu0
  %v3545 = vadd.f32 0.0, %v3544
  %v3546 = vpop.f32.mrb[0].mxu0
  %v3547 = vpop.f32.mrb[0].mxu0
  %v3548 = vpop.f32.mrb[0].mxu0
  %3549 = vdwg.mxu0
  %v3550 = vadd.f32 %v3509, %v3545
  %v3551 = vtanh.pop %v3550
  %s3552 = scalar_lea.vmem [#allocation2], 248
  %v3553 = vld [vmem:[%s3552] sm:$0xff]
  %3554 = vmatprep.subr.bf16.mxu0 0
  %3555 = vmatpush1.bf16.msra.mxu0 %v2137
  %3556 = vmatprep.subr.bf16.mxu0 0
  %3557 = vmatpush1.bf16.msra.mxu0 %v2138
  %3558 = vmatprep.subr.bf16.mxu0 0
  %3559 = vmatpush1.bf16.msra.mxu0 0
  %3560 = vmatprep.subr.bf16.mxu0 0
  %3561 = vmatpush1.bf16.msra.mxu0 0
  %3562 = vmatprep.subr.bf16.mxu0 0
  %3563 = vmatpush1.bf16.msra.mxu0 0
  %3564 = vmatprep.subr.bf16.mxu0 0
  %3565 = vmatpush1.bf16.msra.mxu0 0
  %3566 = vmatprep.subr.bf16.mxu0 0
  %3567 = vmatpush1.bf16.msra.mxu0 0
  %3568 = vmatprep.subr.bf16.mxu0 0
  %3569 = vmatpush1.bf16.msra.mxu0 0
  %3570 = vmatprep.subr.bf16.mxu0 0
  %3571 = vmatpush1.bf16.msra.mxu0 0
  %3572 = vmatprep.subr.bf16.mxu0 0
  %3573 = vmatpush1.bf16.msra.mxu0 0
  %3574 = vmatprep.subr.bf16.mxu0 0
  %3575 = vmatpush1.bf16.msra.mxu0 0
  %3576 = vmatprep.subr.bf16.mxu0 0
  %3577 = vmatpush1.bf16.msra.mxu0 0
  %3578 = vmatprep.subr.bf16.mxu0 0
  %3579 = vmatpush1.bf16.msra.mxu0 0
  %3580 = vmatprep.subr.bf16.mxu0 0
  %3581 = vmatpush1.bf16.msra.mxu0 0
  %3582 = vmatprep.subr.bf16.mxu0 0
  %3583 = vmatpush1.bf16.msra.mxu0 0
  %3584 = vmatprep.subr.bf16.mxu0 0
  %3585 = vmatpush1.bf16.msra.mxu0 0
  %3586 = vmatprep.mubr.bf16.mxu0 0
  %3587 = vmatmul.mubr.bf16.gmra.mrb[0].mxu0 %v3410
  %v3588 = vpop.f32.mrb[0].mxu0
  %v3589 = vadd.f32 0.0, %v3588
  %v3590 = vpop.f32.mrb[0].mxu0
  %v3591 = vpop.f32.mrb[0].mxu0
  %v3592 = vpop.f32.mrb[0].mxu0
  %3593 = vdwg.mxu0
  %v3594 = vadd.f32 %v3553, %v3589
  %v3595 = vxor.u32 %v3594, 2147483648
  %v3596 = vmul.f32 %v3595, 1.442695
  %v3597 = vpow.pop %v3596
  %v3598 = vadd.f32 %v3597, 1.0
  %v3599 = vrcp.pop %v3598
  %v3600 = vmul.f32 1.0, %v3599
  %v3601 = vmul.f32 %v3507, %v3401
  %v3602 = vmul.f32 %v3458, %v3551
  %v3603 = vadd.f32 %v3601, %v3602
  %v3604 = vtanh.pop %v3603
  %v3605 = vmul.f32 %v3600, %v3604
  %s3606 = scalar_lea.vmem %s7, 56
  %3607 = vst.msk [vmem:[%s3606] sm:$0xff] %vm80, %v3605
  %3608 = vst.msk [vmem:[%s8] sm:$0xff] %vm80, %v3603
  // Predicated region
  $region30: #{pe_stance_lstm_forward.1} parent=0 // pred_check
    _
  $region31: #{pe_stance_lstm_forward.1} parent=0 // pred_check_branch
    %3610 = sbr.rel (0) target = $region33
  $region32: #{pe_stance_lstm_forward.1} parent=0 // pred_region
    _
  $region33: #{pe_stance_lstm_forward.1} parent=0 // pred_fallthru
    _
  // Predicated region
  $region34: #{pe_stance_lstm_forward.1} parent=0 // pred_check
    _
  $region35: #{pe_stance_lstm_forward.1} parent=0 // pred_check_branch
    %3612 = sbr.rel (0) target = $region37
  $region36: #{pe_stance_lstm_forward.1} parent=0 // pred_region
    _
  $region37: #{pe_stance_lstm_forward.1} parent=0 // pred_fallthru
    _
  // Predicated region
  $region38: #{pe_stance_lstm_forward.1} parent=0 // pred_check
    _
  $region39: #{pe_stance_lstm_forward.1} parent=0 // pred_check_branch
    %3614 = sbr.rel (0) target = $region41
  $region40: #{pe_stance_lstm_forward.1} parent=0 // pred_region
    _
  $region41: #{pe_stance_lstm_forward.1} parent=0 // pred_fallthru
    _
  // Predicated region
  $region42: #{pe_stance_lstm_forward.1} parent=0 // pred_check
    _
  $region43: #{pe_stance_lstm_forward.1} parent=0 // pred_check_branch
    %3616 = sbr.rel (0) target = $region45
  $region44: #{pe_stance_lstm_forward.1} parent=0 // pred_region
    _
  $region45: #{pe_stance_lstm_forward.1} parent=0 // pred_fallthru
    _

</llo_original>
